<compile_context>
chip_gen: v7x
topology: tpu7x:2x2x1
jax: 0.10.0
libtpu: 0.0.40
codegen_flags: <defaults>
</compile_context>

<pallas_src>
import functools
import math

import jax
import jax.numpy as jnp
from jax.experimental import pallas as pl
from jax.experimental.pallas import tpu as pltpu

KSIZE = 5
NUM_EXPERTS = 5          # conv5, conv3, conv1, avg3, avg5
EXT = 128                # zero margin (in lanes) around the flattened padded frame
EPS = 1e-5               # InstanceNorm2d eps


# ----------------------------- shared math helpers -----------------------------
def _softplus(x):
    # PyTorch softplus with threshold=20 (as used inside nn.Mish).
    return jnp.where(x > 20.0, x, jnp.log1p(jnp.exp(jnp.minimum(x, 20.0))))


def _mish(x):
    return x * jnp.tanh(_softplus(x))


# ---------------- Pallas kernel 1: ConvTranspose2d(k=2,s=2) + IN + Mish ----------------
def _convt_kernel(x_ref, w_ref, g_ref, b_ref, o_ref):
    # x_ref: (1, Cin, hw) f32;  w_ref: (4, Cout, Cin);  g/b: (Cout, 1)
    # o_ref: (1, 4, Cout, hw) -- plane d = dh*2+dw of the 2x-upsampled output.
    x = x_ref[0]                                   # (Cin, hw)
    hw = x.shape[1]
    planes = [jnp.dot(w_ref[d], x, preferred_element_type=jnp.float32)
              for d in range(4)]                   # 4 x (Cout, hw)
    tot = 4.0 * hw
    mean = jnp.sum(planes[0] + planes[1] + planes[2] + planes[3],
                   axis=-1, keepdims=True) / tot
    var = (jnp.sum((planes[0] - mean) ** 2, axis=-1, keepdims=True)
           + jnp.sum((planes[1] - mean) ** 2, axis=-1, keepdims=True)
           + jnp.sum((planes[2] - mean) ** 2, axis=-1, keepdims=True)
           + jnp.sum((planes[3] - mean) ** 2, axis=-1, keepdims=True)) / tot
    inv = jax.lax.rsqrt(var + EPS)
    for d in range(4):
        xn = (planes[d] - mean) * inv * g_ref[...] + b_ref[...]
        o_ref[0, d] = _mish(xn).astype(o_ref.dtype)


def _convt_in_mish_pallas(x, wt, gamma, beta):
    # x: (N, Cin, h, w);  wt: (Cin, Cout, 2, 2) (PyTorch ConvTranspose2d layout)
    N, cin, h, w = x.shape
    cout = wt.shape[1]
    hw = h * w
    xf = x.reshape(N, cin, hw)
    w4 = wt.transpose(2, 3, 1, 0).reshape(4, cout, cin)    # [dh*2+dw, o, i]
    gc = gamma.reshape(cout, 1)
    bc = beta.reshape(cout, 1)

    out = pl.pallas_call(
        _convt_kernel,
        out_shape=jax.ShapeDtypeStruct((N, 4, cout, hw), jnp.float32),
        grid=(N,),
        in_specs=[
            pl.BlockSpec((1, cin, hw), lambda n: (n, 0, 0)),
            pl.BlockSpec((4, cout, cin), lambda n: (0, 0, 0)),
            pl.BlockSpec((cout, 1), lambda n: (0, 0)),
            pl.BlockSpec((cout, 1), lambda n: (0, 0)),
        ],
        out_specs=pl.BlockSpec((1, 4, cout, hw), lambda n: (n, 0, 0, 0)),
        compiler_params=pltpu.CompilerParams(dimension_semantics=("parallel",)),
    )(xf, w4, gc, bc)

    # interleave the 4 (dh, dw) planes into the stride-2 upsampled map
    y = out.reshape(N, 2, 2, cout, h, w)                  # (N, dh, dw, Cout, h, w)
    y = y.transpose(0, 3, 4, 1, 5, 2).reshape(N, cout, 2 * h, 2 * w)
    return y


# ------------- Pallas kernel 2: fused MoDESubNet2Conv (conv+IN+Mish, twice) -------------
def _inorm_mish_masked(y, gamma, beta, mask, inv_hw):
    # y: (C, L) conv output over the padded frame; stats over the H*W interior only.
    ym = y * mask
    mean = jnp.sum(ym, axis=-1, keepdims=True) * inv_hw
    d = (y - mean) * mask
    var = jnp.sum(d * d, axis=-1, keepdims=True) * inv_hw      # biased, as InstanceNorm2d
    xn = (y - mean) * jax.lax.rsqrt(var + EPS)
    xn = xn * gamma + beta
    return _mish(xn) * mask      # re-mask so the padded border stays exactly zero


def _fused_mode_kernel(xfe_ref, w1_ref, w2_ref, g1_ref, b1_ref, g2_ref, b2_ref,
                       mask_ref, o_ref, p1_ref, p2_ref, h1e_ref, *, WP, HW):
    c1 = xfe_ref.shape[1]
    cout = w1_ref.shape[1]
    L = o_ref.shape[2]
    inv_hw = 1.0 / HW

    mask = mask_ref[...]                         # (1, L) f32, 1 on the H*W interior
    xfe = xfe_ref[0].astype(jnp.float32)         # (C1, L + 2*EXT), zero-extended frame

    # ---- layer 1: build (25*C1, L) tap panel with static shifted slices, one matmul
    for kh in range(KSIZE):
        for kw in range(KSIZE):
            s = (kh - 2) * WP + (kw - 2)
            t = kh * KSIZE + kw
            p1_ref[t * c1:(t + 1) * c1, :] = (
                xfe[:, EXT + s:EXT + s + L].astype(p1_ref.dtype))
    y1 = jnp.dot(w1_ref[0], p1_ref[...], preferred_element_type=jnp.float32)
    h1 = _inorm_mish_masked(y1, g1_ref[...], b1_ref[...], mask, inv_hw)   # (Cout, L)

    # ---- stash layer-1 activations into a zero-extended VMEM frame (stays on chip)
    h1e_ref[...] = jnp.zeros(h1e_ref.shape, h1e_ref.dtype)
    h1e_ref[:, EXT:EXT + L] = h1
    h1e = h1e_ref[...]

    # ---- layer 2: same single-matmul scheme on the in-VMEM intermediate
    for kh in range(KSIZE):
        for kw in range(KSIZE):
            s = (kh - 2) * WP + (kw - 2)
            t = kh * KSIZE + kw
            p2_ref[t * cout:(t + 1) * cout, :] = (
                h1e[:, EXT + s:EXT + s + L].astype(p2_ref.dtype))
    y2 = jnp.dot(w2_ref[0], p2_ref[...], preferred_element_type=jnp.float32)
    h2 = _inorm_mish_masked(y2, g2_ref[...], b2_ref[...], mask, inv_hw)
    o_ref[0] = h2.astype(o_ref.dtype)


def _mode_subnet_pallas(x, w1, w2, g1, b1, g2, b2):
    # x: (N, C1, H, W); w1: (N, Cout, C1, 5, 5); w2: (N, Cout, Cout, 5, 5)
    N, C1, H, W = x.shape
    cout = w1.shape[1]
    HP, WP = H + 4, W + 4
    L = HP * WP

    # 'same' zero border, flatten spatial, add an EXT-lane zero margin on both ends.
    xp = jnp.pad(x, ((0, 0), (0, 0), (2, 2), (2, 2))).reshape(N, C1, L)
    xfe = jnp.pad(xp, ((0, 0), (0, 0), (EXT, EXT))).astype(jnp.bfloat16)

    # bf16 matmul operands only where the tap-row count aligns with bf16 16-row packing.
    dt1 = jnp.bfloat16 if C1 % 16 == 0 else jnp.float32
    dt2 = jnp.bfloat16 if cout % 16 == 0 else jnp.float32

    # routed weights -> tap-major matrices matching the panel row order (t*Cin + c)
    w1m = w1.transpose(0, 1, 3, 4, 2).reshape(N, cout, KSIZE * KSIZE * C1).astype(dt1)
    w2m = w2.transpose(0, 1, 3, 4, 2).reshape(N, cout, KSIZE * KSIZE * cout).astype(dt2)

    # interior mask over the padded frame
    hp = jnp.arange(HP)
    wp = jnp.arange(WP)
    m2 = ((hp >= 2) & (hp < 2 + H))[:, None] & ((wp >= 2) & (wp < 2 + W))[None, :]
    mask = m2.astype(jnp.float32).reshape(1, L)

    g1c, b1c = g1.reshape(cout, 1), b1.reshape(cout, 1)
    g2c, b2c = g2.reshape(cout, 1), b2.reshape(cout, 1)

    kernel = functools.partial(_fused_mode_kernel, WP=WP, HW=float(H * W))

    flops = int(2 * N * L * (cout * 25 * C1 + cout * 25 * cout))
    transcendentals = int(3 * 2 * N * cout * L)
    bytes_accessed = int(xfe.size * xfe.dtype.itemsize
                         + w1m.size * w1m.dtype.itemsize
                         + w2m.size * w2m.dtype.itemsize
                         + mask.size * 4 + N * cout * L * 4)

    out = pl.pallas_call(
        kernel,
        out_shape=jax.ShapeDtypeStruct((N, cout, L), jnp.float32),
        grid=(N,),
        in_specs=[
            pl.BlockSpec((1, C1, L + 2 * EXT), lambda n: (n, 0, 0)),
            pl.BlockSpec((1, cout, KSIZE * KSIZE * C1), lambda n: (n, 0, 0)),
            pl.BlockSpec((1, cout, KSIZE * KSIZE * cout), lambda n: (n, 0, 0)),
            pl.BlockSpec((cout, 1), lambda n: (0, 0)),
            pl.BlockSpec((cout, 1), lambda n: (0, 0)),
            pl.BlockSpec((cout, 1), lambda n: (0, 0)),
            pl.BlockSpec((cout, 1), lambda n: (0, 0)),
            pl.BlockSpec((1, L), lambda n: (0, 0)),
        ],
        out_specs=pl.BlockSpec((1, cout, L), lambda n: (n, 0, 0)),
        scratch_shapes=[
            pltpu.VMEM((KSIZE * KSIZE * C1, L), dt1),         # layer-1 tap panel
            pltpu.VMEM((KSIZE * KSIZE * cout, L), dt2),       # layer-2 tap panel
            pltpu.VMEM((cout, L + 2 * EXT), jnp.float32),     # zero-extended h1
        ],
        compiler_params=pltpu.CompilerParams(dimension_semantics=("parallel",)),
        cost_estimate=pl.CostEstimate(flops=flops, transcendentals=transcendentals,
                                      bytes_accessed=bytes_accessed),
    )(xfe, w1m, w2m, g1c, b1c, g2c, b2c, mask)

    return out.reshape(N, cout, HP, WP)[:, :, 2:2 + H, 2:2 + W]


# ---------------------------------- JAX glue ----------------------------------
def _pad_to5(k):
    p = (KSIZE - k.shape[-1]) // 2
    return jnp.pad(k, ((0, 0), (0, 0), (p, p), (p, p)))


def _kaiming_uniform(key, shape, fan):
    gain = math.sqrt(2.0 / (1.0 + 5.0))          # a = sqrt(5)
    bound = gain * math.sqrt(3.0 / fan)
    return jax.random.uniform(key, shape, jnp.float32, -bound, bound)


def _init_mode_conv(key, num_tasks, cin, cout):
    ks = jax.random.split(key, 7)
    conv5 = _kaiming_uniform(ks[0], (cout, cin, 5, 5), cout * 25)
    conv3 = _kaiming_uniform(ks[1], (cout, cin, 3, 3), cout * 9)
    conv1 = _kaiming_uniform(ks[2], (cout, cin, 1, 1), cout)
    avg3c = _kaiming_uniform(ks[3], (cout, cin, 1, 1), cout)
    avg5c = _kaiming_uniform(ks[4], (cout, cin, 1, 1), cout)
    pool3 = jnp.ones((3, 3), jnp.float32) / 9.0
    pool5 = jnp.ones((5, 5), jnp.float32) / 25.0
    bank = jnp.stack([
        conv5,
        _pad_to5(conv3),
        _pad_to5(conv1),
        _pad_to5(avg3c * pool3[None, None]),
        avg5c * pool5[None, None],
    ], axis=0)                                   # (5, Cout, Cin, 5, 5)
    gb = 1.0 / math.sqrt(num_tasks)
    gate_w = jax.random.uniform(ks[5], (NUM_EXPERTS * cout, num_tasks),
                                jnp.float32, -gb, gb)
    gate_b = jax.random.uniform(ks[6], (NUM_EXPERTS * cout,), jnp.float32, -gb, gb)
    return dict(bank=bank, gate_w=gate_w, gate_b=gate_b,
                gamma=jnp.ones((cout,), jnp.float32),
                beta=jnp.zeros((cout,), jnp.float32))


def init_params(key, num_experts, num_tasks, in_chan, out_chan):
    assert num_experts == NUM_EXPERTS
    k0, k1, k2 = jax.random.split(key, 3)
    return dict(
        convt_w=_kaiming_uniform(k0, (in_chan, out_chan, 2, 2), out_chan * 4),
        convt_gamma=jnp.ones((out_chan,), jnp.float32),
        convt_beta=jnp.zeros((out_chan,), jnp.float32),
        conv1=_init_mode_conv(k1, num_tasks, in_chan, out_chan),
        conv2=_init_mode_conv(k2, num_tasks, out_chan, out_chan),
    )


def _routed_weights(bank, gate_w, gate_b, t):
    # gate -> softmax over experts -> per-sample 5x5 conv weight (training branch)
    N = t.shape[0]
    cout = bank.shape[1]
    g = t @ gate_w.T + gate_b
    g = jax.nn.softmax(g.reshape(N, NUM_EXPERTS, cout), axis=1)
    return jnp.einsum("eoihw,neo->noihw", bank, g)        # (N, Cout, Cin, 5, 5)


def mode_decoder_block_forward(params, x, x_skip, t):
    # 1) convt: ConvTranspose2d(k=2, s=2, bias=False) + InstanceNorm2d + Mish
    xt = _convt_in_mish_pallas(x, params["convt_w"],
                               params["convt_gamma"], params["convt_beta"])
    # 2) concat with the skip connection (channel dim)
    x_cat = jnp.concatenate([x_skip, xt], axis=1)
    # 3) MoDESubNet2Conv: two routed MoDEConv layers fused in one Pallas call
    c1, c2 = params["conv1"], params["conv2"]
    w1 = _routed_weights(c1["bank"], c1["gate_w"], c1["gate_b"], t)
    w2 = _routed_weights(c2["bank"], c2["gate_w"], c2["gate_b"], t)
    return _mode_subnet_pallas(x_cat, w1, w2, c1["gamma"], c1["beta"],
                               c2["gamma"], c2["beta"])


# ------------------------- pure-JAX reference (validation) -------------------------
def _ref_instance_norm(x, gamma, beta):
    mean = jnp.mean(x, axis=(2, 3), keepdims=True)
    var = jnp.mean((x - mean) ** 2, axis=(2, 3), keepdims=True)
    xn = (x - mean) * jax.lax.rsqrt(var + EPS)
    return xn * gamma[None, :, None, None] + beta[None, :, None, None]


def _ref_mode_conv(x, w, gamma, beta):
    ys = [jax.lax.conv_general_dilated(
        x[i:i + 1], w[i], (1, 1), "SAME",
        dimension_numbers=("NCHW", "OIHW", "NCHW")) for i in range(x.shape[0])]
    y = jnp.concatenate(ys, axis=0)
    return _mish(_ref_instance_norm(y, gamma, beta))


def _ref_forward(params, x, x_skip, t):
    wt = params["convt_w"]
    z = jnp.einsum("nihw,ioab->nohawb", x, wt)
    N, co, h, _, w, _ = z.shape
    y = z.reshape(N, co, 2 * h, 2 * w)
    y = _mish(_ref_instance_norm(y, params["convt_gamma"], params["convt_beta"]))
    xc = jnp.concatenate([x_skip, y], axis=1)
    c1, c2 = params["conv1"], params["conv2"]
    w1 = _routed_weights(c1["bank"], c1["gate_w"], c1["gate_b"], t)
    w2 = _routed_weights(c2["bank"], c2["gate_w"], c2["gate_b"], t)
    h1 = _ref_mode_conv(xc, w1, c1["gamma"], c1["beta"])
    return _ref_mode_conv(h1, w2, c2["gamma"], c2["beta"])


# -------------------------------------- main --------------------------------------
if __name__ == "__main__":
    key = jax.random.PRNGKey(0)
    N, in_chan, out_chan = 2, 16, 8
    h0, w0 = 8, 8                       # convt upsamples to 16 x 16
    num_tasks, num_experts = 3, 5

    kp, kx, ks, kt = jax.random.split(key, 4)
    params = init_params(kp, num_experts, num_tasks, in_chan, out_chan)
    x = jax.random.normal(kx, (N, in_chan, h0, w0), jnp.float32)
    x_skip = jax.random.normal(ks, (N, in_chan - out_chan, 2 * h0, 2 * w0), jnp.float32)
    t = jax.random.normal(kt, (N, num_tasks), jnp.float32)

    fwd = jax.jit(functools.partial(mode_decoder_block_forward, params))
    y = fwd(x, x_skip, t)
    jax.block_until_ready(y)
    assert y.shape == (N, out_chan, 2 * h0, 2 * w0), y.shape

    # self-check vs. a pure-JAX reference of the same module math (bf16 tolerance)
    y_ref = _ref_forward(params, x, x_skip, t)
    max_err = float(jnp.max(jnp.abs(y - y_ref)))
    assert bool(jnp.allclose(y, y_ref, rtol=5e-2, atol=5e-2)), f"max abs err {max_err}"
    print("KERNEL_OK")
</pallas_src>

<mosaic_0001>
module attributes {stable_mosaic.version = 11 : i64} {
  func.func @_convt_kernel(%arg0: i32, %arg1: memref<1x16x64xf32, #tpu.memory_space<vmem>>, %arg2: memref<4x8x16xf32, #tpu.memory_space<vmem>>, %arg3: memref<8x1xf32, #tpu.memory_space<vmem>>, %arg4: memref<8x1xf32, #tpu.memory_space<vmem>>, %arg5: memref<1x4x8x64xf32, #tpu.memory_space<vmem>>) attributes {dimension_semantics = [#tpu.dimension_semantics<parallel>], iteration_bounds = array<i64: 2>, scalar_prefetch = 0 : i64, scratch_operands = 0 : i64, tpu.core_type = #tpu.core_type<tc>, window_params = [{transform_indices = @transform_0, window_bounds = array<i64: 1, 16, 64>}, {pipeline_mode = #tpu.pipeline_mode<synchronous>, transform_indices = @transform_1, window_bounds = array<i64: 4, 8, 16>}, {pipeline_mode = #tpu.pipeline_mode<synchronous>, transform_indices = @transform_2, window_bounds = array<i64: 8, 1>}, {pipeline_mode = #tpu.pipeline_mode<synchronous>, transform_indices = @transform_3, window_bounds = array<i64: 8, 1>}, {transform_indices = @transform_4, window_bounds = array<i64: 1, 4, 8, 64>}]} {
    %c0 = arith.constant 0 : index
    %c0_0 = arith.constant 0 : index
    %c0_1 = arith.constant 0 : index
    %0 = vector.load %arg1[%c0, %c0_0, %c0_1] : memref<1x16x64xf32, #tpu.memory_space<vmem>>, vector<1x16x64xf32>
    %1 = vector.shape_cast %0 : vector<1x16x64xf32> to vector<16x64xf32>
    %c0_2 = arith.constant 0 : index
    %c0_3 = arith.constant 0 : index
    %c0_4 = arith.constant 0 : index
    %2 = vector.load %arg2[%c0_2, %c0_3, %c0_4] : memref<4x8x16xf32, #tpu.memory_space<vmem>>, vector<1x8x16xf32>
    %3 = vector.shape_cast %2 : vector<1x8x16xf32> to vector<8x16xf32>
    %cst = arith.constant dense<0.000000e+00> : vector<8x64xf32>
    %4 = tpu.matmul %3, %1, %cst {dimension_numbers = #tpu.dot_dimension_numbers<[1], [0], [0], [1], [0, 0, 1, 1], [], []>} : vector<8x16xf32>, vector<16x64xf32>, vector<8x64xf32> -> vector<8x64xf32>
    %c1 = arith.constant 1 : index
    %c0_5 = arith.constant 0 : index
    %c0_6 = arith.constant 0 : index
    %5 = vector.load %arg2[%c1, %c0_5, %c0_6] : memref<4x8x16xf32, #tpu.memory_space<vmem>>, vector<1x8x16xf32>
    %6 = vector.shape_cast %5 : vector<1x8x16xf32> to vector<8x16xf32>
    %cst_7 = arith.constant dense<0.000000e+00> : vector<8x64xf32>
    %7 = tpu.matmul %6, %1, %cst_7 {dimension_numbers = #tpu.dot_dimension_numbers<[1], [0], [0], [1], [0, 0, 1, 1], [], []>} : vector<8x16xf32>, vector<16x64xf32>, vector<8x64xf32> -> vector<8x64xf32>
    %c2 = arith.constant 2 : index
    %c0_8 = arith.constant 0 : index
    %c0_9 = arith.constant 0 : index
    %8 = vector.load %arg2[%c2, %c0_8, %c0_9] : memref<4x8x16xf32, #tpu.memory_space<vmem>>, vector<1x8x16xf32>
    %9 = vector.shape_cast %8 : vector<1x8x16xf32> to vector<8x16xf32>
    %cst_10 = arith.constant dense<0.000000e+00> : vector<8x64xf32>
    %10 = tpu.matmul %9, %1, %cst_10 {dimension_numbers = #tpu.dot_dimension_numbers<[1], [0], [0], [1], [0, 0, 1, 1], [], []>} : vector<8x16xf32>, vector<16x64xf32>, vector<8x64xf32> -> vector<8x64xf32>
    %c3 = arith.constant 3 : index
    %c0_11 = arith.constant 0 : index
    %c0_12 = arith.constant 0 : index
    %11 = vector.load %arg2[%c3, %c0_11, %c0_12] : memref<4x8x16xf32, #tpu.memory_space<vmem>>, vector<1x8x16xf32>
    %12 = vector.shape_cast %11 : vector<1x8x16xf32> to vector<8x16xf32>
    %cst_13 = arith.constant dense<0.000000e+00> : vector<8x64xf32>
    %13 = tpu.matmul %12, %1, %cst_13 {dimension_numbers = #tpu.dot_dimension_numbers<[1], [0], [0], [1], [0, 0, 1, 1], [], []>} : vector<8x16xf32>, vector<16x64xf32>, vector<8x64xf32> -> vector<8x64xf32>
    %14 = arith.addf %4, %7 : vector<8x64xf32>
    %15 = arith.addf %14, %10 : vector<8x64xf32>
    %16 = arith.addf %15, %13 : vector<8x64xf32>
    %cst_14 = arith.constant dense<0.000000e+00> : vector<8xf32>
    %17 = vector.multi_reduction <add>, %16, %cst_14 [1] : vector<8x64xf32> to vector<8xf32>
    %18 = vector.shape_cast %17 : vector<8xf32> to vector<8x1xf32>
    %cst_15 = arith.constant 2.560000e+02 : f32
    %19 = vector.broadcast %cst_15 : f32 to vector<8x1xf32>
    %20 = arith.divf %18, %19 : vector<8x1xf32>
    %21 = vector.broadcast %20 : vector<8x1xf32> to vector<8x64xf32>
    %22 = arith.subf %4, %21 : vector<8x64xf32>
    %23 = arith.mulf %22, %22 : vector<8x64xf32>
    %cst_16 = arith.constant dense<0.000000e+00> : vector<8xf32>
    %24 = vector.multi_reduction <add>, %23, %cst_16 [1] : vector<8x64xf32> to vector<8xf32>
    %25 = vector.shape_cast %24 : vector<8xf32> to vector<8x1xf32>
    %26 = vector.broadcast %20 : vector<8x1xf32> to vector<8x64xf32>
    %27 = arith.subf %7, %26 : vector<8x64xf32>
    %28 = arith.mulf %27, %27 : vector<8x64xf32>
    %cst_17 = arith.constant dense<0.000000e+00> : vector<8xf32>
    %29 = vector.multi_reduction <add>, %28, %cst_17 [1] : vector<8x64xf32> to vector<8xf32>
    %30 = vector.shape_cast %29 : vector<8xf32> to vector<8x1xf32>
    %31 = arith.addf %25, %30 : vector<8x1xf32>
    %32 = vector.broadcast %20 : vector<8x1xf32> to vector<8x64xf32>
    %33 = arith.subf %10, %32 : vector<8x64xf32>
    %34 = arith.mulf %33, %33 : vector<8x64xf32>
    %cst_18 = arith.constant dense<0.000000e+00> : vector<8xf32>
    %35 = vector.multi_reduction <add>, %34, %cst_18 [1] : vector<8x64xf32> to vector<8xf32>
    %36 = vector.shape_cast %35 : vector<8xf32> to vector<8x1xf32>
    %37 = arith.addf %31, %36 : vector<8x1xf32>
    %38 = vector.broadcast %20 : vector<8x1xf32> to vector<8x64xf32>
    %39 = arith.subf %13, %38 : vector<8x64xf32>
    %40 = arith.mulf %39, %39 : vector<8x64xf32>
    %cst_19 = arith.constant dense<0.000000e+00> : vector<8xf32>
    %41 = vector.multi_reduction <add>, %40, %cst_19 [1] : vector<8x64xf32> to vector<8xf32>
    %42 = vector.shape_cast %41 : vector<8xf32> to vector<8x1xf32>
    %43 = arith.addf %37, %42 : vector<8x1xf32>
    %cst_20 = arith.constant 2.560000e+02 : f32
    %44 = vector.broadcast %cst_20 : f32 to vector<8x1xf32>
    %45 = arith.divf %43, %44 : vector<8x1xf32>
    %cst_21 = arith.constant 9.99999974E-6 : f32
    %46 = vector.broadcast %cst_21 : f32 to vector<8x1xf32>
    %47 = arith.addf %45, %46 : vector<8x1xf32>
    %48 = math.rsqrt %47 : vector<8x1xf32>
    %49 = vector.broadcast %20 : vector<8x1xf32> to vector<8x64xf32>
    %50 = arith.subf %4, %49 : vector<8x64xf32>
    %51 = vector.broadcast %48 : vector<8x1xf32> to vector<8x64xf32>
    %52 = arith.mulf %50, %51 : vector<8x64xf32>
    %c0_22 = arith.constant 0 : index
    %c0_23 = arith.constant 0 : index
    %53 = vector.load %arg3[%c0_22, %c0_23] : memref<8x1xf32, #tpu.memory_space<vmem>>, vector<8x1xf32>
    %54 = vector.broadcast %53 : vector<8x1xf32> to vector<8x64xf32>
    %55 = arith.mulf %52, %54 : vector<8x64xf32>
    %c0_24 = arith.constant 0 : index
    %c0_25 = arith.constant 0 : index
    %56 = vector.load %arg4[%c0_24, %c0_25] : memref<8x1xf32, #tpu.memory_space<vmem>>, vector<8x1xf32>
    %57 = vector.broadcast %56 : vector<8x1xf32> to vector<8x64xf32>
    %58 = arith.addf %55, %57 : vector<8x64xf32>
    %cst_26 = arith.constant 2.000000e+01 : f32
    %59 = vector.broadcast %cst_26 : f32 to vector<8x64xf32>
    %60 = arith.cmpf ogt, %58, %59 : vector<8x64xf32>
    %cst_27 = arith.constant 2.000000e+01 : f32
    %61 = vector.broadcast %cst_27 : f32 to vector<8x64xf32>
    %62 = arith.minimumf %58, %61 : vector<8x64xf32>
    %63 = math.exp %62 : vector<8x64xf32>
    %64 = math.log1p %63 : vector<8x64xf32>
    %65 = arith.select %60, %58, %64 : vector<8x64xi1>, vector<8x64xf32>
    %66 = math.tanh %65 : vector<8x64xf32>
    %67 = arith.mulf %58, %66 : vector<8x64xf32>
    %c0_28 = arith.constant 0 : index
    %c0_29 = arith.constant 0 : index
    %c0_30 = arith.constant 0 : index
    %c0_31 = arith.constant 0 : index
    %68 = vector.load %arg5[%c0_28, %c0_29, %c0_30, %c0_31] : memref<1x4x8x64xf32, #tpu.memory_space<vmem>>, vector<1x1x8x64xf32>
    %69 = vector.shape_cast %68 : vector<1x1x8x64xf32> to vector<8x64xf32>
    %70 = vector.shape_cast %67 : vector<8x64xf32> to vector<1x1x8x64xf32>
    tpu.vector_store %arg5[%c0_28, %c0_29, %c0_30, %c0_31], %70 {strides = array<i32>} : memref<1x4x8x64xf32, #tpu.memory_space<vmem>>, vector<1x1x8x64xf32>,
    %71 = vector.broadcast %20 : vector<8x1xf32> to vector<8x64xf32>
    %72 = arith.subf %7, %71 : vector<8x64xf32>
    %73 = vector.broadcast %48 : vector<8x1xf32> to vector<8x64xf32>
    %74 = arith.mulf %72, %73 : vector<8x64xf32>
    %c0_32 = arith.constant 0 : index
    %c0_33 = arith.constant 0 : index
    %75 = vector.load %arg3[%c0_32, %c0_33] : memref<8x1xf32, #tpu.memory_space<vmem>>, vector<8x1xf32>
    %76 = vector.broadcast %75 : vector<8x1xf32> to vector<8x64xf32>
    %77 = arith.mulf %74, %76 : vector<8x64xf32>
    %c0_34 = arith.constant 0 : index
    %c0_35 = arith.constant 0 : index
    %78 = vector.load %arg4[%c0_34, %c0_35] : memref<8x1xf32, #tpu.memory_space<vmem>>, vector<8x1xf32>
    %79 = vector.broadcast %78 : vector<8x1xf32> to vector<8x64xf32>
    %80 = arith.addf %77, %79 : vector<8x64xf32>
    %cst_36 = arith.constant 2.000000e+01 : f32
    %81 = vector.broadcast %cst_36 : f32 to vector<8x64xf32>
    %82 = arith.cmpf ogt, %80, %81 : vector<8x64xf32>
    %cst_37 = arith.constant 2.000000e+01 : f32
    %83 = vector.broadcast %cst_37 : f32 to vector<8x64xf32>
    %84 = arith.minimumf %80, %83 : vector<8x64xf32>
    %85 = math.exp %84 : vector<8x64xf32>
    %86 = math.log1p %85 : vector<8x64xf32>
    %87 = arith.select %82, %80, %86 : vector<8x64xi1>, vector<8x64xf32>
    %88 = math.tanh %87 : vector<8x64xf32>
    %89 = arith.mulf %80, %88 : vector<8x64xf32>
    %c0_38 = arith.constant 0 : index
    %c1_39 = arith.constant 1 : index
    %c0_40 = arith.constant 0 : index
    %c0_41 = arith.constant 0 : index
    %90 = vector.load %arg5[%c0_38, %c1_39, %c0_40, %c0_41] : memref<1x4x8x64xf32, #tpu.memory_space<vmem>>, vector<1x1x8x64xf32>
    %91 = vector.shape_cast %90 : vector<1x1x8x64xf32> to vector<8x64xf32>
    %92 = vector.shape_cast %89 : vector<8x64xf32> to vector<1x1x8x64xf32>
    tpu.vector_store %arg5[%c0_38, %c1_39, %c0_40, %c0_41], %92 {strides = array<i32>} : memref<1x4x8x64xf32, #tpu.memory_space<vmem>>, vector<1x1x8x64xf32>,
    %93 = vector.broadcast %20 : vector<8x1xf32> to vector<8x64xf32>
    %94 = arith.subf %10, %93 : vector<8x64xf32>
    %95 = vector.broadcast %48 : vector<8x1xf32> to vector<8x64xf32>
    %96 = arith.mulf %94, %95 : vector<8x64xf32>
    %c0_42 = arith.constant 0 : index
    %c0_43 = arith.constant 0 : index
    %97 = vector.load %arg3[%c0_42, %c0_43] : memref<8x1xf32, #tpu.memory_space<vmem>>, vector<8x1xf32>
    %98 = vector.broadcast %97 : vector<8x1xf32> to vector<8x64xf32>
    %99 = arith.mulf %96, %98 : vector<8x64xf32>
    %c0_44 = arith.constant 0 : index
    %c0_45 = arith.constant 0 : index
    %100 = vector.load %arg4[%c0_44, %c0_45] : memref<8x1xf32, #tpu.memory_space<vmem>>, vector<8x1xf32>
    %101 = vector.broadcast %100 : vector<8x1xf32> to vector<8x64xf32>
    %102 = arith.addf %99, %101 : vector<8x64xf32>
    %cst_46 = arith.constant 2.000000e+01 : f32
    %103 = vector.broadcast %cst_46 : f32 to vector<8x64xf32>
    %104 = arith.cmpf ogt, %102, %103 : vector<8x64xf32>
    %cst_47 = arith.constant 2.000000e+01 : f32
    %105 = vector.broadcast %cst_47 : f32 to vector<8x64xf32>
    %106 = arith.minimumf %102, %105 : vector<8x64xf32>
    %107 = math.exp %106 : vector<8x64xf32>
    %108 = math.log1p %107 : vector<8x64xf32>
    %109 = arith.select %104, %102, %108 : vector<8x64xi1>, vector<8x64xf32>
    %110 = math.tanh %109 : vector<8x64xf32>
    %111 = arith.mulf %102, %110 : vector<8x64xf32>
    %c0_48 = arith.constant 0 : index
    %c2_49 = arith.constant 2 : index
    %c0_50 = arith.constant 0 : index
    %c0_51 = arith.constant 0 : index
    %112 = vector.load %arg5[%c0_48, %c2_49, %c0_50, %c0_51] : memref<1x4x8x64xf32, #tpu.memory_space<vmem>>, vector<1x1x8x64xf32>
    %113 = vector.shape_cast %112 : vector<1x1x8x64xf32> to vector<8x64xf32>
    %114 = vector.shape_cast %111 : vector<8x64xf32> to vector<1x1x8x64xf32>
    tpu.vector_store %arg5[%c0_48, %c2_49, %c0_50, %c0_51], %114 {strides = array<i32>} : memref<1x4x8x64xf32, #tpu.memory_space<vmem>>, vector<1x1x8x64xf32>,
    %115 = vector.broadcast %20 : vector<8x1xf32> to vector<8x64xf32>
    %116 = arith.subf %13, %115 : vector<8x64xf32>
    %117 = vector.broadcast %48 : vector<8x1xf32> to vector<8x64xf32>
    %118 = arith.mulf %116, %117 : vector<8x64xf32>
    %c0_52 = arith.constant 0 : index
    %c0_53 = arith.constant 0 : index
    %119 = vector.load %arg3[%c0_52, %c0_53] : memref<8x1xf32, #tpu.memory_space<vmem>>, vector<8x1xf32>
    %120 = vector.broadcast %119 : vector<8x1xf32> to vector<8x64xf32>
    %121 = arith.mulf %118, %120 : vector<8x64xf32>
    %c0_54 = arith.constant 0 : index
    %c0_55 = arith.constant 0 : index
    %122 = vector.load %arg4[%c0_54, %c0_55] : memref<8x1xf32, #tpu.memory_space<vmem>>, vector<8x1xf32>
    %123 = vector.broadcast %122 : vector<8x1xf32> to vector<8x64xf32>
    %124 = arith.addf %121, %123 : vector<8x64xf32>
    %cst_56 = arith.constant 2.000000e+01 : f32
    %125 = vector.broadcast %cst_56 : f32 to vector<8x64xf32>
    %126 = arith.cmpf ogt, %124, %125 : vector<8x64xf32>
    %cst_57 = arith.constant 2.000000e+01 : f32
    %127 = vector.broadcast %cst_57 : f32 to vector<8x64xf32>
    %128 = arith.minimumf %124, %127 : vector<8x64xf32>
    %129 = math.exp %128 : vector<8x64xf32>
    %130 = math.log1p %129 : vector<8x64xf32>
    %131 = arith.select %126, %124, %130 : vector<8x64xi1>, vector<8x64xf32>
    %132 = math.tanh %131 : vector<8x64xf32>
    %133 = arith.mulf %124, %132 : vector<8x64xf32>
    %c0_58 = arith.constant 0 : index
    %c3_59 = arith.constant 3 : index
    %c0_60 = arith.constant 0 : index
    %c0_61 = arith.constant 0 : index
    %134 = vector.load %arg5[%c0_58, %c3_59, %c0_60, %c0_61] : memref<1x4x8x64xf32, #tpu.memory_space<vmem>>, vector<1x1x8x64xf32>
    %135 = vector.shape_cast %134 : vector<1x1x8x64xf32> to vector<8x64xf32>
    %136 = vector.shape_cast %133 : vector<8x64xf32> to vector<1x1x8x64xf32>
    tpu.vector_store %arg5[%c0_58, %c3_59, %c0_60, %c0_61], %136 {strides = array<i32>} : memref<1x4x8x64xf32, #tpu.memory_space<vmem>>, vector<1x1x8x64xf32>,
    return
  }
  func.func @transform_0(%arg0: i32) -> (i32, i32, i32) {
    %c0_i32 = arith.constant 0 : i32
    %c0_i32_0 = arith.constant 0 : i32
    %c0_i32_1 = arith.constant 0 : i32
    return %arg0, %c0_i32, %c0_i32_0 : i32, i32, i32
  }
  func.func @transform_1(%arg0: i32) -> (i32, i32, i32) {
    %c0_i32 = arith.constant 0 : i32
    %c0_i32_0 = arith.constant 0 : i32
    %c0_i32_1 = arith.constant 0 : i32
    %c0_i32_2 = arith.constant 0 : i32
    return %c0_i32, %c0_i32_0, %c0_i32_1 : i32, i32, i32
  }
  func.func @transform_2(%arg0: i32) -> (i32, i32) {
    %c0_i32 = arith.constant 0 : i32
    %c0_i32_0 = arith.constant 0 : i32
    %c0_i32_1 = arith.constant 0 : i32
    return %c0_i32, %c0_i32_0 : i32, i32
  }
  func.func @transform_3(%arg0: i32) -> (i32, i32) {
    %c0_i32 = arith.constant 0 : i32
    %c0_i32_0 = arith.constant 0 : i32
    %c0_i32_1 = arith.constant 0 : i32
    return %c0_i32, %c0_i32_0 : i32, i32
  }
  func.func @transform_4(%arg0: i32) -> (i32, i32, i32, i32) {
    %c0_i32 = arith.constant 0 : i32
    %c0_i32_0 = arith.constant 0 : i32
    %c0_i32_1 = arith.constant 0 : i32
    %c0_i32_2 = arith.constant 0 : i32
    return %arg0, %c0_i32, %c0_i32_0, %c0_i32_1 : i32, i32, i32, i32
  }
}

module attributes {stable_mosaic.version = 11 : i64} {
  func.func @_fused_mode_kernel(%arg0: i32, %arg1: memref<1x16x656xbf16, #tpu.memory_space<vmem>>, %arg2: memref<1x8x400xbf16, #tpu.memory_space<vmem>>, %arg3: memref<1x8x200xf32, #tpu.memory_space<vmem>>, %arg4: memref<8x1xf32, #tpu.memory_space<vmem>>, %arg5: memref<8x1xf32, #tpu.memory_space<vmem>>, %arg6: memref<8x1xf32, #tpu.memory_space<vmem>>, %arg7: memref<8x1xf32, #tpu.memory_space<vmem>>, %arg8: memref<1x400xf32, #tpu.memory_space<vmem>>, %arg9: memref<1x8x400xf32, #tpu.memory_space<vmem>>, %arg10: memref<400x400xbf16, #tpu.memory_space<vmem>>, %arg11: memref<200x400xf32, #tpu.memory_space<vmem>>, %arg12: memref<8x656xf32, #tpu.memory_space<vmem>>) attributes {dimension_semantics = [#tpu.dimension_semantics<parallel>], iteration_bounds = array<i64: 2>, scalar_prefetch = 0 : i64, scratch_operands = 3 : i64, tpu.core_type = #tpu.core_type<tc>, window_params = [{transform_indices = @transform_0, window_bounds = array<i64: 1, 16, 656>}, {transform_indices = @transform_1, window_bounds = array<i64: 1, 8, 400>}, {transform_indices = @transform_2, window_bounds = array<i64: 1, 8, 200>}, {pipeline_mode = #tpu.pipeline_mode<synchronous>, transform_indices = @transform_3, window_bounds = array<i64: 8, 1>}, {pipeline_mode = #tpu.pipeline_mode<synchronous>, transform_indices = @transform_4, window_bounds = array<i64: 8, 1>}, {pipeline_mode = #tpu.pipeline_mode<synchronous>, transform_indices = @transform_5, window_bounds = array<i64: 8, 1>}, {pipeline_mode = #tpu.pipeline_mode<synchronous>, transform_indices = @transform_6, window_bounds = array<i64: 8, 1>}, {pipeline_mode = #tpu.pipeline_mode<synchronous>, transform_indices = @transform_7, window_bounds = array<i64: 1, 400>}, {transform_indices = @transform_8, window_bounds = array<i64: 1, 8, 400>}]} {
    %c0 = arith.constant 0 : index
    %c0_0 = arith.constant 0 : index
    %0 = vector.load %arg8[%c0, %c0_0] : memref<1x400xf32, #tpu.memory_space<vmem>>, vector<1x400xf32>
    %c0_1 = arith.constant 0 : index
    %c0_2 = arith.constant 0 : index
    %c0_3 = arith.constant 0 : index
    %1 = vector.load %arg1[%c0_1, %c0_2, %c0_3] : memref<1x16x656xbf16, #tpu.memory_space<vmem>>, vector<1x16x656xbf16>
    %2 = vector.shape_cast %1 : vector<1x16x656xbf16> to vector<16x656xbf16>
    %3 = arith.extf %2 : vector<16x656xbf16> to vector<16x656xf32>
    %4 = vector.extract_strided_slice %3 {offsets = [0, 86], sizes = [16, 400], strides = [1, 1]} : vector<16x656xf32> to vector<16x400xf32>
    %5 = arith.truncf %4 : vector<16x400xf32> to vector<16x400xbf16>
    %c0_4 = arith.constant 0 : index
    %c0_5 = arith.constant 0 : index
    %6 = vector.load %arg10[%c0_4, %c0_5] : memref<400x400xbf16, #tpu.memory_space<vmem>>, vector<16x400xbf16>
    tpu.vector_store %arg10[%c0_4, %c0_5], %5 {strides = array<i32>} : memref<400x400xbf16, #tpu.memory_space<vmem>>, vector<16x400xbf16>,
    %7 = vector.extract_strided_slice %3 {offsets = [0, 87], sizes = [16, 400], strides = [1, 1]} : vector<16x656xf32> to vector<16x400xf32>
    %8 = arith.truncf %7 : vector<16x400xf32> to vector<16x400xbf16>
    %c16 = arith.constant 16 : index
    %c0_6 = arith.constant 0 : index
    %9 = vector.load %arg10[%c16, %c0_6] : memref<400x400xbf16, #tpu.memory_space<vmem>>, vector<16x400xbf16>
    tpu.vector_store %arg10[%c16, %c0_6], %8 {strides = array<i32>} : memref<400x400xbf16, #tpu.memory_space<vmem>>, vector<16x400xbf16>,
    %10 = vector.extract_strided_slice %3 {offsets = [0, 88], sizes = [16, 400], strides = [1, 1]} : vector<16x656xf32> to vector<16x400xf32>
    %11 = arith.truncf %10 : vector<16x400xf32> to vector<16x400xbf16>
    %c32 = arith.constant 32 : index
    %c0_7 = arith.constant 0 : index
    %12 = vector.load %arg10[%c32, %c0_7] : memref<400x400xbf16, #tpu.memory_space<vmem>>, vector<16x400xbf16>
    tpu.vector_store %arg10[%c32, %c0_7], %11 {strides = array<i32>} : memref<400x400xbf16, #tpu.memory_space<vmem>>, vector<16x400xbf16>,
    %13 = vector.extract_strided_slice %3 {offsets = [0, 89], sizes = [16, 400], strides = [1, 1]} : vector<16x656xf32> to vector<16x400xf32>
    %14 = arith.truncf %13 : vector<16x400xf32> to vector<16x400xbf16>
    %c48 = arith.constant 48 : index
    %c0_8 = arith.constant 0 : index
    %15 = vector.load %arg10[%c48, %c0_8] : memref<400x400xbf16, #tpu.memory_space<vmem>>, vector<16x400xbf16>
    tpu.vector_store %arg10[%c48, %c0_8], %14 {strides = array<i32>} : memref<400x400xbf16, #tpu.memory_space<vmem>>, vector<16x400xbf16>,
    %16 = vector.extract_strided_slice %3 {offsets = [0, 90], sizes = [16, 400], strides = [1, 1]} : vector<16x656xf32> to vector<16x400xf32>
    %17 = arith.truncf %16 : vector<16x400xf32> to vector<16x400xbf16>
    %c64 = arith.constant 64 : index
    %c0_9 = arith.constant 0 : index
    %18 = vector.load %arg10[%c64, %c0_9] : memref<400x400xbf16, #tpu.memory_space<vmem>>, vector<16x400xbf16>
    tpu.vector_store %arg10[%c64, %c0_9], %17 {strides = array<i32>} : memref<400x400xbf16, #tpu.memory_space<vmem>>, vector<16x400xbf16>,
    %19 = vector.extract_strided_slice %3 {offsets = [0, 106], sizes = [16, 400], strides = [1, 1]} : vector<16x656xf32> to vector<16x400xf32>
    %20 = arith.truncf %19 : vector<16x400xf32> to vector<16x400xbf16>
    %c80 = arith.constant 80 : index
    %c0_10 = arith.constant 0 : index
    %21 = vector.load %arg10[%c80, %c0_10] : memref<400x400xbf16, #tpu.memory_space<vmem>>, vector<16x400xbf16>
    tpu.vector_store %arg10[%c80, %c0_10], %20 {strides = array<i32>} : memref<400x400xbf16, #tpu.memory_space<vmem>>, vector<16x400xbf16>,
    %22 = vector.extract_strided_slice %3 {offsets = [0, 107], sizes = [16, 400], strides = [1, 1]} : vector<16x656xf32> to vector<16x400xf32>
    %23 = arith.truncf %22 : vector<16x400xf32> to vector<16x400xbf16>
    %c96 = arith.constant 96 : index
    %c0_11 = arith.constant 0 : index
    %24 = vector.load %arg10[%c96, %c0_11] : memref<400x400xbf16, #tpu.memory_space<vmem>>, vector<16x400xbf16>
    tpu.vector_store %arg10[%c96, %c0_11], %23 {strides = array<i32>} : memref<400x400xbf16, #tpu.memory_space<vmem>>, vector<16x400xbf16>,
    %25 = vector.extract_strided_slice %3 {offsets = [0, 108], sizes = [16, 400], strides = [1, 1]} : vector<16x656xf32> to vector<16x400xf32>
    %26 = arith.truncf %25 : vector<16x400xf32> to vector<16x400xbf16>
    %c112 = arith.constant 112 : index
    %c0_12 = arith.constant 0 : index
    %27 = vector.load %arg10[%c112, %c0_12] : memref<400x400xbf16, #tpu.memory_space<vmem>>, vector<16x400xbf16>
    tpu.vector_store %arg10[%c112, %c0_12], %26 {strides = array<i32>} : memref<400x400xbf16, #tpu.memory_space<vmem>>, vector<16x400xbf16>,
    %28 = vector.extract_strided_slice %3 {offsets = [0, 109], sizes = [16, 400], strides = [1, 1]} : vector<16x656xf32> to vector<16x400xf32>
    %29 = arith.truncf %28 : vector<16x400xf32> to vector<16x400xbf16>
    %c128 = arith.constant 128 : index
    %c0_13 = arith.constant 0 : index
    %30 = vector.load %arg10[%c128, %c0_13] : memref<400x400xbf16, #tpu.memory_space<vmem>>, vector<16x400xbf16>
    tpu.vector_store %arg10[%c128, %c0_13], %29 {strides = array<i32>} : memref<400x400xbf16, #tpu.memory_space<vmem>>, vector<16x400xbf16>,
    %31 = vector.extract_strided_slice %3 {offsets = [0, 110], sizes = [16, 400], strides = [1, 1]} : vector<16x656xf32> to vector<16x400xf32>
    %32 = arith.truncf %31 : vector<16x400xf32> to vector<16x400xbf16>
    %c144 = arith.constant 144 : index
    %c0_14 = arith.constant 0 : index
    %33 = vector.load %arg10[%c144, %c0_14] : memref<400x400xbf16, #tpu.memory_space<vmem>>, vector<16x400xbf16>
    tpu.vector_store %arg10[%c144, %c0_14], %32 {strides = array<i32>} : memref<400x400xbf16, #tpu.memory_space<vmem>>, vector<16x400xbf16>,
    %34 = vector.extract_strided_slice %3 {offsets = [0, 126], sizes = [16, 400], strides = [1, 1]} : vector<16x656xf32> to vector<16x400xf32>
    %35 = arith.truncf %34 : vector<16x400xf32> to vector<16x400xbf16>
    %c160 = arith.constant 160 : index
    %c0_15 = arith.constant 0 : index
    %36 = vector.load %arg10[%c160, %c0_15] : memref<400x400xbf16, #tpu.memory_space<vmem>>, vector<16x400xbf16>
    tpu.vector_store %arg10[%c160, %c0_15], %35 {strides = array<i32>} : memref<400x400xbf16, #tpu.memory_space<vmem>>, vector<16x400xbf16>,
    %37 = vector.extract_strided_slice %3 {offsets = [0, 127], sizes = [16, 400], strides = [1, 1]} : vector<16x656xf32> to vector<16x400xf32>
    %38 = arith.truncf %37 : vector<16x400xf32> to vector<16x400xbf16>
    %c176 = arith.constant 176 : index
    %c0_16 = arith.constant 0 : index
    %39 = vector.load %arg10[%c176, %c0_16] : memref<400x400xbf16, #tpu.memory_space<vmem>>, vector<16x400xbf16>
    tpu.vector_store %arg10[%c176, %c0_16], %38 {strides = array<i32>} : memref<400x400xbf16, #tpu.memory_space<vmem>>, vector<16x400xbf16>,
    %40 = vector.extract_strided_slice %3 {offsets = [0, 128], sizes = [16, 400], strides = [1, 1]} : vector<16x656xf32> to vector<16x400xf32>
    %41 = arith.truncf %40 : vector<16x400xf32> to vector<16x400xbf16>
    %c192 = arith.constant 192 : index
    %c0_17 = arith.constant 0 : index
    %42 = vector.load %arg10[%c192, %c0_17] : memref<400x400xbf16, #tpu.memory_space<vmem>>, vector<16x400xbf16>
    tpu.vector_store %arg10[%c192, %c0_17], %41 {strides = array<i32>} : memref<400x400xbf16, #tpu.memory_space<vmem>>, vector<16x400xbf16>,
    %43 = vector.extract_strided_slice %3 {offsets = [0, 129], sizes = [16, 400], strides = [1, 1]} : vector<16x656xf32> to vector<16x400xf32>
    %44 = arith.truncf %43 : vector<16x400xf32> to vector<16x400xbf16>
    %c208 = arith.constant 208 : index
    %c0_18 = arith.constant 0 : index
    %45 = vector.load %arg10[%c208, %c0_18] : memref<400x400xbf16, #tpu.memory_space<vmem>>, vector<16x400xbf16>
    tpu.vector_store %arg10[%c208, %c0_18], %44 {strides = array<i32>} : memref<400x400xbf16, #tpu.memory_space<vmem>>, vector<16x400xbf16>,
    %46 = vector.extract_strided_slice %3 {offsets = [0, 130], sizes = [16, 400], strides = [1, 1]} : vector<16x656xf32> to vector<16x400xf32>
    %47 = arith.truncf %46 : vector<16x400xf32> to vector<16x400xbf16>
    %c224 = arith.constant 224 : index
    %c0_19 = arith.constant 0 : index
    %48 = vector.load %arg10[%c224, %c0_19] : memref<400x400xbf16, #tpu.memory_space<vmem>>, vector<16x400xbf16>
    tpu.vector_store %arg10[%c224, %c0_19], %47 {strides = array<i32>} : memref<400x400xbf16, #tpu.memory_space<vmem>>, vector<16x400xbf16>,
    %49 = vector.extract_strided_slice %3 {offsets = [0, 146], sizes = [16, 400], strides = [1, 1]} : vector<16x656xf32> to vector<16x400xf32>
    %50 = arith.truncf %49 : vector<16x400xf32> to vector<16x400xbf16>
    %c240 = arith.constant 240 : index
    %c0_20 = arith.constant 0 : index
    %51 = vector.load %arg10[%c240, %c0_20] : memref<400x400xbf16, #tpu.memory_space<vmem>>, vector<16x400xbf16>
    tpu.vector_store %arg10[%c240, %c0_20], %50 {strides = array<i32>} : memref<400x400xbf16, #tpu.memory_space<vmem>>, vector<16x400xbf16>,
    %52 = vector.extract_strided_slice %3 {offsets = [0, 147], sizes = [16, 400], strides = [1, 1]} : vector<16x656xf32> to vector<16x400xf32>
    %53 = arith.truncf %52 : vector<16x400xf32> to vector<16x400xbf16>
    %c256 = arith.constant 256 : index
    %c0_21 = arith.constant 0 : index
    %54 = vector.load %arg10[%c256, %c0_21] : memref<400x400xbf16, #tpu.memory_space<vmem>>, vector<16x400xbf16>
    tpu.vector_store %arg10[%c256, %c0_21], %53 {strides = array<i32>} : memref<400x400xbf16, #tpu.memory_space<vmem>>, vector<16x400xbf16>,
    %55 = vector.extract_strided_slice %3 {offsets = [0, 148], sizes = [16, 400], strides = [1, 1]} : vector<16x656xf32> to vector<16x400xf32>
    %56 = arith.truncf %55 : vector<16x400xf32> to vector<16x400xbf16>
    %c272 = arith.constant 272 : index
    %c0_22 = arith.constant 0 : index
    %57 = vector.load %arg10[%c272, %c0_22] : memref<400x400xbf16, #tpu.memory_space<vmem>>, vector<16x400xbf16>
    tpu.vector_store %arg10[%c272, %c0_22], %56 {strides = array<i32>} : memref<400x400xbf16, #tpu.memory_space<vmem>>, vector<16x400xbf16>,
    %58 = vector.extract_strided_slice %3 {offsets = [0, 149], sizes = [16, 400], strides = [1, 1]} : vector<16x656xf32> to vector<16x400xf32>
    %59 = arith.truncf %58 : vector<16x400xf32> to vector<16x400xbf16>
    %c288 = arith.constant 288 : index
    %c0_23 = arith.constant 0 : index
    %60 = vector.load %arg10[%c288, %c0_23] : memref<400x400xbf16, #tpu.memory_space<vmem>>, vector<16x400xbf16>
    tpu.vector_store %arg10[%c288, %c0_23], %59 {strides = array<i32>} : memref<400x400xbf16, #tpu.memory_space<vmem>>, vector<16x400xbf16>,
    %61 = vector.extract_strided_slice %3 {offsets = [0, 150], sizes = [16, 400], strides = [1, 1]} : vector<16x656xf32> to vector<16x400xf32>
    %62 = arith.truncf %61 : vector<16x400xf32> to vector<16x400xbf16>
    %c304 = arith.constant 304 : index
    %c0_24 = arith.constant 0 : index
    %63 = vector.load %arg10[%c304, %c0_24] : memref<400x400xbf16, #tpu.memory_space<vmem>>, vector<16x400xbf16>
    tpu.vector_store %arg10[%c304, %c0_24], %62 {strides = array<i32>} : memref<400x400xbf16, #tpu.memory_space<vmem>>, vector<16x400xbf16>,
    %64 = vector.extract_strided_slice %3 {offsets = [0, 166], sizes = [16, 400], strides = [1, 1]} : vector<16x656xf32> to vector<16x400xf32>
    %65 = arith.truncf %64 : vector<16x400xf32> to vector<16x400xbf16>
    %c320 = arith.constant 320 : index
    %c0_25 = arith.constant 0 : index
    %66 = vector.load %arg10[%c320, %c0_25] : memref<400x400xbf16, #tpu.memory_space<vmem>>, vector<16x400xbf16>
    tpu.vector_store %arg10[%c320, %c0_25], %65 {strides = array<i32>} : memref<400x400xbf16, #tpu.memory_space<vmem>>, vector<16x400xbf16>,
    %67 = vector.extract_strided_slice %3 {offsets = [0, 167], sizes = [16, 400], strides = [1, 1]} : vector<16x656xf32> to vector<16x400xf32>
    %68 = arith.truncf %67 : vector<16x400xf32> to vector<16x400xbf16>
    %c336 = arith.constant 336 : index
    %c0_26 = arith.constant 0 : index
    %69 = vector.load %arg10[%c336, %c0_26] : memref<400x400xbf16, #tpu.memory_space<vmem>>, vector<16x400xbf16>
    tpu.vector_store %arg10[%c336, %c0_26], %68 {strides = array<i32>} : memref<400x400xbf16, #tpu.memory_space<vmem>>, vector<16x400xbf16>,
    %70 = vector.extract_strided_slice %3 {offsets = [0, 168], sizes = [16, 400], strides = [1, 1]} : vector<16x656xf32> to vector<16x400xf32>
    %71 = arith.truncf %70 : vector<16x400xf32> to vector<16x400xbf16>
    %c352 = arith.constant 352 : index
    %c0_27 = arith.constant 0 : index
    %72 = vector.load %arg10[%c352, %c0_27] : memref<400x400xbf16, #tpu.memory_space<vmem>>, vector<16x400xbf16>
    tpu.vector_store %arg10[%c352, %c0_27], %71 {strides = array<i32>} : memref<400x400xbf16, #tpu.memory_space<vmem>>, vector<16x400xbf16>,
    %73 = vector.extract_strided_slice %3 {offsets = [0, 169], sizes = [16, 400], strides = [1, 1]} : vector<16x656xf32> to vector<16x400xf32>
    %74 = arith.truncf %73 : vector<16x400xf32> to vector<16x400xbf16>
    %c368 = arith.constant 368 : index
    %c0_28 = arith.constant 0 : index
    %75 = vector.load %arg10[%c368, %c0_28] : memref<400x400xbf16, #tpu.memory_space<vmem>>, vector<16x400xbf16>
    tpu.vector_store %arg10[%c368, %c0_28], %74 {strides = array<i32>} : memref<400x400xbf16, #tpu.memory_space<vmem>>, vector<16x400xbf16>,
    %76 = vector.extract_strided_slice %3 {offsets = [0, 170], sizes = [16, 400], strides = [1, 1]} : vector<16x656xf32> to vector<16x400xf32>
    %77 = arith.truncf %76 : vector<16x400xf32> to vector<16x400xbf16>
    %c384 = arith.constant 384 : index
    %c0_29 = arith.constant 0 : index
    %78 = vector.load %arg10[%c384, %c0_29] : memref<400x400xbf16, #tpu.memory_space<vmem>>, vector<16x400xbf16>
    tpu.vector_store %arg10[%c384, %c0_29], %77 {strides = array<i32>} : memref<400x400xbf16, #tpu.memory_space<vmem>>, vector<16x400xbf16>,
    %c0_30 = arith.constant 0 : index
    %c0_31 = arith.constant 0 : index
    %c0_32 = arith.constant 0 : index
    %79 = vector.load %arg2[%c0_30, %c0_31, %c0_32] : memref<1x8x400xbf16, #tpu.memory_space<vmem>>, vector<1x8x400xbf16>
    %80 = vector.shape_cast %79 : vector<1x8x400xbf16> to vector<8x400xbf16>
    %c0_33 = arith.constant 0 : index
    %c0_34 = arith.constant 0 : index
    %81 = vector.load %arg10[%c0_33, %c0_34] : memref<400x400xbf16, #tpu.memory_space<vmem>>, vector<400x400xbf16>
    %cst = arith.constant dense<0.000000e+00> : vector<8x400xf32>
    %82 = tpu.matmul %80, %81, %cst {dimension_numbers = #tpu.dot_dimension_numbers<[1], [0], [0], [1], [0, 0, 1, 1], [], []>} : vector<8x400xbf16>, vector<400x400xbf16>, vector<8x400xf32> -> vector<8x400xf32>
    %c0_35 = arith.constant 0 : index
    %c0_36 = arith.constant 0 : index
    %83 = vector.load %arg4[%c0_35, %c0_36] : memref<8x1xf32, #tpu.memory_space<vmem>>, vector<8x1xf32>
    %c0_37 = arith.constant 0 : index
    %c0_38 = arith.constant 0 : index
    %84 = vector.load %arg5[%c0_37, %c0_38] : memref<8x1xf32, #tpu.memory_space<vmem>>, vector<8x1xf32>
    %85 = vector.broadcast %0 : vector<1x400xf32> to vector<8x400xf32>
    %86 = arith.mulf %82, %85 : vector<8x400xf32>
    %cst_39 = arith.constant dense<0.000000e+00> : vector<8xf32>
    %87 = vector.multi_reduction <add>, %86, %cst_39 [1] : vector<8x400xf32> to vector<8xf32>
    %88 = vector.shape_cast %87 : vector<8xf32> to vector<8x1xf32>
    %cst_40 = arith.constant 3.906250e-03 : f32
    %89 = vector.broadcast %cst_40 : f32 to vector<8x1xf32>
    %90 = arith.mulf %88, %89 : vector<8x1xf32>
    %91 = vector.broadcast %90 : vector<8x1xf32> to vector<8x400xf32>
    %92 = arith.subf %82, %91 : vector<8x400xf32>
    %93 = vector.broadcast %0 : vector<1x400xf32> to vector<8x400xf32>
    %94 = arith.mulf %92, %93 : vector<8x400xf32>
    %95 = arith.mulf %94, %94 : vector<8x400xf32>
    %cst_41 = arith.constant dense<0.000000e+00> : vector<8xf32>
    %96 = vector.multi_reduction <add>, %95, %cst_41 [1] : vector<8x400xf32> to vector<8xf32>
    %97 = vector.shape_cast %96 : vector<8xf32> to vector<8x1xf32>
    %cst_42 = arith.constant 3.906250e-03 : f32
    %98 = vector.broadcast %cst_42 : f32 to vector<8x1xf32>
    %99 = arith.mulf %97, %98 : vector<8x1xf32>
    %100 = vector.broadcast %90 : vector<8x1xf32> to vector<8x400xf32>
    %101 = arith.subf %82, %100 : vector<8x400xf32>
    %cst_43 = arith.constant 9.99999974E-6 : f32
    %102 = vector.broadcast %cst_43 : f32 to vector<8x1xf32>
    %103 = arith.addf %99, %102 : vector<8x1xf32>
    %104 = math.rsqrt %103 : vector<8x1xf32>
    %105 = vector.broadcast %104 : vector<8x1xf32> to vector<8x400xf32>
    %106 = arith.mulf %101, %105 : vector<8x400xf32>
    %107 = vector.broadcast %83 : vector<8x1xf32> to vector<8x400xf32>
    %108 = arith.mulf %106, %107 : vector<8x400xf32>
    %109 = vector.broadcast %84 : vector<8x1xf32> to vector<8x400xf32>
    %110 = arith.addf %108, %109 : vector<8x400xf32>
    %cst_44 = arith.constant 2.000000e+01 : f32
    %111 = vector.broadcast %cst_44 : f32 to vector<8x400xf32>
    %112 = arith.cmpf ogt, %110, %111 : vector<8x400xf32>
    %cst_45 = arith.constant 2.000000e+01 : f32
    %113 = vector.broadcast %cst_45 : f32 to vector<8x400xf32>
    %114 = arith.minimumf %110, %113 : vector<8x400xf32>
    %115 = math.exp %114 : vector<8x400xf32>
    %116 = math.log1p %115 : vector<8x400xf32>
    %117 = arith.select %112, %110, %116 : vector<8x400xi1>, vector<8x400xf32>
    %118 = math.tanh %117 : vector<8x400xf32>
    %119 = arith.mulf %110, %118 : vector<8x400xf32>
    %120 = vector.broadcast %0 : vector<1x400xf32> to vector<8x400xf32>
    %121 = arith.mulf %119, %120 : vector<8x400xf32>
    %cst_46 = arith.constant 0.000000e+00 : f32
    %122 = vector.broadcast %cst_46 : f32 to vector<8x656xf32>
    %c0_47 = arith.constant 0 : index
    %c0_48 = arith.constant 0 : index
    %123 = vector.load %arg12[%c0_47, %c0_48] : memref<8x656xf32, #tpu.memory_space<vmem>>, vector<8x656xf32>
    tpu.vector_store %arg12[%c0_47, %c0_48], %122 {strides = array<i32>} : memref<8x656xf32, #tpu.memory_space<vmem>>, vector<8x656xf32>,
    %c0_49 = arith.constant 0 : index
    %c128_50 = arith.constant 128 : index
    %124 = vector.load %arg12[%c0_49, %c128_50] : memref<8x656xf32, #tpu.memory_space<vmem>>, vector<8x400xf32>
    tpu.vector_store %arg12[%c0_49, %c128_50], %121 {strides = array<i32>} : memref<8x656xf32, #tpu.memory_space<vmem>>, vector<8x400xf32>,
    %c0_51 = arith.constant 0 : index
    %c0_52 = arith.constant 0 : index
    %125 = vector.load %arg12[%c0_51, %c0_52] : memref<8x656xf32, #tpu.memory_space<vmem>>, vector<8x656xf32>
    %126 = vector.extract_strided_slice %125 {offsets = [0, 86], sizes = [8, 400], strides = [1, 1]} : vector<8x656xf32> to vector<8x400xf32>
    %c0_53 = arith.constant 0 : index
    %c0_54 = arith.constant 0 : index
    %127 = vector.load %arg11[%c0_53, %c0_54] : memref<200x400xf32, #tpu.memory_space<vmem>>, vector<8x400xf32>
    tpu.vector_store %arg11[%c0_53, %c0_54], %126 {strides = array<i32>} : memref<200x400xf32, #tpu.memory_space<vmem>>, vector<8x400xf32>,
    %128 = vector.extract_strided_slice %125 {offsets = [0, 87], sizes = [8, 400], strides = [1, 1]} : vector<8x656xf32> to vector<8x400xf32>
    %c8 = arith.constant 8 : index
    %c0_55 = arith.constant 0 : index
    %129 = vector.load %arg11[%c8, %c0_55] : memref<200x400xf32, #tpu.memory_space<vmem>>, vector<8x400xf32>
    tpu.vector_store %arg11[%c8, %c0_55], %128 {strides = array<i32>} : memref<200x400xf32, #tpu.memory_space<vmem>>, vector<8x400xf32>,
    %130 = vector.extract_strided_slice %125 {offsets = [0, 88], sizes = [8, 400], strides = [1, 1]} : vector<8x656xf32> to vector<8x400xf32>
    %c16_56 = arith.constant 16 : index
    %c0_57 = arith.constant 0 : index
    %131 = vector.load %arg11[%c16_56, %c0_57] : memref<200x400xf32, #tpu.memory_space<vmem>>, vector<8x400xf32>
    tpu.vector_store %arg11[%c16_56, %c0_57], %130 {strides = array<i32>} : memref<200x400xf32, #tpu.memory_space<vmem>>, vector<8x400xf32>,
    %132 = vector.extract_strided_slice %125 {offsets = [0, 89], sizes = [8, 400], strides = [1, 1]} : vector<8x656xf32> to vector<8x400xf32>
    %c24 = arith.constant 24 : index
    %c0_58 = arith.constant 0 : index
    %133 = vector.load %arg11[%c24, %c0_58] : memref<200x400xf32, #tpu.memory_space<vmem>>, vector<8x400xf32>
    tpu.vector_store %arg11[%c24, %c0_58], %132 {strides = array<i32>} : memref<200x400xf32, #tpu.memory_space<vmem>>, vector<8x400xf32>,
    %134 = vector.extract_strided_slice %125 {offsets = [0, 90], sizes = [8, 400], strides = [1, 1]} : vector<8x656xf32> to vector<8x400xf32>
    %c32_59 = arith.constant 32 : index
    %c0_60 = arith.constant 0 : index
    %135 = vector.load %arg11[%c32_59, %c0_60] : memref<200x400xf32, #tpu.memory_space<vmem>>, vector<8x400xf32>
    tpu.vector_store %arg11[%c32_59, %c0_60], %134 {strides = array<i32>} : memref<200x400xf32, #tpu.memory_space<vmem>>, vector<8x400xf32>,
    %136 = vector.extract_strided_slice %125 {offsets = [0, 106], sizes = [8, 400], strides = [1, 1]} : vector<8x656xf32> to vector<8x400xf32>
    %c40 = arith.constant 40 : index
    %c0_61 = arith.constant 0 : index
    %137 = vector.load %arg11[%c40, %c0_61] : memref<200x400xf32, #tpu.memory_space<vmem>>, vector<8x400xf32>
    tpu.vector_store %arg11[%c40, %c0_61], %136 {strides = array<i32>} : memref<200x400xf32, #tpu.memory_space<vmem>>, vector<8x400xf32>,
    %138 = vector.extract_strided_slice %125 {offsets = [0, 107], sizes = [8, 400], strides = [1, 1]} : vector<8x656xf32> to vector<8x400xf32>
    %c48_62 = arith.constant 48 : index
    %c0_63 = arith.constant 0 : index
    %139 = vector.load %arg11[%c48_62, %c0_63] : memref<200x400xf32, #tpu.memory_space<vmem>>, vector<8x400xf32>
    tpu.vector_store %arg11[%c48_62, %c0_63], %138 {strides = array<i32>} : memref<200x400xf32, #tpu.memory_space<vmem>>, vector<8x400xf32>,
    %140 = vector.extract_strided_slice %125 {offsets = [0, 108], sizes = [8, 400], strides = [1, 1]} : vector<8x656xf32> to vector<8x400xf32>
    %c56 = arith.constant 56 : index
    %c0_64 = arith.constant 0 : index
    %141 = vector.load %arg11[%c56, %c0_64] : memref<200x400xf32, #tpu.memory_space<vmem>>, vector<8x400xf32>
    tpu.vector_store %arg11[%c56, %c0_64], %140 {strides = array<i32>} : memref<200x400xf32, #tpu.memory_space<vmem>>, vector<8x400xf32>,
    %142 = vector.extract_strided_slice %125 {offsets = [0, 109], sizes = [8, 400], strides = [1, 1]} : vector<8x656xf32> to vector<8x400xf32>
    %c64_65 = arith.constant 64 : index
    %c0_66 = arith.constant 0 : index
    %143 = vector.load %arg11[%c64_65, %c0_66] : memref<200x400xf32, #tpu.memory_space<vmem>>, vector<8x400xf32>
    tpu.vector_store %arg11[%c64_65, %c0_66], %142 {strides = array<i32>} : memref<200x400xf32, #tpu.memory_space<vmem>>, vector<8x400xf32>,
    %144 = vector.extract_strided_slice %125 {offsets = [0, 110], sizes = [8, 400], strides = [1, 1]} : vector<8x656xf32> to vector<8x400xf32>
    %c72 = arith.constant 72 : index
    %c0_67 = arith.constant 0 : index
    %145 = vector.load %arg11[%c72, %c0_67] : memref<200x400xf32, #tpu.memory_space<vmem>>, vector<8x400xf32>
    tpu.vector_store %arg11[%c72, %c0_67], %144 {strides = array<i32>} : memref<200x400xf32, #tpu.memory_space<vmem>>, vector<8x400xf32>,
    %146 = vector.extract_strided_slice %125 {offsets = [0, 126], sizes = [8, 400], strides = [1, 1]} : vector<8x656xf32> to vector<8x400xf32>
    %c80_68 = arith.constant 80 : index
    %c0_69 = arith.constant 0 : index
    %147 = vector.load %arg11[%c80_68, %c0_69] : memref<200x400xf32, #tpu.memory_space<vmem>>, vector<8x400xf32>
    tpu.vector_store %arg11[%c80_68, %c0_69], %146 {strides = array<i32>} : memref<200x400xf32, #tpu.memory_space<vmem>>, vector<8x400xf32>,
    %148 = vector.extract_strided_slice %125 {offsets = [0, 127], sizes = [8, 400], strides = [1, 1]} : vector<8x656xf32> to vector<8x400xf32>
    %c88 = arith.constant 88 : index
    %c0_70 = arith.constant 0 : index
    %149 = vector.load %arg11[%c88, %c0_70] : memref<200x400xf32, #tpu.memory_space<vmem>>, vector<8x400xf32>
    tpu.vector_store %arg11[%c88, %c0_70], %148 {strides = array<i32>} : memref<200x400xf32, #tpu.memory_space<vmem>>, vector<8x400xf32>,
    %150 = vector.extract_strided_slice %125 {offsets = [0, 128], sizes = [8, 400], strides = [1, 1]} : vector<8x656xf32> to vector<8x400xf32>
    %c96_71 = arith.constant 96 : index
    %c0_72 = arith.constant 0 : index
    %151 = vector.load %arg11[%c96_71, %c0_72] : memref<200x400xf32, #tpu.memory_space<vmem>>, vector<8x400xf32>
    tpu.vector_store %arg11[%c96_71, %c0_72], %150 {strides = array<i32>} : memref<200x400xf32, #tpu.memory_space<vmem>>, vector<8x400xf32>,
    %152 = vector.extract_strided_slice %125 {offsets = [0, 129], sizes = [8, 400], strides = [1, 1]} : vector<8x656xf32> to vector<8x400xf32>
    %c104 = arith.constant 104 : index
    %c0_73 = arith.constant 0 : index
    %153 = vector.load %arg11[%c104, %c0_73] : memref<200x400xf32, #tpu.memory_space<vmem>>, vector<8x400xf32>
    tpu.vector_store %arg11[%c104, %c0_73], %152 {strides = array<i32>} : memref<200x400xf32, #tpu.memory_space<vmem>>, vector<8x400xf32>,
    %154 = vector.extract_strided_slice %125 {offsets = [0, 130], sizes = [8, 400], strides = [1, 1]} : vector<8x656xf32> to vector<8x400xf32>
    %c112_74 = arith.constant 112 : index
    %c0_75 = arith.constant 0 : index
    %155 = vector.load %arg11[%c112_74, %c0_75] : memref<200x400xf32, #tpu.memory_space<vmem>>, vector<8x400xf32>
    tpu.vector_store %arg11[%c112_74, %c0_75], %154 {strides = array<i32>} : memref<200x400xf32, #tpu.memory_space<vmem>>, vector<8x400xf32>,
    %156 = vector.extract_strided_slice %125 {offsets = [0, 146], sizes = [8, 400], strides = [1, 1]} : vector<8x656xf32> to vector<8x400xf32>
    %c120 = arith.constant 120 : index
    %c0_76 = arith.constant 0 : index
    %157 = vector.load %arg11[%c120, %c0_76] : memref<200x400xf32, #tpu.memory_space<vmem>>, vector<8x400xf32>
    tpu.vector_store %arg11[%c120, %c0_76], %156 {strides = array<i32>} : memref<200x400xf32, #tpu.memory_space<vmem>>, vector<8x400xf32>,
    %158 = vector.extract_strided_slice %125 {offsets = [0, 147], sizes = [8, 400], strides = [1, 1]} : vector<8x656xf32> to vector<8x400xf32>
    %c128_77 = arith.constant 128 : index
    %c0_78 = arith.constant 0 : index
    %159 = vector.load %arg11[%c128_77, %c0_78] : memref<200x400xf32, #tpu.memory_space<vmem>>, vector<8x400xf32>
    tpu.vector_store %arg11[%c128_77, %c0_78], %158 {strides = array<i32>} : memref<200x400xf32, #tpu.memory_space<vmem>>, vector<8x400xf32>,
    %160 = vector.extract_strided_slice %125 {offsets = [0, 148], sizes = [8, 400], strides = [1, 1]} : vector<8x656xf32> to vector<8x400xf32>
    %c136 = arith.constant 136 : index
    %c0_79 = arith.constant 0 : index
    %161 = vector.load %arg11[%c136, %c0_79] : memref<200x400xf32, #tpu.memory_space<vmem>>, vector<8x400xf32>
    tpu.vector_store %arg11[%c136, %c0_79], %160 {strides = array<i32>} : memref<200x400xf32, #tpu.memory_space<vmem>>, vector<8x400xf32>,
    %162 = vector.extract_strided_slice %125 {offsets = [0, 149], sizes = [8, 400], strides = [1, 1]} : vector<8x656xf32> to vector<8x400xf32>
    %c144_80 = arith.constant 144 : index
    %c0_81 = arith.constant 0 : index
    %163 = vector.load %arg11[%c144_80, %c0_81] : memref<200x400xf32, #tpu.memory_space<vmem>>, vector<8x400xf32>
    tpu.vector_store %arg11[%c144_80, %c0_81], %162 {strides = array<i32>} : memref<200x400xf32, #tpu.memory_space<vmem>>, vector<8x400xf32>,
    %164 = vector.extract_strided_slice %125 {offsets = [0, 150], sizes = [8, 400], strides = [1, 1]} : vector<8x656xf32> to vector<8x400xf32>
    %c152 = arith.constant 152 : index
    %c0_82 = arith.constant 0 : index
    %165 = vector.load %arg11[%c152, %c0_82] : memref<200x400xf32, #tpu.memory_space<vmem>>, vector<8x400xf32>
    tpu.vector_store %arg11[%c152, %c0_82], %164 {strides = array<i32>} : memref<200x400xf32, #tpu.memory_space<vmem>>, vector<8x400xf32>,
    %166 = vector.extract_strided_slice %125 {offsets = [0, 166], sizes = [8, 400], strides = [1, 1]} : vector<8x656xf32> to vector<8x400xf32>
    %c160_83 = arith.constant 160 : index
    %c0_84 = arith.constant 0 : index
    %167 = vector.load %arg11[%c160_83, %c0_84] : memref<200x400xf32, #tpu.memory_space<vmem>>, vector<8x400xf32>
    tpu.vector_store %arg11[%c160_83, %c0_84], %166 {strides = array<i32>} : memref<200x400xf32, #tpu.memory_space<vmem>>, vector<8x400xf32>,
    %168 = vector.extract_strided_slice %125 {offsets = [0, 167], sizes = [8, 400], strides = [1, 1]} : vector<8x656xf32> to vector<8x400xf32>
    %c168 = arith.constant 168 : index
    %c0_85 = arith.constant 0 : index
    %169 = vector.load %arg11[%c168, %c0_85] : memref<200x400xf32, #tpu.memory_space<vmem>>, vector<8x400xf32>
    tpu.vector_store %arg11[%c168, %c0_85], %168 {strides = array<i32>} : memref<200x400xf32, #tpu.memory_space<vmem>>, vector<8x400xf32>,
    %170 = vector.extract_strided_slice %125 {offsets = [0, 168], sizes = [8, 400], strides = [1, 1]} : vector<8x656xf32> to vector<8x400xf32>
    %c176_86 = arith.constant 176 : index
    %c0_87 = arith.constant 0 : index
    %171 = vector.load %arg11[%c176_86, %c0_87] : memref<200x400xf32, #tpu.memory_space<vmem>>, vector<8x400xf32>
    tpu.vector_store %arg11[%c176_86, %c0_87], %170 {strides = array<i32>} : memref<200x400xf32, #tpu.memory_space<vmem>>, vector<8x400xf32>,
    %172 = vector.extract_strided_slice %125 {offsets = [0, 169], sizes = [8, 400], strides = [1, 1]} : vector<8x656xf32> to vector<8x400xf32>
    %c184 = arith.constant 184 : index
    %c0_88 = arith.constant 0 : index
    %173 = vector.load %arg11[%c184, %c0_88] : memref<200x400xf32, #tpu.memory_space<vmem>>, vector<8x400xf32>
    tpu.vector_store %arg11[%c184, %c0_88], %172 {strides = array<i32>} : memref<200x400xf32, #tpu.memory_space<vmem>>, vector<8x400xf32>,
    %174 = vector.extract_strided_slice %125 {offsets = [0, 170], sizes = [8, 400], strides = [1, 1]} : vector<8x656xf32> to vector<8x400xf32>
    %c192_89 = arith.constant 192 : index
    %c0_90 = arith.constant 0 : index
    %175 = vector.load %arg11[%c192_89, %c0_90] : memref<200x400xf32, #tpu.memory_space<vmem>>, vector<8x400xf32>
    tpu.vector_store %arg11[%c192_89, %c0_90], %174 {strides = array<i32>} : memref<200x400xf32, #tpu.memory_space<vmem>>, vector<8x400xf32>,
    %c0_91 = arith.constant 0 : index
    %c0_92 = arith.constant 0 : index
    %c0_93 = arith.constant 0 : index
    %176 = vector.load %arg3[%c0_91, %c0_92, %c0_93] : memref<1x8x200xf32, #tpu.memory_space<vmem>>, vector<1x8x200xf32>
    %177 = vector.shape_cast %176 : vector<1x8x200xf32> to vector<8x200xf32>
    %c0_94 = arith.constant 0 : index
    %c0_95 = arith.constant 0 : index
    %178 = vector.load %arg11[%c0_94, %c0_95] : memref<200x400xf32, #tpu.memory_space<vmem>>, vector<200x400xf32>
    %cst_96 = arith.constant dense<0.000000e+00> : vector<8x400xf32>
    %179 = tpu.matmul %177, %178, %cst_96 {dimension_numbers = #tpu.dot_dimension_numbers<[1], [0], [0], [1], [0, 0, 1, 1], [], []>} : vector<8x200xf32>, vector<200x400xf32>, vector<8x400xf32> -> vector<8x400xf32>
    %c0_97 = arith.constant 0 : index
    %c0_98 = arith.constant 0 : index
    %180 = vector.load %arg6[%c0_97, %c0_98] : memref<8x1xf32, #tpu.memory_space<vmem>>, vector<8x1xf32>
    %c0_99 = arith.constant 0 : index
    %c0_100 = arith.constant 0 : index
    %181 = vector.load %arg7[%c0_99, %c0_100] : memref<8x1xf32, #tpu.memory_space<vmem>>, vector<8x1xf32>
    %182 = vector.broadcast %0 : vector<1x400xf32> to vector<8x400xf32>
    %183 = arith.mulf %179, %182 : vector<8x400xf32>
    %cst_101 = arith.constant dense<0.000000e+00> : vector<8xf32>
    %184 = vector.multi_reduction <add>, %183, %cst_101 [1] : vector<8x400xf32> to vector<8xf32>
    %185 = vector.shape_cast %184 : vector<8xf32> to vector<8x1xf32>
    %cst_102 = arith.constant 3.906250e-03 : f32
    %186 = vector.broadcast %cst_102 : f32 to vector<8x1xf32>
    %187 = arith.mulf %185, %186 : vector<8x1xf32>
    %188 = vector.broadcast %187 : vector<8x1xf32> to vector<8x400xf32>
    %189 = arith.subf %179, %188 : vector<8x400xf32>
    %190 = vector.broadcast %0 : vector<1x400xf32> to vector<8x400xf32>
    %191 = arith.mulf %189, %190 : vector<8x400xf32>
    %192 = arith.mulf %191, %191 : vector<8x400xf32>
    %cst_103 = arith.constant dense<0.000000e+00> : vector<8xf32>
    %193 = vector.multi_reduction <add>, %192, %cst_103 [1] : vector<8x400xf32> to vector<8xf32>
    %194 = vector.shape_cast %193 : vector<8xf32> to vector<8x1xf32>
    %cst_104 = arith.constant 3.906250e-03 : f32
    %195 = vector.broadcast %cst_104 : f32 to vector<8x1xf32>
    %196 = arith.mulf %194, %195 : vector<8x1xf32>
    %197 = vector.broadcast %187 : vector<8x1xf32> to vector<8x400xf32>
    %198 = arith.subf %179, %197 : vector<8x400xf32>
    %cst_105 = arith.constant 9.99999974E-6 : f32
    %199 = vector.broadcast %cst_105 : f32 to vector<8x1xf32>
    %200 = arith.addf %196, %199 : vector<8x1xf32>
    %201 = math.rsqrt %200 : vector<8x1xf32>
    %202 = vector.broadcast %201 : vector<8x1xf32> to vector<8x400xf32>
    %203 = arith.mulf %198, %202 : vector<8x400xf32>
    %204 = vector.broadcast %180 : vector<8x1xf32> to vector<8x400xf32>
    %205 = arith.mulf %203, %204 : vector<8x400xf32>
    %206 = vector.broadcast %181 : vector<8x1xf32> to vector<8x400xf32>
    %207 = arith.addf %205, %206 : vector<8x400xf32>
    %cst_106 = arith.constant 2.000000e+01 : f32
    %208 = vector.broadcast %cst_106 : f32 to vector<8x400xf32>
    %209 = arith.cmpf ogt, %207, %208 : vector<8x400xf32>
    %cst_107 = arith.constant 2.000000e+01 : f32
    %210 = vector.broadcast %cst_107 : f32 to vector<8x400xf32>
    %211 = arith.minimumf %207, %210 : vector<8x400xf32>
    %212 = math.exp %211 : vector<8x400xf32>
    %213 = math.log1p %212 : vector<8x400xf32>
    %214 = arith.select %209, %207, %213 : vector<8x400xi1>, vector<8x400xf32>
    %215 = math.tanh %214 : vector<8x400xf32>
    %216 = arith.mulf %207, %215 : vector<8x400xf32>
    %217 = vector.broadcast %0 : vector<1x400xf32> to vector<8x400xf32>
    %218 = arith.mulf %216, %217 : vector<8x400xf32>
    %c0_108 = arith.constant 0 : index
    %c0_109 = arith.constant 0 : index
    %c0_110 = arith.constant 0 : index
    %219 = vector.load %arg9[%c0_108, %c0_109, %c0_110] : memref<1x8x400xf32, #tpu.memory_space<vmem>>, vector<1x8x400xf32>
    %220 = vector.shape_cast %219 : vector<1x8x400xf32> to vector<8x400xf32>
    %221 = vector.shape_cast %218 : vector<8x400xf32> to vector<1x8x400xf32>
    tpu.vector_store %arg9[%c0_108, %c0_109, %c0_110], %221 {strides = array<i32>} : memref<1x8x400xf32, #tpu.memory_space<vmem>>, vector<1x8x400xf32>,
    return
  }
  func.func @transform_0(%arg0: i32) -> (i32, i32, i32) {
    %c0_i32 = arith.constant 0 : i32
    %c0_i32_0 = arith.constant 0 : i32
    %c0_i32_1 = arith.constant 0 : i32
    return %arg0, %c0_i32, %c0_i32_0 : i32, i32, i32
  }
  func.func @transform_1(%arg0: i32) -> (i32, i32, i32) {
    %c0_i32 = arith.constant 0 : i32
    %c0_i32_0 = arith.constant 0 : i32
    %c0_i32_1 = arith.constant 0 : i32
    return %arg0, %c0_i32, %c0_i32_0 : i32, i32, i32
  }
  func.func @transform_2(%arg0: i32) -> (i32, i32, i32) {
    %c0_i32 = arith.constant 0 : i32
    %c0_i32_0 = arith.constant 0 : i32
    %c0_i32_1 = arith.constant 0 : i32
    return %arg0, %c0_i32, %c0_i32_0 : i32, i32, i32
  }
  func.func @transform_3(%arg0: i32) -> (i32, i32) {
    %c0_i32 = arith.constant 0 : i32
    %c0_i32_0 = arith.constant 0 : i32
    %c0_i32_1 = arith.constant 0 : i32
    return %c0_i32, %c0_i32_0 : i32, i32
  }
  func.func @transform_4(%arg0: i32) -> (i32, i32) {
    %c0_i32 = arith.constant 0 : i32
    %c0_i32_0 = arith.constant 0 : i32
    %c0_i32_1 = arith.constant 0 : i32
    return %c0_i32, %c0_i32_0 : i32, i32
  }
  func.func @transform_5(%arg0: i32) -> (i32, i32) {
    %c0_i32 = arith.constant 0 : i32
    %c0_i32_0 = arith.constant 0 : i32
    %c0_i32_1 = arith.constant 0 : i32
    return %c0_i32, %c0_i32_0 : i32, i32
  }
  func.func @transform_6(%arg0: i32) -> (i32, i32) {
    %c0_i32 = arith.constant 0 : i32
    %c0_i32_0 = arith.constant 0 : i32
    %c0_i32_1 = arith.constant 0 : i32
    return %c0_i32, %c0_i32_0 : i32, i32
  }
  func.func @transform_7(%arg0: i32) -> (i32, i32) {
    %c0_i32 = arith.constant 0 : i32
    %c0_i32_0 = arith.constant 0 : i32
    %c0_i32_1 = arith.constant 0 : i32
    return %c0_i32, %c0_i32_0 : i32, i32
  }
  func.func @transform_8(%arg0: i32) -> (i32, i32, i32) {
    %c0_i32 = arith.constant 0 : i32
    %c0_i32_0 = arith.constant 0 : i32
    %c0_i32_1 = arith.constant 0 : i32
    return %arg0, %c0_i32, %c0_i32_0 : i32, i32, i32
  }
}

</mosaic_0001>

<llo_original>
// kernel: mode_decoder_block_forward.2
$region0: #{mode_decoder_block_forward.2}
  #allocation0 [shape = 'u32[]', space=smem, size = 0x4, offset = 0x4, fixed_abs, tag = 'smem constant byte address 0x4 - core index']
  #allocation1 [shape = 'u32[144,128]{1,0:T(1,128)}', space=vmem, size = 0x12000, scoped, tag = 'internal scratch']
  %s0 = inlined_call_operand.vmem [shape: f32[2,16,64], index: 0, kind: input, shape index: {}]
  %s1 = inlined_call_operand.vmem [shape: f32[4,8,16], index: 1, kind: input, shape index: {}]
  %s2 = inlined_call_operand.vmem [shape: f32[8,1], index: 2, kind: input, shape index: {}]
  %s3 = inlined_call_operand.vmem [shape: f32[8,1], index: 3, kind: input, shape index: {}]
  %s4 = inlined_call_operand.vmem [shape: f32[2,4,8,64], index: 4, kind: output, shape index: {}]
  %s5 = sld [smem:[#allocation0]]
  $region49: #{mode_decoder_block_forward.2} parent=0
    _
  %s7 = ssub.s32 1, %s5
  %s8 = scalar_select 0, %s7, %s5
  loop: start=0, step=1, limit=4
  $region2: #{mode_decoder_block_forward.2} parent=0 // loop_pre_header
    _
  $region3: #{mode_decoder_block_forward.2} parent=0 // loop_header
    %s10 = sphi 0, %s14
    %p11 = scmp.ge.s32.totalorder %s10, 4
    %s20 = sphi 0, %s22
    %s23 = sphi 0, %s20
    %s24 = sphi 0, %s23
    %s40 = sphi 0, %s24
    %s44 = sphi 0, %s44
    %s46 = sphi 0, %s44
    %s47 = sphi 0, %s46
    %s61 = sphi 0, %s47
    %s65 = sphi 0, %s65
    %s67 = sphi 0, %s65
    %s68 = sphi 0, %s67
    %s82 = sphi 0, %s68
    %s86 = sphi 0, %s86
    %s88 = sphi 0, %s86
    %s89 = sphi 0, %s88
    %s103 = sphi 0, %s89
    %s109 = sphi 0, %s111
    %s112 = sphi 0, %s109
    %s113 = sphi 0, %s112
    %s129 = sphi 0, %s113
  $region4: #{mode_decoder_block_forward.2} parent=0 // loop_header_branch
    %13 = sbr.rel (%p11) target = $region8
  $region5: #{mode_decoder_block_forward.2} parent=0 // loop_body
    %s15 = ssub.s32 %s10, 1
    %s16 = ssub.s32 %s10, 2
    %s17 = sadd.s32 %s10, 1
    %s18 = ssub.s32 %s10, %s17
    %p19 = scmp.eq.s32.totalorder %s18, 0
    %s21 = sadd.s32 %s20, 1
    %s22 = scalar_select %p19, %s20, %s21
    %p25 = pneg %p19
    %p26 = scmp.eq.s32.totalorder %s10, 1
    %p27 = por %p25, %p26
    %p28 = scmp.ne.s32.totalorder %s20, %s23
    %p29 = scmp.eq.s32.totalorder %s10, 0
    %p30 = por %p28, %p29
    %p31 = scmp.ne.s32.totalorder %s20, %s23
    %p32 = scmp.eq.s32.totalorder %s15, 1
    %p33 = por %p31, %p32
    %p34 = scmp.ne.s32.totalorder %s23, %s24
    %p35 = scmp.eq.s32.totalorder %s15, 0
    %p36 = por %p34, %p35
    %p37 = scmp.ne.s32.totalorder %s23, %s24
    %p38 = scmp.eq.s32.totalorder %s16, 1
    %p39 = por %p37, %p38
    %p41 = scmp.ne.s32.totalorder %s24, %s40
    %p42 = scmp.eq.s32.totalorder %s16, 0
    %p43 = por %p41, %p42
    %s45 = sadd.s32 %s44, 1
    %p48 = scmp.eq.s32.totalorder %s10, 1
    %p49 = scmp.ne.s32.totalorder %s44, %s46
    %p50 = scmp.eq.s32.totalorder %s10, 0
    %p51 = por %p49, %p50
    %p52 = scmp.ne.s32.totalorder %s44, %s46
    %p53 = scmp.eq.s32.totalorder %s15, 1
    %p54 = por %p52, %p53
    %p55 = scmp.ne.s32.totalorder %s46, %s47
    %p56 = scmp.eq.s32.totalorder %s15, 0
    %p57 = por %p55, %p56
    %p58 = scmp.ne.s32.totalorder %s46, %s47
    %p59 = scmp.eq.s32.totalorder %s16, 1
    %p60 = por %p58, %p59
    %p62 = scmp.ne.s32.totalorder %s47, %s61
    %p63 = scmp.eq.s32.totalorder %s16, 0
    %p64 = por %p62, %p63
    %s66 = sadd.s32 %s65, 1
    %p69 = scmp.eq.s32.totalorder %s10, 1
    %p70 = scmp.ne.s32.totalorder %s65, %s67
    %p71 = scmp.eq.s32.totalorder %s10, 0
    %p72 = por %p70, %p71
    %p73 = scmp.ne.s32.totalorder %s65, %s67
    %p74 = scmp.eq.s32.totalorder %s15, 1
    %p75 = por %p73, %p74
    %p76 = scmp.ne.s32.totalorder %s67, %s68
    %p77 = scmp.eq.s32.totalorder %s15, 0
    %p78 = por %p76, %p77
    %p79 = scmp.ne.s32.totalorder %s67, %s68
    %p80 = scmp.eq.s32.totalorder %s16, 1
    %p81 = por %p79, %p80
    %p83 = scmp.ne.s32.totalorder %s68, %s82
    %p84 = scmp.eq.s32.totalorder %s16, 0
    %p85 = por %p83, %p84
    %s87 = sadd.s32 %s86, 1
    %p90 = scmp.eq.s32.totalorder %s10, 1
    %p91 = scmp.ne.s32.totalorder %s86, %s88
    %p92 = scmp.eq.s32.totalorder %s10, 0
    %p93 = por %p91, %p92
    %p94 = scmp.ne.s32.totalorder %s86, %s88
    %p95 = scmp.eq.s32.totalorder %s15, 1
    %p96 = por %p94, %p95
    %p97 = scmp.ne.s32.totalorder %s88, %s89
    %p98 = scmp.eq.s32.totalorder %s15, 0
    %p99 = por %p97, %p98
    %p100 = scmp.ne.s32.totalorder %s88, %s89
    %p101 = scmp.eq.s32.totalorder %s16, 1
    %p102 = por %p100, %p101
    %p104 = scmp.ne.s32.totalorder %s89, %s103
    %p105 = scmp.eq.s32.totalorder %s16, 0
    %p106 = por %p104, %p105
    %s107 = ssub.s32 %s10, %s17
    %p108 = scmp.eq.s32.totalorder %s107, 0
    %s110 = sadd.s32 %s109, 1
    %s111 = scalar_select %p108, %s109, %s110
    %p114 = pneg %p108
    %p115 = scmp.eq.s32.totalorder %s10, 1
    %p116 = por %p114, %p115
    %p117 = scmp.ne.s32.totalorder %s109, %s112
    %p118 = scmp.eq.s32.totalorder %s10, 0
    %p119 = por %p117, %p118
    %p120 = scmp.ne.s32.totalorder %s109, %s112
    %p121 = scmp.eq.s32.totalorder %s15, 1
    %p122 = por %p120, %p121
    %p123 = scmp.ne.s32.totalorder %s112, %s113
    %p124 = scmp.eq.s32.totalorder %s15, 0
    %p125 = por %p123, %p124
    %p126 = scmp.ne.s32.totalorder %s112, %s113
    %p127 = scmp.eq.s32.totalorder %s16, 1
    %p128 = por %p126, %p127
    %p130 = scmp.ne.s32.totalorder %s113, %s129
    %p131 = scmp.eq.s32.totalorder %s16, 0
    %p132 = por %p130, %p131
    %p133 = scmp.le.s32.totalorder 1, %s10
    %p134 = scmp.lt.s32.totalorder %s10, 3
    %p135 = pnand %p133, %p134
    %p136 = pneg %p135
    // Predicated region
    $region9: #{mode_decoder_block_forward.2} parent=5 // pred_check
      _
    $region10: #{mode_decoder_block_forward.2} parent=5 // pred_check_branch
      %138 = sbr.rel (%p135) target = $region12
    $region11: #{mode_decoder_block_forward.2} parent=5 // pred_region
      %s139 = ssub.s32 %s10, 1
      // Predicated region
      $region13: #{mode_decoder_block_forward.2} parent=11 // pred_check
        %p140 = pneg %p57
      $region14: #{mode_decoder_block_forward.2} parent=11 // pred_check_branch
        %142 = sbr.rel (%p140) target = $region16
      $region15: #{mode_decoder_block_forward.2} parent=11 // pred_region
        _
      $region16: #{mode_decoder_block_forward.2} parent=11 // pred_fallthru
        _
      // Predicated region
      $region17: #{mode_decoder_block_forward.2} parent=11 // pred_check
        %p143 = pneg %p78
      $region18: #{mode_decoder_block_forward.2} parent=11 // pred_check_branch
        %145 = sbr.rel (%p143) target = $region20
      $region19: #{mode_decoder_block_forward.2} parent=11 // pred_region
        _
      $region20: #{mode_decoder_block_forward.2} parent=11 // pred_fallthru
        _
      // Predicated region
      $region21: #{mode_decoder_block_forward.2} parent=11 // pred_check
        %p146 = pneg %p99
      $region22: #{mode_decoder_block_forward.2} parent=11 // pred_check_branch
        %148 = sbr.rel (%p146) target = $region24
      $region23: #{mode_decoder_block_forward.2} parent=11 // pred_region
        _
      $region24: #{mode_decoder_block_forward.2} parent=11 // pred_fallthru
        _
    $region12: #{mode_decoder_block_forward.2} parent=5 // pred_fallthru
      _
    %p149 = scmp.lt.s32.totalorder %s10, 2
    // Predicated region
    $region25: #{mode_decoder_block_forward.2} parent=5 // pred_check
      %p150 = pneg %p149
    $region26: #{mode_decoder_block_forward.2} parent=5 // pred_check_branch
      %152 = sbr.rel (%p150) target = $region28
    $region27: #{mode_decoder_block_forward.2} parent=5 // pred_region
      // Predicated region
      $region29: #{mode_decoder_block_forward.2} parent=27 // pred_check
        %p153 = pneg %p30
      $region30: #{mode_decoder_block_forward.2} parent=27 // pred_check_branch
        %155 = sbr.rel (%p153) target = $region32
      $region31: #{mode_decoder_block_forward.2} parent=27 // pred_region
        %p156 = scmp.lt.s32.totalorder %s10, 1
        %s157 = scalar_select %p156, %s10, 1
        %s158 = smul.addr %s157, 2
        %s159 = smul.addr %s158, 8
        %s160 = scalar_lea.vmem %s0, %s159
      $region32: #{mode_decoder_block_forward.2} parent=27 // pred_fallthru
        _
    $region28: #{mode_decoder_block_forward.2} parent=5 // pred_fallthru
      _
    %p161 = scmp.le.s32.totalorder 1, %s10
    %p162 = scmp.lt.s32.totalorder %s10, 3
    %p163 = pnand %p161, %p162
    %p164 = pneg %p163
    // Predicated region
    $region33: #{mode_decoder_block_forward.2} parent=5 // pred_check
      _
    $region34: #{mode_decoder_block_forward.2} parent=5 // pred_check_branch
      %166 = sbr.rel (%p163) target = $region36
    $region35: #{mode_decoder_block_forward.2} parent=5 // pred_region
      %s167 = ssub.s32 %s10, 1
      %p168 = scmp.lt.s32.totalorder %s15, 1
      %s169 = scalar_select %p168, %s15, 1
      %s170 = smul.addr %s169, 2
      %s171 = smul.addr %s170, 8
      %s172 = scalar_lea.vmem %s0, %s171
      %p173 = pneg %p36
      %p174 = pneg %p33
      %p175 = pneg %p57
      %p176 = pneg %p54
      %p177 = pneg %p78
      %p178 = pneg %p75
      %p179 = pneg %p99
      %p180 = pneg %p96
      %p181 = pneg %p125
      %p182 = pneg %p122
      %p183 = scmp.lt.s32.totalorder %s15, 1
      %s184 = scalar_select %p183, %s15, 1
      %s185 = smul.addr %s184, 4
      %s186 = smul.addr %s185, 8
      %s187 = scalar_lea.vmem %s4, %s186
      %p188 = scmp.lt.s32.totalorder %s15, 1
      %s189 = scalar_select %p188, %s15, 1
      %s190 = smul.addr %s189, 2
      %s191 = smul.addr %s190, 8
      %s192 = scalar_lea.vmem %s0, %s191
      %p193 = scmp.lt.s32.totalorder %s15, 1
      %s194 = scalar_select %p193, %s15, 1
      %s195 = smul.addr %s194, 4
      %s196 = smul.addr %s195, 8
      %s197 = scalar_lea.vmem %s4, %s196
      %v198 = vld [vmem:[%s192] sm:$0xff]
      %v199 = vld [vmem:[%s192 + $0x8] sm:$0xff]
      %v200 = vld [vmem:[%s1] sm:$0xff]
      %vm201 = vcmask 130048
      %v203 = vsel %vm201, %v200, 0
      %205 = vmatprep.subr.mxu0 0.0
      %206 = vmatpush1.msra.mxu0 %v198
      %207 = vmatprep.subr.mxu0 0.0
      %208 = vmatpush1.msra.mxu0 %v199
      %209 = vmatprep.subr.mxu0 0.0
      %210 = vmatpush1.msra.mxu0 0.0
      %211 = vmatprep.subr.mxu0 0.0
      %212 = vmatpush1.msra.mxu0 0.0
      %213 = vmatprep.subr.mxu0 0.0
      %214 = vmatpush1.msra.mxu0 0.0
      %215 = vmatprep.subr.mxu0 0.0
      %216 = vmatpush1.msra.mxu0 0.0
      %217 = vmatprep.subr.mxu0 0.0
      %218 = vmatpush1.msra.mxu0 0.0
      %219 = vmatprep.subr.mxu0 0.0
      %220 = vmatpush1.msra.mxu0 0.0
      %221 = vmatprep.subr.mxu0 0.0
      %222 = vmatpush1.msra.mxu0 0.0
      %223 = vmatprep.subr.mxu0 0.0
      %224 = vmatpush1.msra.mxu0 0.0
      %225 = vmatprep.subr.mxu0 0.0
      %226 = vmatpush1.msra.mxu0 0.0
      %227 = vmatprep.subr.mxu0 0.0
      %228 = vmatpush1.msra.mxu0 0.0
      %229 = vmatprep.subr.mxu0 0.0
      %230 = vmatpush1.msra.mxu0 0.0
      %231 = vmatprep.subr.mxu0 0.0
      %232 = vmatpush1.msra.mxu0 0.0
      %233 = vmatprep.subr.mxu0 0.0
      %234 = vmatpush1.msra.mxu0 0.0
      %235 = vmatprep.subr.mxu0 0.0
      %236 = vmatpush1.msra.mxu0 0.0
      %237 = vmatprep.subr.mxu0 0.0
      %238 = vmatpush1.msra.mxu0 0.0
      %239 = vmatprep.subr.mxu0 0.0
      %240 = vmatpush1.msra.mxu0 0.0
      %241 = vmatprep.subr.mxu0 0.0
      %242 = vmatpush1.msra.mxu0 0.0
      %243 = vmatprep.subr.mxu0 0.0
      %244 = vmatpush1.msra.mxu0 0.0
      %245 = vmatprep.subr.mxu0 0.0
      %246 = vmatpush1.msra.mxu0 0.0
      %247 = vmatprep.subr.mxu0 0.0
      %248 = vmatpush1.msra.mxu0 0.0
      %249 = vmatprep.subr.mxu0 0.0
      %250 = vmatpush1.msra.mxu0 0.0
      %251 = vmatprep.subr.mxu0 0.0
      %252 = vmatpush1.msra.mxu0 0.0
      %253 = vmatprep.subr.mxu0 0.0
      %254 = vmatpush1.msra.mxu0 0.0
      %255 = vmatprep.subr.mxu0 0.0
      %256 = vmatpush1.msra.mxu0 0.0
      %257 = vmatprep.subr.mxu0 0.0
      %258 = vmatpush1.msra.mxu0 0.0
      %259 = vmatprep.subr.mxu0 0.0
      %260 = vmatpush1.msra.mxu0 0.0
      %261 = vmatprep.subr.mxu0 0.0
      %262 = vmatpush1.msra.mxu0 0.0
      %263 = vmatprep.subr.mxu0 0.0
      %264 = vmatpush1.msra.mxu0 0.0
      %265 = vmatprep.subr.mxu0 0.0
      %266 = vmatpush1.msra.mxu0 0.0
      %267 = vmatprep.subr.mxu0 0.0
      %268 = vmatpush1.msra.mxu0 0.0
      %269 = vmatprep.mubr.f32.mxu0 0.0
      %270 = vmatmul.mubr.f32.gmra.mrb[0].mxu0 %v203
      %v271 = vpop.f32.mrb[0].mxu0
      %v272 = vadd.f32 0.0, %v271
      %v273 = vpop.f32.mrb[0].mxu0
      %274 = vdwg.mxu0
      %s275 = scalar_lea.vmem %s1, 8
      %v276 = vld [vmem:[%s275] sm:$0xff]
      %v278 = vsel %vm201, %v276, 0
      %280 = vmatprep.subr.mxu0 0.0
      %281 = vmatpush1.msra.mxu0 %v198
      %282 = vmatprep.subr.mxu0 0.0
      %283 = vmatpush1.msra.mxu0 %v199
      %284 = vmatprep.subr.mxu0 0.0
      %285 = vmatpush1.msra.mxu0 0.0
      %286 = vmatprep.subr.mxu0 0.0
      %287 = vmatpush1.msra.mxu0 0.0
      %288 = vmatprep.subr.mxu0 0.0
      %289 = vmatpush1.msra.mxu0 0.0
      %290 = vmatprep.subr.mxu0 0.0
      %291 = vmatpush1.msra.mxu0 0.0
      %292 = vmatprep.subr.mxu0 0.0
      %293 = vmatpush1.msra.mxu0 0.0
      %294 = vmatprep.subr.mxu0 0.0
      %295 = vmatpush1.msra.mxu0 0.0
      %296 = vmatprep.subr.mxu0 0.0
      %297 = vmatpush1.msra.mxu0 0.0
      %298 = vmatprep.subr.mxu0 0.0
      %299 = vmatpush1.msra.mxu0 0.0
      %300 = vmatprep.subr.mxu0 0.0
      %301 = vmatpush1.msra.mxu0 0.0
      %302 = vmatprep.subr.mxu0 0.0
      %303 = vmatpush1.msra.mxu0 0.0
      %304 = vmatprep.subr.mxu0 0.0
      %305 = vmatpush1.msra.mxu0 0.0
      %306 = vmatprep.subr.mxu0 0.0
      %307 = vmatpush1.msra.mxu0 0.0
      %308 = vmatprep.subr.mxu0 0.0
      %309 = vmatpush1.msra.mxu0 0.0
      %310 = vmatprep.subr.mxu0 0.0
      %311 = vmatpush1.msra.mxu0 0.0
      %312 = vmatprep.subr.mxu0 0.0
      %313 = vmatpush1.msra.mxu0 0.0
      %314 = vmatprep.subr.mxu0 0.0
      %315 = vmatpush1.msra.mxu0 0.0
      %316 = vmatprep.subr.mxu0 0.0
      %317 = vmatpush1.msra.mxu0 0.0
      %318 = vmatprep.subr.mxu0 0.0
      %319 = vmatpush1.msra.mxu0 0.0
      %320 = vmatprep.subr.mxu0 0.0
      %321 = vmatpush1.msra.mxu0 0.0
      %322 = vmatprep.subr.mxu0 0.0
      %323 = vmatpush1.msra.mxu0 0.0
      %324 = vmatprep.subr.mxu0 0.0
      %325 = vmatpush1.msra.mxu0 0.0
      %326 = vmatprep.subr.mxu0 0.0
      %327 = vmatpush1.msra.mxu0 0.0
      %328 = vmatprep.subr.mxu0 0.0
      %329 = vmatpush1.msra.mxu0 0.0
      %330 = vmatprep.subr.mxu0 0.0
      %331 = vmatpush1.msra.mxu0 0.0
      %332 = vmatprep.subr.mxu0 0.0
      %333 = vmatpush1.msra.mxu0 0.0
      %334 = vmatprep.subr.mxu0 0.0
      %335 = vmatpush1.msra.mxu0 0.0
      %336 = vmatprep.subr.mxu0 0.0
      %337 = vmatpush1.msra.mxu0 0.0
      %338 = vmatprep.subr.mxu0 0.0
      %339 = vmatpush1.msra.mxu0 0.0
      %340 = vmatprep.subr.mxu0 0.0
      %341 = vmatpush1.msra.mxu0 0.0
      %342 = vmatprep.subr.mxu0 0.0
      %343 = vmatpush1.msra.mxu0 0.0
      %344 = vmatprep.mubr.f32.mxu0 0.0
      %345 = vmatmul.mubr.f32.gmra.mrb[0].mxu0 %v278
      %v346 = vpop.f32.mrb[0].mxu0
      %v347 = vadd.f32 0.0, %v346
      %v348 = vpop.f32.mrb[0].mxu0
      %349 = vdwg.mxu0
      %s350 = scalar_lea.vmem %s1, 16
      %v351 = vld [vmem:[%s350] sm:$0xff]
      %v353 = vsel %vm201, %v351, 0
      %355 = vmatprep.subr.mxu0 0.0
      %356 = vmatpush1.msra.mxu0 %v198
      %357 = vmatprep.subr.mxu0 0.0
      %358 = vmatpush1.msra.mxu0 %v199
      %359 = vmatprep.subr.mxu0 0.0
      %360 = vmatpush1.msra.mxu0 0.0
      %361 = vmatprep.subr.mxu0 0.0
      %362 = vmatpush1.msra.mxu0 0.0
      %363 = vmatprep.subr.mxu0 0.0
      %364 = vmatpush1.msra.mxu0 0.0
      %365 = vmatprep.subr.mxu0 0.0
      %366 = vmatpush1.msra.mxu0 0.0
      %367 = vmatprep.subr.mxu0 0.0
      %368 = vmatpush1.msra.mxu0 0.0
      %369 = vmatprep.subr.mxu0 0.0
      %370 = vmatpush1.msra.mxu0 0.0
      %371 = vmatprep.subr.mxu0 0.0
      %372 = vmatpush1.msra.mxu0 0.0
      %373 = vmatprep.subr.mxu0 0.0
      %374 = vmatpush1.msra.mxu0 0.0
      %375 = vmatprep.subr.mxu0 0.0
      %376 = vmatpush1.msra.mxu0 0.0
      %377 = vmatprep.subr.mxu0 0.0
      %378 = vmatpush1.msra.mxu0 0.0
      %379 = vmatprep.subr.mxu0 0.0
      %380 = vmatpush1.msra.mxu0 0.0
      %381 = vmatprep.subr.mxu0 0.0
      %382 = vmatpush1.msra.mxu0 0.0
      %383 = vmatprep.subr.mxu0 0.0
      %384 = vmatpush1.msra.mxu0 0.0
      %385 = vmatprep.subr.mxu0 0.0
      %386 = vmatpush1.msra.mxu0 0.0
      %387 = vmatprep.subr.mxu0 0.0
      %388 = vmatpush1.msra.mxu0 0.0
      %389 = vmatprep.subr.mxu0 0.0
      %390 = vmatpush1.msra.mxu0 0.0
      %391 = vmatprep.subr.mxu0 0.0
      %392 = vmatpush1.msra.mxu0 0.0
      %393 = vmatprep.subr.mxu0 0.0
      %394 = vmatpush1.msra.mxu0 0.0
      %395 = vmatprep.subr.mxu0 0.0
      %396 = vmatpush1.msra.mxu0 0.0
      %397 = vmatprep.subr.mxu0 0.0
      %398 = vmatpush1.msra.mxu0 0.0
      %399 = vmatprep.subr.mxu0 0.0
      %400 = vmatpush1.msra.mxu0 0.0
      %401 = vmatprep.subr.mxu0 0.0
      %402 = vmatpush1.msra.mxu0 0.0
      %403 = vmatprep.subr.mxu0 0.0
      %404 = vmatpush1.msra.mxu0 0.0
      %405 = vmatprep.subr.mxu0 0.0
      %406 = vmatpush1.msra.mxu0 0.0
      %407 = vmatprep.subr.mxu0 0.0
      %408 = vmatpush1.msra.mxu0 0.0
      %409 = vmatprep.subr.mxu0 0.0
      %410 = vmatpush1.msra.mxu0 0.0
      %411 = vmatprep.subr.mxu0 0.0
      %412 = vmatpush1.msra.mxu0 0.0
      %413 = vmatprep.subr.mxu0 0.0
      %414 = vmatpush1.msra.mxu0 0.0
      %415 = vmatprep.subr.mxu0 0.0
      %416 = vmatpush1.msra.mxu0 0.0
      %417 = vmatprep.subr.mxu0 0.0
      %418 = vmatpush1.msra.mxu0 0.0
      %419 = vmatprep.mubr.f32.mxu0 0.0
      %420 = vmatmul.mubr.f32.gmra.mrb[0].mxu0 %v353
      %v421 = vpop.f32.mrb[0].mxu0
      %v422 = vadd.f32 0.0, %v421
      %v423 = vpop.f32.mrb[0].mxu0
      %424 = vdwg.mxu0
      %s425 = scalar_lea.vmem %s1, 24
      %v426 = vld [vmem:[%s425] sm:$0xff]
      %v428 = vsel %vm201, %v426, 0
      %430 = vmatprep.subr.mxu0 0.0
      %431 = vmatpush1.msra.mxu0 %v198
      %432 = vmatprep.subr.mxu0 0.0
      %433 = vmatpush1.msra.mxu0 %v199
      %434 = vmatprep.subr.mxu0 0.0
      %435 = vmatpush1.msra.mxu0 0.0
      %436 = vmatprep.subr.mxu0 0.0
      %437 = vmatpush1.msra.mxu0 0.0
      %438 = vmatprep.subr.mxu0 0.0
      %439 = vmatpush1.msra.mxu0 0.0
      %440 = vmatprep.subr.mxu0 0.0
      %441 = vmatpush1.msra.mxu0 0.0
      %442 = vmatprep.subr.mxu0 0.0
      %443 = vmatpush1.msra.mxu0 0.0
      %444 = vmatprep.subr.mxu0 0.0
      %445 = vmatpush1.msra.mxu0 0.0
      %446 = vmatprep.subr.mxu0 0.0
      %447 = vmatpush1.msra.mxu0 0.0
      %448 = vmatprep.subr.mxu0 0.0
      %449 = vmatpush1.msra.mxu0 0.0
      %450 = vmatprep.subr.mxu0 0.0
      %451 = vmatpush1.msra.mxu0 0.0
      %452 = vmatprep.subr.mxu0 0.0
      %453 = vmatpush1.msra.mxu0 0.0
      %454 = vmatprep.subr.mxu0 0.0
      %455 = vmatpush1.msra.mxu0 0.0
      %456 = vmatprep.subr.mxu0 0.0
      %457 = vmatpush1.msra.mxu0 0.0
      %458 = vmatprep.subr.mxu0 0.0
      %459 = vmatpush1.msra.mxu0 0.0
      %460 = vmatprep.subr.mxu0 0.0
      %461 = vmatpush1.msra.mxu0 0.0
      %462 = vmatprep.subr.mxu0 0.0
      %463 = vmatpush1.msra.mxu0 0.0
      %464 = vmatprep.subr.mxu0 0.0
      %465 = vmatpush1.msra.mxu0 0.0
      %466 = vmatprep.subr.mxu0 0.0
      %467 = vmatpush1.msra.mxu0 0.0
      %468 = vmatprep.subr.mxu0 0.0
      %469 = vmatpush1.msra.mxu0 0.0
      %470 = vmatprep.subr.mxu0 0.0
      %471 = vmatpush1.msra.mxu0 0.0
      %472 = vmatprep.subr.mxu0 0.0
      %473 = vmatpush1.msra.mxu0 0.0
      %474 = vmatprep.subr.mxu0 0.0
      %475 = vmatpush1.msra.mxu0 0.0
      %476 = vmatprep.subr.mxu0 0.0
      %477 = vmatpush1.msra.mxu0 0.0
      %478 = vmatprep.subr.mxu0 0.0
      %479 = vmatpush1.msra.mxu0 0.0
      %480 = vmatprep.subr.mxu0 0.0
      %481 = vmatpush1.msra.mxu0 0.0
      %482 = vmatprep.subr.mxu0 0.0
      %483 = vmatpush1.msra.mxu0 0.0
      %484 = vmatprep.subr.mxu0 0.0
      %485 = vmatpush1.msra.mxu0 0.0
      %486 = vmatprep.subr.mxu0 0.0
      %487 = vmatpush1.msra.mxu0 0.0
      %488 = vmatprep.subr.mxu0 0.0
      %489 = vmatpush1.msra.mxu0 0.0
      %490 = vmatprep.subr.mxu0 0.0
      %491 = vmatpush1.msra.mxu0 0.0
      %492 = vmatprep.subr.mxu0 0.0
      %493 = vmatpush1.msra.mxu0 0.0
      %494 = vmatprep.mubr.f32.mxu0 0.0
      %495 = vmatmul.mubr.f32.gmra.mrb[0].mxu0 %v428
      %v496 = vpop.f32.mrb[0].mxu0
      %v497 = vadd.f32 0.0, %v496
      %v498 = vpop.f32.mrb[0].mxu0
      %499 = vdwg.mxu0
      %v500 = vadd.f32 %v272, %v347
      %v501 = vadd.f32 %v500, %v422
      %v502 = vadd.f32 %v501, %v497
      %vm503 = vcmask 523264
      %v504 = vsel %vm503, %v502, 0.0
      %505 = vadd.xlane.f32.xlu0 %v504
      %v506 = vpop.xlane.xlu0 %505
      %v507 = vrcp.pop 256.0
      %v508 = vmul.f32 %v506, %v507
      %v509 = vsub.f32 %v272, %v508
      %v510 = vmul.f32 %v509, %v509
      %v511 = vsel %vm503, %v510, 0.0
      %512 = vadd.xlane.f32.xlu0 %v511
      %v513 = vpop.xlane.xlu0 %512
      %v514 = vsub.f32 %v347, %v508
      %v515 = vmul.f32 %v514, %v514
      %v516 = vsel %vm503, %v515, 0.0
      %517 = vadd.xlane.f32.xlu0 %v516
      %v518 = vpop.xlane.xlu0 %517
      %v519 = vadd.f32 %v513, %v518
      %v520 = vsub.f32 %v422, %v508
      %v521 = vmul.f32 %v520, %v520
      %v522 = vsel %vm503, %v521, 0.0
      %523 = vadd.xlane.f32.xlu0 %v522
      %v524 = vpop.xlane.xlu0 %523
      %v525 = vadd.f32 %v519, %v524
      %v526 = vsub.f32 %v497, %v508
      %v527 = vmul.f32 %v526, %v526
      %v528 = vsel %vm503, %v527, 0.0
      %529 = vadd.xlane.f32.xlu0 %v528
      %v530 = vpop.xlane.xlu0 %529
      %v531 = vadd.f32 %v525, %v530
      %v532 = vmul.f32 %v531, %v507
      %v533 = vadd.f32 %v532, 1e-05
      %v534 = vrsqrt.pop %v533
      %v535 = vmul.f32 %v509, %v534
      %v536 = vld [vmem:[%s2] sm:$0xff]
      %538 = vset.pattern.permute.xlu0 0
      %539 = vperm.xlu0 %538, %v536
      %v540 = vpop.permute.xlu0 %539
      %v542 = vmul.f32 %v535, %v540
      %v543 = vld [vmem:[%s3] sm:$0xff]
      %545 = vset.pattern.permute.xlu0 0
      %546 = vperm.xlu0 %545, %v543
      %v547 = vpop.permute.xlu0 %546
      %v549 = vadd.f32 %v542, %v547
      %vm550 = vcmp.gt.f32.partialorder %v549, 20.0
      %v551 = vmin.f32 %v549, 20.0
      %v552 = vmul.f32 %v551, 1.442695
      %v553 = vpow.pop %v552
      %v554 = vadd.f32 %v553, 1.0
      %v555 = vlog2.pop %v554
      %v556 = vmul.f32 %v555, 0.6931472
      %v557 = vmul.f32 -0.5, %v553
      %v558 = vadd.f32 %v557, 1.0
      %v559 = vmul.f32 %v558, %v553
      %v560 = vand.u32 2147483647, %v553
      %vm561 = vcmp.lt.f32.partialorder %v560, 0.0004427343
      %v562 = vsel %vm561, %v559, %v556
      %v563 = vsel %vm550, %v549, %v562
      %v564 = vtanh.pop %v563
      %v565 = vmul.f32 %v549, %v564
      %566 = vst.msk [vmem:[%s197] sm:$0xff] %vm503, %v565
      %v567 = vmul.f32 %v514, %v534
      %v568 = vld [vmem:[%s2] sm:$0xff]
      %570 = vset.pattern.permute.xlu0 0
      %571 = vperm.xlu0 %570, %v568
      %v572 = vpop.permute.xlu0 %571
      %v574 = vmul.f32 %v567, %v572
      %v575 = vld [vmem:[%s3] sm:$0xff]
      %577 = vset.pattern.permute.xlu0 0
      %578 = vperm.xlu0 %577, %v575
      %v579 = vpop.permute.xlu0 %578
      %v581 = vadd.f32 %v574, %v579
      %vm582 = vcmp.gt.f32.partialorder %v581, 20.0
      %v583 = vmin.f32 %v581, 20.0
      %v584 = vmul.f32 %v583, 1.442695
      %v585 = vpow.pop %v584
      %v586 = vadd.f32 %v585, 1.0
      %v587 = vlog2.pop %v586
      %v588 = vmul.f32 %v587, 0.6931472
      %v589 = vmul.f32 -0.5, %v585
      %v590 = vadd.f32 %v589, 1.0
      %v591 = vmul.f32 %v590, %v585
      %v592 = vand.u32 2147483647, %v585
      %vm593 = vcmp.lt.f32.partialorder %v592, 0.0004427343
      %v594 = vsel %vm593, %v591, %v588
      %v595 = vsel %vm582, %v581, %v594
      %v596 = vtanh.pop %v595
      %v597 = vmul.f32 %v581, %v596
      %s598 = scalar_lea.vmem %s197, 8
      %599 = vst.msk [vmem:[%s598] sm:$0xff] %vm503, %v597
      %v600 = vmul.f32 %v520, %v534
      %v601 = vld [vmem:[%s2] sm:$0xff]
      %603 = vset.pattern.permute.xlu0 0
      %604 = vperm.xlu0 %603, %v601
      %v605 = vpop.permute.xlu0 %604
      %v607 = vmul.f32 %v600, %v605
      %v608 = vld [vmem:[%s3] sm:$0xff]
      %610 = vset.pattern.permute.xlu0 0
      %611 = vperm.xlu0 %610, %v608
      %v612 = vpop.permute.xlu0 %611
      %v614 = vadd.f32 %v607, %v612
      %vm615 = vcmp.gt.f32.partialorder %v614, 20.0
      %v616 = vmin.f32 %v614, 20.0
      %v617 = vmul.f32 %v616, 1.442695
      %v618 = vpow.pop %v617
      %v619 = vadd.f32 %v618, 1.0
      %v620 = vlog2.pop %v619
      %v621 = vmul.f32 %v620, 0.6931472
      %v622 = vmul.f32 -0.5, %v618
      %v623 = vadd.f32 %v622, 1.0
      %v624 = vmul.f32 %v623, %v618
      %v625 = vand.u32 2147483647, %v618
      %vm626 = vcmp.lt.f32.partialorder %v625, 0.0004427343
      %v627 = vsel %vm626, %v624, %v621
      %v628 = vsel %vm615, %v614, %v627
      %v629 = vtanh.pop %v628
      %v630 = vmul.f32 %v614, %v629
      %s631 = scalar_lea.vmem %s197, 16
      %632 = vst.msk [vmem:[%s631] sm:$0xff] %vm503, %v630
      %v633 = vmul.f32 %v526, %v534
      %v634 = vld [vmem:[%s2] sm:$0xff]
      %636 = vset.pattern.permute.xlu0 0
      %637 = vperm.xlu0 %636, %v634
      %v638 = vpop.permute.xlu0 %637
      %v640 = vmul.f32 %v633, %v638
      %v641 = vld [vmem:[%s3] sm:$0xff]
      %643 = vset.pattern.permute.xlu0 0
      %644 = vperm.xlu0 %643, %v641
      %v645 = vpop.permute.xlu0 %644
      %v647 = vadd.f32 %v640, %v645
      %vm648 = vcmp.gt.f32.partialorder %v647, 20.0
      %v649 = vmin.f32 %v647, 20.0
      %v650 = vmul.f32 %v649, 1.442695
      %v651 = vpow.pop %v650
      %v652 = vadd.f32 %v651, 1.0
      %v653 = vlog2.pop %v652
      %v654 = vmul.f32 %v653, 0.6931472
      %v655 = vmul.f32 -0.5, %v651
      %v656 = vadd.f32 %v655, 1.0
      %v657 = vmul.f32 %v656, %v651
      %v658 = vand.u32 2147483647, %v651
      %vm659 = vcmp.lt.f32.partialorder %v658, 0.0004427343
      %v660 = vsel %vm659, %v657, %v654
      %v661 = vsel %vm648, %v647, %v660
      %v662 = vtanh.pop %v661
      %v663 = vmul.f32 %v647, %v662
      %s664 = scalar_lea.vmem %s197, 24
      %665 = vst.msk [vmem:[%s664] sm:$0xff] %vm503, %v663
      %p666 = scmp.lt.s32.totalorder %s15, 1
      %s667 = scalar_select %p666, %s15, 1
      %s668 = smul.addr %s667, 4
      %s669 = smul.addr %s668, 8
      %s670 = scalar_lea.vmem %s4, %s669
      // Predicated region
      $region37: #{mode_decoder_block_forward.2} parent=35 // pred_check
        %p671 = pneg %p122
      $region38: #{mode_decoder_block_forward.2} parent=35 // pred_check_branch
        %673 = sbr.rel (%p671) target = $region40
      $region39: #{mode_decoder_block_forward.2} parent=35 // pred_region
        _
      $region40: #{mode_decoder_block_forward.2} parent=35 // pred_fallthru
        _
    $region36: #{mode_decoder_block_forward.2} parent=5 // pred_fallthru
      _
    %p674 = scmp.le.s32.totalorder 2, %s10
    // Predicated region
    $region41: #{mode_decoder_block_forward.2} parent=5 // pred_check
      %p675 = pneg %p674
    $region42: #{mode_decoder_block_forward.2} parent=5 // pred_check_branch
      %677 = sbr.rel (%p675) target = $region44
    $region43: #{mode_decoder_block_forward.2} parent=5 // pred_region
      %s678 = ssub.s32 %s10, 2
      // Predicated region
      $region45: #{mode_decoder_block_forward.2} parent=43 // pred_check
        %p679 = pneg %p128
      $region46: #{mode_decoder_block_forward.2} parent=43 // pred_check_branch
        %681 = sbr.rel (%p679) target = $region48
      $region47: #{mode_decoder_block_forward.2} parent=43 // pred_region
        %p682 = scmp.lt.s32.totalorder %s16, 1
        %s683 = scalar_select %p682, %s16, 1
        %s684 = smul.addr %s683, 4
        %s685 = smul.addr %s684, 8
        %s686 = scalar_lea.vmem %s4, %s685
      $region48: #{mode_decoder_block_forward.2} parent=43 // pred_fallthru
        _
    $region44: #{mode_decoder_block_forward.2} parent=5 // pred_fallthru
      _
  $region6: #{mode_decoder_block_forward.2} parent=0 // loop_footer
    %s14 = sadd.s32 1, %s10
  $region7: #{mode_decoder_block_forward.2} parent=0 // loop_footer_branch
    %9 = sbr.rel target = $region3
  $region8: #{mode_decoder_block_forward.2} parent=0 // loop_exit
    _

// kernel: mode_decoder_block_forward.3
$region0: #{mode_decoder_block_forward.3}
  #allocation0 [shape = 'u32[]', space=smem, size = 0x4, offset = 0x4, fixed_abs, tag = 'smem constant byte address 0x4 - core index']
  #allocation1 [shape = 'u32[144,128]{1,0:T(1,128)}', space=vmem, size = 0x12000, scoped, tag = 'internal scratch']
  #allocation2 [shape = 'bf16[400,400]{1,0:T(16,128)(2,1)}', space=vmem, size = 0x64000, scoped, tag = 'scratch operand']
  #allocation3 [shape = 'f32[200,400]{1,0:T(8,128)}', space=vmem, size = 0x64000, scoped, tag = 'scratch operand']
  #allocation4 [shape = 'f32[8,656]{1,0:T(8,128)}', space=vmem, size = 0x6000, scoped, tag = 'scratch operand']
  %s0 = inlined_call_operand.vmem [shape: bf16[2,16,656], index: 0, kind: input, shape index: {}]
  %s1 = inlined_call_operand.vmem [shape: bf16[2,8,400], index: 1, kind: input, shape index: {}]
  %s2 = inlined_call_operand.vmem [shape: f32[2,8,200], index: 2, kind: input, shape index: {}]
  %s3 = inlined_call_operand.vmem [shape: f32[8,1], index: 3, kind: input, shape index: {}, may-alias: {3,5}]
  %s4 = inlined_call_operand.vmem [shape: f32[8,1], index: 4, kind: input, shape index: {}, may-alias: {4,6}]
  %s5 = inlined_call_operand.vmem [shape: f32[8,1], index: 5, kind: input, shape index: {}, may-alias: {3,5}]
  %s6 = inlined_call_operand.vmem [shape: f32[8,1], index: 6, kind: input, shape index: {}, may-alias: {4,6}]
  %s7 = inlined_call_operand.vmem [shape: f32[1,400], index: 7, kind: input, shape index: {}]
  %s8 = inlined_call_operand.vmem [shape: f32[2,8,400], index: 8, kind: output, shape index: {}]
  %s9 = sld [smem:[#allocation0]]
  $region65: #{mode_decoder_block_forward.3} parent=0
    _
  %s11 = ssub.s32 1, %s9
  %s12 = scalar_select 0, %s11, %s9
  loop: start=0, step=1, limit=4
  $region2: #{mode_decoder_block_forward.3} parent=0 // loop_pre_header
    _
  $region3: #{mode_decoder_block_forward.3} parent=0 // loop_header
    %s14 = sphi 0, %s18
    %p15 = scmp.ge.s32.totalorder %s14, 4
    %s24 = sphi 0, %s26
    %s27 = sphi 0, %s24
    %s28 = sphi 0, %s27
    %s44 = sphi 0, %s28
    %s50 = sphi 0, %s52
    %s53 = sphi 0, %s50
    %s54 = sphi 0, %s53
    %s70 = sphi 0, %s54
    %s76 = sphi 0, %s78
    %s79 = sphi 0, %s76
    %s80 = sphi 0, %s79
    %s96 = sphi 0, %s80
    %s100 = sphi 0, %s100
    %s102 = sphi 0, %s100
    %s103 = sphi 0, %s102
    %s117 = sphi 0, %s103
    %s121 = sphi 0, %s121
    %s123 = sphi 0, %s121
    %s124 = sphi 0, %s123
    %s138 = sphi 0, %s124
    %s142 = sphi 0, %s142
    %s144 = sphi 0, %s142
    %s145 = sphi 0, %s144
    %s159 = sphi 0, %s145
    %s163 = sphi 0, %s163
    %s165 = sphi 0, %s163
    %s166 = sphi 0, %s165
    %s180 = sphi 0, %s166
    %s184 = sphi 0, %s184
    %s186 = sphi 0, %s184
    %s187 = sphi 0, %s186
    %s201 = sphi 0, %s187
    %s207 = sphi 0, %s209
    %s210 = sphi 0, %s207
    %s211 = sphi 0, %s210
    %s227 = sphi 0, %s211
  $region4: #{mode_decoder_block_forward.3} parent=0 // loop_header_branch
    %17 = sbr.rel (%p15) target = $region8
  $region5: #{mode_decoder_block_forward.3} parent=0 // loop_body
    %s19 = ssub.s32 %s14, 1
    %s20 = ssub.s32 %s14, 2
    %s21 = sadd.s32 %s14, 1
    %s22 = ssub.s32 %s14, %s21
    %p23 = scmp.eq.s32.totalorder %s22, 0
    %s25 = sadd.s32 %s24, 1
    %s26 = scalar_select %p23, %s24, %s25
    %p29 = pneg %p23
    %p30 = scmp.eq.s32.totalorder %s14, 1
    %p31 = por %p29, %p30
    %p32 = scmp.ne.s32.totalorder %s24, %s27
    %p33 = scmp.eq.s32.totalorder %s14, 0
    %p34 = por %p32, %p33
    %p35 = scmp.ne.s32.totalorder %s24, %s27
    %p36 = scmp.eq.s32.totalorder %s19, 1
    %p37 = por %p35, %p36
    %p38 = scmp.ne.s32.totalorder %s27, %s28
    %p39 = scmp.eq.s32.totalorder %s19, 0
    %p40 = por %p38, %p39
    %p41 = scmp.ne.s32.totalorder %s27, %s28
    %p42 = scmp.eq.s32.totalorder %s20, 1
    %p43 = por %p41, %p42
    %p45 = scmp.ne.s32.totalorder %s28, %s44
    %p46 = scmp.eq.s32.totalorder %s20, 0
    %p47 = por %p45, %p46
    %s48 = ssub.s32 %s14, %s21
    %p49 = scmp.eq.s32.totalorder %s48, 0
    %s51 = sadd.s32 %s50, 1
    %s52 = scalar_select %p49, %s50, %s51
    %p55 = pneg %p49
    %p56 = scmp.eq.s32.totalorder %s14, 1
    %p57 = por %p55, %p56
    %p58 = scmp.ne.s32.totalorder %s50, %s53
    %p59 = scmp.eq.s32.totalorder %s14, 0
    %p60 = por %p58, %p59
    %p61 = scmp.ne.s32.totalorder %s50, %s53
    %p62 = scmp.eq.s32.totalorder %s19, 1
    %p63 = por %p61, %p62
    %p64 = scmp.ne.s32.totalorder %s53, %s54
    %p65 = scmp.eq.s32.totalorder %s19, 0
    %p66 = por %p64, %p65
    %p67 = scmp.ne.s32.totalorder %s53, %s54
    %p68 = scmp.eq.s32.totalorder %s20, 1
    %p69 = por %p67, %p68
    %p71 = scmp.ne.s32.totalorder %s54, %s70
    %p72 = scmp.eq.s32.totalorder %s20, 0
    %p73 = por %p71, %p72
    %s74 = ssub.s32 %s14, %s21
    %p75 = scmp.eq.s32.totalorder %s74, 0
    %s77 = sadd.s32 %s76, 1
    %s78 = scalar_select %p75, %s76, %s77
    %p81 = pneg %p75
    %p82 = scmp.eq.s32.totalorder %s14, 1
    %p83 = por %p81, %p82
    %p84 = scmp.ne.s32.totalorder %s76, %s79
    %p85 = scmp.eq.s32.totalorder %s14, 0
    %p86 = por %p84, %p85
    %p87 = scmp.ne.s32.totalorder %s76, %s79
    %p88 = scmp.eq.s32.totalorder %s19, 1
    %p89 = por %p87, %p88
    %p90 = scmp.ne.s32.totalorder %s79, %s80
    %p91 = scmp.eq.s32.totalorder %s19, 0
    %p92 = por %p90, %p91
    %p93 = scmp.ne.s32.totalorder %s79, %s80
    %p94 = scmp.eq.s32.totalorder %s20, 1
    %p95 = por %p93, %p94
    %p97 = scmp.ne.s32.totalorder %s80, %s96
    %p98 = scmp.eq.s32.totalorder %s20, 0
    %p99 = por %p97, %p98
    %s101 = sadd.s32 %s100, 1
    %p104 = scmp.eq.s32.totalorder %s14, 1
    %p105 = scmp.ne.s32.totalorder %s100, %s102
    %p106 = scmp.eq.s32.totalorder %s14, 0
    %p107 = por %p105, %p106
    %p108 = scmp.ne.s32.totalorder %s100, %s102
    %p109 = scmp.eq.s32.totalorder %s19, 1
    %p110 = por %p108, %p109
    %p111 = scmp.ne.s32.totalorder %s102, %s103
    %p112 = scmp.eq.s32.totalorder %s19, 0
    %p113 = por %p111, %p112
    %p114 = scmp.ne.s32.totalorder %s102, %s103
    %p115 = scmp.eq.s32.totalorder %s20, 1
    %p116 = por %p114, %p115
    %p118 = scmp.ne.s32.totalorder %s103, %s117
    %p119 = scmp.eq.s32.totalorder %s20, 0
    %p120 = por %p118, %p119
    %s122 = sadd.s32 %s121, 1
    %p125 = scmp.eq.s32.totalorder %s14, 1
    %p126 = scmp.ne.s32.totalorder %s121, %s123
    %p127 = scmp.eq.s32.totalorder %s14, 0
    %p128 = por %p126, %p127
    %p129 = scmp.ne.s32.totalorder %s121, %s123
    %p130 = scmp.eq.s32.totalorder %s19, 1
    %p131 = por %p129, %p130
    %p132 = scmp.ne.s32.totalorder %s123, %s124
    %p133 = scmp.eq.s32.totalorder %s19, 0
    %p134 = por %p132, %p133
    %p135 = scmp.ne.s32.totalorder %s123, %s124
    %p136 = scmp.eq.s32.totalorder %s20, 1
    %p137 = por %p135, %p136
    %p139 = scmp.ne.s32.totalorder %s124, %s138
    %p140 = scmp.eq.s32.totalorder %s20, 0
    %p141 = por %p139, %p140
    %s143 = sadd.s32 %s142, 1
    %p146 = scmp.eq.s32.totalorder %s14, 1
    %p147 = scmp.ne.s32.totalorder %s142, %s144
    %p148 = scmp.eq.s32.totalorder %s14, 0
    %p149 = por %p147, %p148
    %p150 = scmp.ne.s32.totalorder %s142, %s144
    %p151 = scmp.eq.s32.totalorder %s19, 1
    %p152 = por %p150, %p151
    %p153 = scmp.ne.s32.totalorder %s144, %s145
    %p154 = scmp.eq.s32.totalorder %s19, 0
    %p155 = por %p153, %p154
    %p156 = scmp.ne.s32.totalorder %s144, %s145
    %p157 = scmp.eq.s32.totalorder %s20, 1
    %p158 = por %p156, %p157
    %p160 = scmp.ne.s32.totalorder %s145, %s159
    %p161 = scmp.eq.s32.totalorder %s20, 0
    %p162 = por %p160, %p161
    %s164 = sadd.s32 %s163, 1
    %p167 = scmp.eq.s32.totalorder %s14, 1
    %p168 = scmp.ne.s32.totalorder %s163, %s165
    %p169 = scmp.eq.s32.totalorder %s14, 0
    %p170 = por %p168, %p169
    %p171 = scmp.ne.s32.totalorder %s163, %s165
    %p172 = scmp.eq.s32.totalorder %s19, 1
    %p173 = por %p171, %p172
    %p174 = scmp.ne.s32.totalorder %s165, %s166
    %p175 = scmp.eq.s32.totalorder %s19, 0
    %p176 = por %p174, %p175
    %p177 = scmp.ne.s32.totalorder %s165, %s166
    %p178 = scmp.eq.s32.totalorder %s20, 1
    %p179 = por %p177, %p178
    %p181 = scmp.ne.s32.totalorder %s166, %s180
    %p182 = scmp.eq.s32.totalorder %s20, 0
    %p183 = por %p181, %p182
    %s185 = sadd.s32 %s184, 1
    %p188 = scmp.eq.s32.totalorder %s14, 1
    %p189 = scmp.ne.s32.totalorder %s184, %s186
    %p190 = scmp.eq.s32.totalorder %s14, 0
    %p191 = por %p189, %p190
    %p192 = scmp.ne.s32.totalorder %s184, %s186
    %p193 = scmp.eq.s32.totalorder %s19, 1
    %p194 = por %p192, %p193
    %p195 = scmp.ne.s32.totalorder %s186, %s187
    %p196 = scmp.eq.s32.totalorder %s19, 0
    %p197 = por %p195, %p196
    %p198 = scmp.ne.s32.totalorder %s186, %s187
    %p199 = scmp.eq.s32.totalorder %s20, 1
    %p200 = por %p198, %p199
    %p202 = scmp.ne.s32.totalorder %s187, %s201
    %p203 = scmp.eq.s32.totalorder %s20, 0
    %p204 = por %p202, %p203
    %s205 = ssub.s32 %s14, %s21
    %p206 = scmp.eq.s32.totalorder %s205, 0
    %s208 = sadd.s32 %s207, 1
    %s209 = scalar_select %p206, %s207, %s208
    %p212 = pneg %p206
    %p213 = scmp.eq.s32.totalorder %s14, 1
    %p214 = por %p212, %p213
    %p215 = scmp.ne.s32.totalorder %s207, %s210
    %p216 = scmp.eq.s32.totalorder %s14, 0
    %p217 = por %p215, %p216
    %p218 = scmp.ne.s32.totalorder %s207, %s210
    %p219 = scmp.eq.s32.totalorder %s19, 1
    %p220 = por %p218, %p219
    %p221 = scmp.ne.s32.totalorder %s210, %s211
    %p222 = scmp.eq.s32.totalorder %s19, 0
    %p223 = por %p221, %p222
    %p224 = scmp.ne.s32.totalorder %s210, %s211
    %p225 = scmp.eq.s32.totalorder %s20, 1
    %p226 = por %p224, %p225
    %p228 = scmp.ne.s32.totalorder %s211, %s227
    %p229 = scmp.eq.s32.totalorder %s20, 0
    %p230 = por %p228, %p229
    %p231 = scmp.le.s32.totalorder 1, %s14
    %p232 = scmp.lt.s32.totalorder %s14, 3
    %p233 = pnand %p231, %p232
    %p234 = pneg %p233
    // Predicated region
    $region9: #{mode_decoder_block_forward.3} parent=5 // pred_check
      _
    $region10: #{mode_decoder_block_forward.3} parent=5 // pred_check_branch
      %236 = sbr.rel (%p233) target = $region12
    $region11: #{mode_decoder_block_forward.3} parent=5 // pred_region
      %s237 = ssub.s32 %s14, 1
      // Predicated region
      $region13: #{mode_decoder_block_forward.3} parent=11 // pred_check
        %p238 = pneg %p113
      $region14: #{mode_decoder_block_forward.3} parent=11 // pred_check_branch
        %240 = sbr.rel (%p238) target = $region16
      $region15: #{mode_decoder_block_forward.3} parent=11 // pred_region
        _
      $region16: #{mode_decoder_block_forward.3} parent=11 // pred_fallthru
        _
      // Predicated region
      $region17: #{mode_decoder_block_forward.3} parent=11 // pred_check
        %p241 = pneg %p134
      $region18: #{mode_decoder_block_forward.3} parent=11 // pred_check_branch
        %243 = sbr.rel (%p241) target = $region20
      $region19: #{mode_decoder_block_forward.3} parent=11 // pred_region
        _
      $region20: #{mode_decoder_block_forward.3} parent=11 // pred_fallthru
        _
      // Predicated region
      $region21: #{mode_decoder_block_forward.3} parent=11 // pred_check
        %p244 = pneg %p155
      $region22: #{mode_decoder_block_forward.3} parent=11 // pred_check_branch
        %246 = sbr.rel (%p244) target = $region24
      $region23: #{mode_decoder_block_forward.3} parent=11 // pred_region
        _
      $region24: #{mode_decoder_block_forward.3} parent=11 // pred_fallthru
        _
      // Predicated region
      $region25: #{mode_decoder_block_forward.3} parent=11 // pred_check
        %p247 = pneg %p176
      $region26: #{mode_decoder_block_forward.3} parent=11 // pred_check_branch
        %249 = sbr.rel (%p247) target = $region28
      $region27: #{mode_decoder_block_forward.3} parent=11 // pred_region
        _
      $region28: #{mode_decoder_block_forward.3} parent=11 // pred_fallthru
        _
      // Predicated region
      $region29: #{mode_decoder_block_forward.3} parent=11 // pred_check
        %p250 = pneg %p197
      $region30: #{mode_decoder_block_forward.3} parent=11 // pred_check_branch
        %252 = sbr.rel (%p250) target = $region32
      $region31: #{mode_decoder_block_forward.3} parent=11 // pred_region
        _
      $region32: #{mode_decoder_block_forward.3} parent=11 // pred_fallthru
        _
    $region12: #{mode_decoder_block_forward.3} parent=5 // pred_fallthru
      _
    %p253 = scmp.lt.s32.totalorder %s14, 2
    // Predicated region
    $region33: #{mode_decoder_block_forward.3} parent=5 // pred_check
      %p254 = pneg %p253
    $region34: #{mode_decoder_block_forward.3} parent=5 // pred_check_branch
      %256 = sbr.rel (%p254) target = $region36
    $region35: #{mode_decoder_block_forward.3} parent=5 // pred_region
      // Predicated region
      $region37: #{mode_decoder_block_forward.3} parent=35 // pred_check
        %p257 = pneg %p34
      $region38: #{mode_decoder_block_forward.3} parent=35 // pred_check_branch
        %259 = sbr.rel (%p257) target = $region40
      $region39: #{mode_decoder_block_forward.3} parent=35 // pred_region
        %p260 = scmp.lt.s32.totalorder %s14, 1
        %s261 = scalar_select %p260, %s14, 1
        %s262 = smul.addr %s261, 12
        %s263 = smul.addr %s262, 4
        %s264 = scalar_lea.vmem %s0, %s263
      $region40: #{mode_decoder_block_forward.3} parent=35 // pred_fallthru
        _
      // Predicated region
      $region41: #{mode_decoder_block_forward.3} parent=35 // pred_check
        %p265 = pneg %p60
      $region42: #{mode_decoder_block_forward.3} parent=35 // pred_check_branch
        %267 = sbr.rel (%p265) target = $region44
      $region43: #{mode_decoder_block_forward.3} parent=35 // pred_region
        %p268 = scmp.lt.s32.totalorder %s14, 1
        %s269 = scalar_select %p268, %s14, 1
        %s270 = smul.addr %s269, 4
        %s271 = smul.addr %s270, 4
        %s272 = scalar_lea.vmem %s1, %s271
      $region44: #{mode_decoder_block_forward.3} parent=35 // pred_fallthru
        _
      // Predicated region
      $region45: #{mode_decoder_block_forward.3} parent=35 // pred_check
        %p273 = pneg %p86
      $region46: #{mode_decoder_block_forward.3} parent=35 // pred_check_branch
        %275 = sbr.rel (%p273) target = $region48
      $region47: #{mode_decoder_block_forward.3} parent=35 // pred_region
        %p276 = scmp.lt.s32.totalorder %s14, 1
        %s277 = scalar_select %p276, %s14, 1
        %s278 = smul.addr %s277, 2
        %s279 = smul.addr %s278, 8
        %s280 = scalar_lea.vmem %s2, %s279
      $region48: #{mode_decoder_block_forward.3} parent=35 // pred_fallthru
        _
    $region36: #{mode_decoder_block_forward.3} parent=5 // pred_fallthru
      _
    %p281 = scmp.le.s32.totalorder 1, %s14
    %p282 = scmp.lt.s32.totalorder %s14, 3
    %p283 = pnand %p281, %p282
    %p284 = pneg %p283
    // Predicated region
    $region49: #{mode_decoder_block_forward.3} parent=5 // pred_check
      _
    $region50: #{mode_decoder_block_forward.3} parent=5 // pred_check_branch
      %286 = sbr.rel (%p283) target = $region52
    $region51: #{mode_decoder_block_forward.3} parent=5 // pred_region
      %s287 = ssub.s32 %s14, 1
      %p288 = scmp.lt.s32.totalorder %s19, 1
      %s289 = scalar_select %p288, %s19, 1
      %s290 = smul.addr %s289, 12
      %s291 = smul.addr %s290, 4
      %s292 = scalar_lea.vmem %s0, %s291
      %p293 = pneg %p40
      %p294 = pneg %p37
      %p295 = scmp.lt.s32.totalorder %s19, 1
      %s296 = scalar_select %p295, %s19, 1
      %s297 = smul.addr %s296, 4
      %s298 = smul.addr %s297, 4
      %s299 = scalar_lea.vmem %s1, %s298
      %p300 = pneg %p66
      %p301 = pneg %p63
      %p302 = scmp.lt.s32.totalorder %s19, 1
      %s303 = scalar_select %p302, %s19, 1
      %s304 = smul.addr %s303, 2
      %s305 = smul.addr %s304, 8
      %s306 = scalar_lea.vmem %s2, %s305
      %p307 = pneg %p92
      %p308 = pneg %p89
      %p309 = pneg %p113
      %p310 = pneg %p110
      %p311 = pneg %p134
      %p312 = pneg %p131
      %p313 = pneg %p155
      %p314 = pneg %p152
      %p315 = pneg %p176
      %p316 = pneg %p173
      %p317 = pneg %p197
      %p318 = pneg %p194
      %p319 = pneg %p223
      %p320 = pneg %p220
      %p321 = scmp.lt.s32.totalorder %s19, 1
      %s322 = scalar_select %p321, %s19, 1
      %s323 = smul.addr %s322, 4
      %s324 = smul.addr %s323, 8
      %s325 = scalar_lea.vmem %s8, %s324
      %p326 = scmp.lt.s32.totalorder %s19, 1
      %s327 = scalar_select %p326, %s19, 1
      %s328 = smul.addr %s327, 12
      %s329 = smul.addr %s328, 4
      %s330 = scalar_lea.vmem %s0, %s329
      %p331 = scmp.lt.s32.totalorder %s19, 1
      %s332 = scalar_select %p331, %s19, 1
      %s333 = smul.addr %s332, 4
      %s334 = smul.addr %s333, 4
      %s335 = scalar_lea.vmem %s1, %s334
      %p336 = scmp.lt.s32.totalorder %s19, 1
      %s337 = scalar_select %p336, %s19, 1
      %s338 = smul.addr %s337, 2
      %s339 = smul.addr %s338, 8
      %s340 = scalar_lea.vmem %s2, %s339
      %p341 = scmp.lt.s32.totalorder %s19, 1
      %s342 = scalar_select %p341, %s19, 1
      %s343 = smul.addr %s342, 4
      %s344 = smul.addr %s343, 8
      %s345 = scalar_lea.vmem %s8, %s344
      %v347 = vld [vmem:[%s7] sm:$0xf]
      %v348 = vld [vmem:[%s330] sm:$0xff]
      %v349 = vld [vmem:[%s330 + $0x8] sm:$0xff]
      %v350 = vld [vmem:[%s330 + $0x10] sm:$0xff]
      %v351 = vld [vmem:[%s330 + $0x18] sm:$0xff]
      %v352 = vld [vmem:[%s330 + $0x20] sm:$0xff]
      %v353 = vld [vmem:[%s330 + $0x28] sm:$0xff]
      %v354 = vunpack.c.l.bf16 %v348
      %v355 = vunpack.c.h.bf16 %v348
      %v356 = vunpack.c.l.bf16 %v349
      %v357 = vunpack.c.h.bf16 %v349
      %v358 = vunpack.c.l.bf16 %v350
      %v359 = vunpack.c.l.bf16 %v351
      %v360 = vunpack.c.h.bf16 %v351
      %v361 = vunpack.c.l.bf16 %v352
      %v362 = vunpack.c.h.bf16 %v352
      %v363 = vunpack.c.l.bf16 %v353
      %v364 = vpack.c.bf16 %v359, %v354
      %v365 = vpack.c.bf16 %v360, %v355
      %v366 = vpack.c.bf16 %v361, %v356
      %v367 = vpack.c.bf16 %v362, %v357
      %372 = vrot.lane.b32.xlu0 %v364, 42
      %v373 = vpop.permute.xlu0 %372
      %374 = vrot.lane.b32.xlu0 %v365, 42
      %v375 = vpop.permute.xlu0 %374
      %376 = vrot.lane.b32.xlu0 %v366, 42
      %v377 = vpop.permute.xlu0 %376
      %378 = vrot.lane.b32.xlu0 %v367, 42
      %v379 = vpop.permute.xlu0 %378
      %vm380 = vcmask 343040
      %v381 = vsel %vm380, %v373, %v375
      %v382 = vsel %vm380, %v375, %v377
      %v383 = vsel %vm380, %v377, %v379
      %388 = vst [vmem:[#allocation2] sm:$0xff] %v381
      %389 = vst [vmem:[#allocation2 + $0x8] sm:$0xff] %v382
      %390 = vst [vmem:[#allocation2 + $0x10] sm:$0xff] %v383
      %vm391 = vcmask 130048
      %392 = vst.msk [vmem:[#allocation2 + $0x18] sm:$0xff] %vm391, %v379
      %393 = vrot.lane.b32.xlu0 %v364, 41
      %v394 = vpop.permute.xlu0 %393
      %395 = vrot.lane.b32.xlu0 %v365, 41
      %v396 = vpop.permute.xlu0 %395
      %397 = vrot.lane.b32.xlu0 %v366, 41
      %v398 = vpop.permute.xlu0 %397
      %399 = vrot.lane.b32.xlu0 %v367, 41
      %v400 = vpop.permute.xlu0 %399
      %vm401 = vcmask 334848
      %v402 = vsel %vm401, %v394, %v396
      %v403 = vsel %vm401, %v396, %v398
      %v404 = vsel %vm401, %v398, %v400
      %409 = vst [vmem:[#allocation2 + $0x20] sm:$0xff] %v402
      %410 = vst [vmem:[#allocation2 + $0x28] sm:$0xff] %v403
      %411 = vst [vmem:[#allocation2 + $0x30] sm:$0xff] %v404
      %412 = vst.msk [vmem:[#allocation2 + $0x38] sm:$0xff] %vm391, %v400
      %413 = vrot.lane.b32.xlu0 %v364, 40
      %v414 = vpop.permute.xlu0 %413
      %415 = vrot.lane.b32.xlu0 %v365, 40
      %v416 = vpop.permute.xlu0 %415
      %417 = vrot.lane.b32.xlu0 %v366, 40
      %v418 = vpop.permute.xlu0 %417
      %419 = vrot.lane.b32.xlu0 %v367, 40
      %v420 = vpop.permute.xlu0 %419
      %vm421 = vcmask 326656
      %v422 = vsel %vm421, %v414, %v416
      %v423 = vsel %vm421, %v416, %v418
      %v424 = vsel %vm421, %v418, %v420
      %429 = vst [vmem:[#allocation2 + $0x40] sm:$0xff] %v422
      %430 = vst [vmem:[#allocation2 + $0x48] sm:$0xff] %v423
      %431 = vst [vmem:[#allocation2 + $0x50] sm:$0xff] %v424
      %432 = vst.msk [vmem:[#allocation2 + $0x58] sm:$0xff] %vm391, %v420
      %433 = vrot.lane.b32.xlu0 %v364, 39
      %v434 = vpop.permute.xlu0 %433
      %435 = vrot.lane.b32.xlu0 %v365, 39
      %v436 = vpop.permute.xlu0 %435
      %437 = vrot.lane.b32.xlu0 %v366, 39
      %v438 = vpop.permute.xlu0 %437
      %439 = vrot.lane.b32.xlu0 %v367, 39
      %v440 = vpop.permute.xlu0 %439
      %vm441 = vcmask 318464
      %v442 = vsel %vm441, %v434, %v436
      %v443 = vsel %vm441, %v436, %v438
      %v444 = vsel %vm441, %v438, %v440
      %449 = vst [vmem:[#allocation2 + $0x60] sm:$0xff] %v442
      %450 = vst [vmem:[#allocation2 + $0x68] sm:$0xff] %v443
      %451 = vst [vmem:[#allocation2 + $0x70] sm:$0xff] %v444
      %452 = vst.msk [vmem:[#allocation2 + $0x78] sm:$0xff] %vm391, %v440
      %453 = vrot.lane.b32.xlu0 %v364, 38
      %v454 = vpop.permute.xlu0 %453
      %455 = vrot.lane.b32.xlu0 %v365, 38
      %v456 = vpop.permute.xlu0 %455
      %457 = vrot.lane.b32.xlu0 %v366, 38
      %v458 = vpop.permute.xlu0 %457
      %459 = vrot.lane.b32.xlu0 %v367, 38
      %v460 = vpop.permute.xlu0 %459
      %vm461 = vcmask 310272
      %v462 = vsel %vm461, %v454, %v456
      %v463 = vsel %vm461, %v456, %v458
      %v464 = vsel %vm461, %v458, %v460
      %469 = vst [vmem:[#allocation2 + $0x80] sm:$0xff] %v462
      %470 = vst [vmem:[#allocation2 + $0x88] sm:$0xff] %v463
      %471 = vst [vmem:[#allocation2 + $0x90] sm:$0xff] %v464
      %472 = vst.msk [vmem:[#allocation2 + $0x98] sm:$0xff] %vm391, %v460
      %473 = vrot.lane.b32.xlu0 %v364, 22
      %v474 = vpop.permute.xlu0 %473
      %475 = vrot.lane.b32.xlu0 %v365, 22
      %v476 = vpop.permute.xlu0 %475
      %477 = vrot.lane.b32.xlu0 %v366, 22
      %v478 = vpop.permute.xlu0 %477
      %479 = vrot.lane.b32.xlu0 %v367, 22
      %v480 = vpop.permute.xlu0 %479
      %vm481 = vcmask 179200
      %v482 = vsel %vm481, %v474, %v476
      %v483 = vsel %vm481, %v476, %v478
      %v484 = vsel %vm481, %v478, %v480
      %489 = vst [vmem:[#allocation2 + $0xa0] sm:$0xff] %v482
      %490 = vst [vmem:[#allocation2 + $0xa8] sm:$0xff] %v483
      %491 = vst [vmem:[#allocation2 + $0xb0] sm:$0xff] %v484
      %492 = vst.msk [vmem:[#allocation2 + $0xb8] sm:$0xff] %vm391, %v480
      %493 = vrot.lane.b32.xlu0 %v364, 21
      %v494 = vpop.permute.xlu0 %493
      %495 = vrot.lane.b32.xlu0 %v365, 21
      %v496 = vpop.permute.xlu0 %495
      %497 = vrot.lane.b32.xlu0 %v366, 21
      %v498 = vpop.permute.xlu0 %497
      %499 = vrot.lane.b32.xlu0 %v367, 21
      %v500 = vpop.permute.xlu0 %499
      %vm501 = vcmask 171008
      %v502 = vsel %vm501, %v494, %v496
      %v503 = vsel %vm501, %v496, %v498
      %v504 = vsel %vm501, %v498, %v500
      %509 = vst [vmem:[#allocation2 + $0xc0] sm:$0xff] %v502
      %510 = vst [vmem:[#allocation2 + $0xc8] sm:$0xff] %v503
      %511 = vst [vmem:[#allocation2 + $0xd0] sm:$0xff] %v504
      %512 = vst.msk [vmem:[#allocation2 + $0xd8] sm:$0xff] %vm391, %v500
      %513 = vrot.lane.b32.xlu0 %v364, 20
      %v514 = vpop.permute.xlu0 %513
      %515 = vrot.lane.b32.xlu0 %v365, 20
      %v516 = vpop.permute.xlu0 %515
      %517 = vrot.lane.b32.xlu0 %v366, 20
      %v518 = vpop.permute.xlu0 %517
      %519 = vrot.lane.b32.xlu0 %v367, 20
      %v520 = vpop.permute.xlu0 %519
      %vm521 = vcmask 162816
      %v522 = vsel %vm521, %v514, %v516
      %v523 = vsel %vm521, %v516, %v518
      %v524 = vsel %vm521, %v518, %v520
      %529 = vst [vmem:[#allocation2 + $0xe0] sm:$0xff] %v522
      %530 = vst [vmem:[#allocation2 + $0xe8] sm:$0xff] %v523
      %531 = vst [vmem:[#allocation2 + $0xf0] sm:$0xff] %v524
      %532 = vst.msk [vmem:[#allocation2 + $0xf8] sm:$0xff] %vm391, %v520
      %533 = vrot.lane.b32.xlu0 %v364, 19
      %v534 = vpop.permute.xlu0 %533
      %535 = vrot.lane.b32.xlu0 %v365, 19
      %v536 = vpop.permute.xlu0 %535
      %537 = vrot.lane.b32.xlu0 %v366, 19
      %v538 = vpop.permute.xlu0 %537
      %539 = vrot.lane.b32.xlu0 %v367, 19
      %v540 = vpop.permute.xlu0 %539
      %vm541 = vcmask 154624
      %v542 = vsel %vm541, %v534, %v536
      %v543 = vsel %vm541, %v536, %v538
      %v544 = vsel %vm541, %v538, %v540
      %549 = vst [vmem:[#allocation2 + $0x100] sm:$0xff] %v542
      %550 = vst [vmem:[#allocation2 + $0x108] sm:$0xff] %v543
      %551 = vst [vmem:[#allocation2 + $0x110] sm:$0xff] %v544
      %552 = vst.msk [vmem:[#allocation2 + $0x118] sm:$0xff] %vm391, %v540
      %553 = vrot.lane.b32.xlu0 %v364, 18
      %v554 = vpop.permute.xlu0 %553
      %555 = vrot.lane.b32.xlu0 %v365, 18
      %v556 = vpop.permute.xlu0 %555
      %557 = vrot.lane.b32.xlu0 %v366, 18
      %v558 = vpop.permute.xlu0 %557
      %559 = vrot.lane.b32.xlu0 %v367, 18
      %v560 = vpop.permute.xlu0 %559
      %vm561 = vcmask 146432
      %v562 = vsel %vm561, %v554, %v556
      %v563 = vsel %vm561, %v556, %v558
      %v564 = vsel %vm561, %v558, %v560
      %569 = vst [vmem:[#allocation2 + $0x120] sm:$0xff] %v562
      %570 = vst [vmem:[#allocation2 + $0x128] sm:$0xff] %v563
      %571 = vst [vmem:[#allocation2 + $0x130] sm:$0xff] %v564
      %572 = vst.msk [vmem:[#allocation2 + $0x138] sm:$0xff] %vm391, %v560
      %v573 = vpack.c.bf16 %v363, %v358
      %575 = vrot.lane.b32.xlu0 %v364, 2
      %v576 = vpop.permute.xlu0 %575
      %577 = vrot.lane.b32.xlu0 %v365, 2
      %v578 = vpop.permute.xlu0 %577
      %579 = vrot.lane.b32.xlu0 %v366, 2
      %v580 = vpop.permute.xlu0 %579
      %581 = vrot.lane.b32.xlu0 %v367, 2
      %v582 = vpop.permute.xlu0 %581
      %583 = vrot.lane.b32.xlu0 %v573, 2
      %v584 = vpop.permute.xlu0 %583
      %vm585 = vcmask 15360
      %v586 = vsel %vm585, %v576, %v578
      %v587 = vsel %vm585, %v578, %v580
      %v588 = vsel %vm585, %v580, %v582
      %v589 = vsel %vm585, %v582, %v584
      %594 = vst [vmem:[#allocation2 + $0x140] sm:$0xff] %v586
      %595 = vst [vmem:[#allocation2 + $0x148] sm:$0xff] %v587
      %596 = vst [vmem:[#allocation2 + $0x150] sm:$0xff] %v588
      %597 = vst.msk [vmem:[#allocation2 + $0x158] sm:$0xff] %vm391, %v589
      %598 = vrot.lane.b32.xlu0 %v364, 1
      %v599 = vpop.permute.xlu0 %598
      %600 = vrot.lane.b32.xlu0 %v365, 1
      %v601 = vpop.permute.xlu0 %600
      %602 = vrot.lane.b32.xlu0 %v366, 1
      %v603 = vpop.permute.xlu0 %602
      %604 = vrot.lane.b32.xlu0 %v367, 1
      %v605 = vpop.permute.xlu0 %604
      %606 = vrot.lane.b32.xlu0 %v573, 1
      %v607 = vpop.permute.xlu0 %606
      %vm608 = vcmask 7168
      %v609 = vsel %vm608, %v599, %v601
      %v610 = vsel %vm608, %v601, %v603
      %v611 = vsel %vm608, %v603, %v605
      %v612 = vsel %vm608, %v605, %v607
      %617 = vst [vmem:[#allocation2 + $0x160] sm:$0xff] %v609
      %618 = vst [vmem:[#allocation2 + $0x168] sm:$0xff] %v610
      %619 = vst [vmem:[#allocation2 + $0x170] sm:$0xff] %v611
      %620 = vst.msk [vmem:[#allocation2 + $0x178] sm:$0xff] %vm391, %v612
      %621 = vst [vmem:[#allocation2 + $0x180] sm:$0xff] %v365
      %622 = vst [vmem:[#allocation2 + $0x188] sm:$0xff] %v366
      %623 = vst [vmem:[#allocation2 + $0x190] sm:$0xff] %v367
      %624 = vst.msk [vmem:[#allocation2 + $0x198] sm:$0xff] %vm391, %v573
      %625 = vrot.lane.b32.xlu0 %v365, 127
      %v626 = vpop.permute.xlu0 %625
      %627 = vrot.lane.b32.xlu0 %v366, 127
      %v628 = vpop.permute.xlu0 %627
      %629 = vrot.lane.b32.xlu0 %v367, 127
      %v630 = vpop.permute.xlu0 %629
      %631 = vrot.lane.b32.xlu0 %v573, 127
      %v632 = vpop.permute.xlu0 %631
      %vm633 = vcmask 1039360
      %v634 = vsel %vm633, %v626, %v628
      %v635 = vsel %vm633, %v628, %v630
      %v636 = vsel %vm633, %v630, %v632
      %641 = vst [vmem:[#allocation2 + $0x1a0] sm:$0xff] %v634
      %642 = vst [vmem:[#allocation2 + $0x1a8] sm:$0xff] %v635
      %643 = vst [vmem:[#allocation2 + $0x1b0] sm:$0xff] %v636
      %644 = vst.msk [vmem:[#allocation2 + $0x1b8] sm:$0xff] %vm391, %v632
      %645 = vrot.lane.b32.xlu0 %v365, 126
      %v646 = vpop.permute.xlu0 %645
      %647 = vrot.lane.b32.xlu0 %v366, 126
      %v648 = vpop.permute.xlu0 %647
      %649 = vrot.lane.b32.xlu0 %v367, 126
      %v650 = vpop.permute.xlu0 %649
      %651 = vrot.lane.b32.xlu0 %v573, 126
      %v652 = vpop.permute.xlu0 %651
      %vm653 = vcmask 1031168
      %v654 = vsel %vm653, %v646, %v648
      %v655 = vsel %vm653, %v648, %v650
      %v656 = vsel %vm653, %v650, %v652
      %661 = vst [vmem:[#allocation2 + $0x1c0] sm:$0xff] %v654
      %662 = vst [vmem:[#allocation2 + $0x1c8] sm:$0xff] %v655
      %663 = vst [vmem:[#allocation2 + $0x1d0] sm:$0xff] %v656
      %664 = vst.msk [vmem:[#allocation2 + $0x1d8] sm:$0xff] %vm391, %v652
      %665 = vrot.lane.b32.xlu0 %v365, 110
      %v666 = vpop.permute.xlu0 %665
      %667 = vrot.lane.b32.xlu0 %v366, 110
      %v668 = vpop.permute.xlu0 %667
      %669 = vrot.lane.b32.xlu0 %v367, 110
      %v670 = vpop.permute.xlu0 %669
      %671 = vrot.lane.b32.xlu0 %v573, 110
      %v672 = vpop.permute.xlu0 %671
      %vm673 = vcmask 900096
      %v674 = vsel %vm673, %v666, %v668
      %v675 = vsel %vm673, %v668, %v670
      %v676 = vsel %vm673, %v670, %v672
      %681 = vst [vmem:[#allocation2 + $0x1e0] sm:$0xff] %v674
      %682 = vst [vmem:[#allocation2 + $0x1e8] sm:$0xff] %v675
      %683 = vst [vmem:[#allocation2 + $0x1f0] sm:$0xff] %v676
      %684 = vst.msk [vmem:[#allocation2 + $0x1f8] sm:$0xff] %vm391, %v672
      %685 = vrot.lane.b32.xlu0 %v365, 109
      %v686 = vpop.permute.xlu0 %685
      %687 = vrot.lane.b32.xlu0 %v366, 109
      %v688 = vpop.permute.xlu0 %687
      %689 = vrot.lane.b32.xlu0 %v367, 109
      %v690 = vpop.permute.xlu0 %689
      %691 = vrot.lane.b32.xlu0 %v573, 109
      %v692 = vpop.permute.xlu0 %691
      %vm693 = vcmask 891904
      %v694 = vsel %vm693, %v686, %v688
      %v695 = vsel %vm693, %v688, %v690
      %v696 = vsel %vm693, %v690, %v692
      %701 = vst [vmem:[#allocation2 + $0x200] sm:$0xff] %v694
      %702 = vst [vmem:[#allocation2 + $0x208] sm:$0xff] %v695
      %703 = vst [vmem:[#allocation2 + $0x210] sm:$0xff] %v696
      %704 = vst.msk [vmem:[#allocation2 + $0x218] sm:$0xff] %vm391, %v692
      %705 = vrot.lane.b32.xlu0 %v365, 108
      %v706 = vpop.permute.xlu0 %705
      %707 = vrot.lane.b32.xlu0 %v366, 108
      %v708 = vpop.permute.xlu0 %707
      %709 = vrot.lane.b32.xlu0 %v367, 108
      %v710 = vpop.permute.xlu0 %709
      %711 = vrot.lane.b32.xlu0 %v573, 108
      %v712 = vpop.permute.xlu0 %711
      %vm713 = vcmask 883712
      %v714 = vsel %vm713, %v706, %v708
      %v715 = vsel %vm713, %v708, %v710
      %v716 = vsel %vm713, %v710, %v712
      %721 = vst [vmem:[#allocation2 + $0x220] sm:$0xff] %v714
      %722 = vst [vmem:[#allocation2 + $0x228] sm:$0xff] %v715
      %723 = vst [vmem:[#allocation2 + $0x230] sm:$0xff] %v716
      %724 = vst.msk [vmem:[#allocation2 + $0x238] sm:$0xff] %vm391, %v712
      %725 = vrot.lane.b32.xlu0 %v365, 107
      %v726 = vpop.permute.xlu0 %725
      %727 = vrot.lane.b32.xlu0 %v366, 107
      %v728 = vpop.permute.xlu0 %727
      %729 = vrot.lane.b32.xlu0 %v367, 107
      %v730 = vpop.permute.xlu0 %729
      %731 = vrot.lane.b32.xlu0 %v573, 107
      %v732 = vpop.permute.xlu0 %731
      %vm733 = vcmask 875520
      %v734 = vsel %vm733, %v726, %v728
      %v735 = vsel %vm733, %v728, %v730
      %v736 = vsel %vm733, %v730, %v732
      %741 = vst [vmem:[#allocation2 + $0x240] sm:$0xff] %v734
      %742 = vst [vmem:[#allocation2 + $0x248] sm:$0xff] %v735
      %743 = vst [vmem:[#allocation2 + $0x250] sm:$0xff] %v736
      %744 = vst.msk [vmem:[#allocation2 + $0x258] sm:$0xff] %vm391, %v732
      %745 = vrot.lane.b32.xlu0 %v365, 106
      %v746 = vpop.permute.xlu0 %745
      %747 = vrot.lane.b32.xlu0 %v366, 106
      %v748 = vpop.permute.xlu0 %747
      %749 = vrot.lane.b32.xlu0 %v367, 106
      %v750 = vpop.permute.xlu0 %749
      %751 = vrot.lane.b32.xlu0 %v573, 106
      %v752 = vpop.permute.xlu0 %751
      %vm753 = vcmask 867328
      %v754 = vsel %vm753, %v746, %v748
      %v755 = vsel %vm753, %v748, %v750
      %v756 = vsel %vm753, %v750, %v752
      %761 = vst [vmem:[#allocation2 + $0x260] sm:$0xff] %v754
      %762 = vst [vmem:[#allocation2 + $0x268] sm:$0xff] %v755
      %763 = vst [vmem:[#allocation2 + $0x270] sm:$0xff] %v756
      %764 = vst.msk [vmem:[#allocation2 + $0x278] sm:$0xff] %vm391, %v752
      %765 = vrot.lane.b32.xlu0 %v365, 90
      %v766 = vpop.permute.xlu0 %765
      %767 = vrot.lane.b32.xlu0 %v366, 90
      %v768 = vpop.permute.xlu0 %767
      %769 = vrot.lane.b32.xlu0 %v367, 90
      %v770 = vpop.permute.xlu0 %769
      %771 = vrot.lane.b32.xlu0 %v573, 90
      %v772 = vpop.permute.xlu0 %771
      %vm773 = vcmask 736256
      %v774 = vsel %vm773, %v766, %v768
      %v775 = vsel %vm773, %v768, %v770
      %v776 = vsel %vm773, %v770, %v772
      %781 = vst [vmem:[#allocation2 + $0x280] sm:$0xff] %v774
      %782 = vst [vmem:[#allocation2 + $0x288] sm:$0xff] %v775
      %783 = vst [vmem:[#allocation2 + $0x290] sm:$0xff] %v776
      %784 = vst.msk [vmem:[#allocation2 + $0x298] sm:$0xff] %vm391, %v772
      %785 = vrot.lane.b32.xlu0 %v365, 89
      %v786 = vpop.permute.xlu0 %785
      %787 = vrot.lane.b32.xlu0 %v366, 89
      %v788 = vpop.permute.xlu0 %787
      %789 = vrot.lane.b32.xlu0 %v367, 89
      %v790 = vpop.permute.xlu0 %789
      %791 = vrot.lane.b32.xlu0 %v573, 89
      %v792 = vpop.permute.xlu0 %791
      %vm793 = vcmask 728064
      %v794 = vsel %vm793, %v786, %v788
      %v795 = vsel %vm793, %v788, %v790
      %v796 = vsel %vm793, %v790, %v792
      %801 = vst [vmem:[#allocation2 + $0x2a0] sm:$0xff] %v794
      %802 = vst [vmem:[#allocation2 + $0x2a8] sm:$0xff] %v795
      %803 = vst [vmem:[#allocation2 + $0x2b0] sm:$0xff] %v796
      %804 = vst.msk [vmem:[#allocation2 + $0x2b8] sm:$0xff] %vm391, %v792
      %805 = vrot.lane.b32.xlu0 %v365, 88
      %v806 = vpop.permute.xlu0 %805
      %807 = vrot.lane.b32.xlu0 %v366, 88
      %v808 = vpop.permute.xlu0 %807
      %809 = vrot.lane.b32.xlu0 %v367, 88
      %v810 = vpop.permute.xlu0 %809
      %811 = vrot.lane.b32.xlu0 %v573, 88
      %v812 = vpop.permute.xlu0 %811
      %vm813 = vcmask 719872
      %v814 = vsel %vm813, %v806, %v808
      %v815 = vsel %vm813, %v808, %v810
      %v816 = vsel %vm813, %v810, %v812
      %821 = vst [vmem:[#allocation2 + $0x2c0] sm:$0xff] %v814
      %822 = vst [vmem:[#allocation2 + $0x2c8] sm:$0xff] %v815
      %823 = vst [vmem:[#allocation2 + $0x2d0] sm:$0xff] %v816
      %824 = vst.msk [vmem:[#allocation2 + $0x2d8] sm:$0xff] %vm391, %v812
      %825 = vrot.lane.b32.xlu0 %v365, 87
      %v826 = vpop.permute.xlu0 %825
      %827 = vrot.lane.b32.xlu0 %v366, 87
      %v828 = vpop.permute.xlu0 %827
      %829 = vrot.lane.b32.xlu0 %v367, 87
      %v830 = vpop.permute.xlu0 %829
      %831 = vrot.lane.b32.xlu0 %v573, 87
      %v832 = vpop.permute.xlu0 %831
      %vm833 = vcmask 711680
      %v834 = vsel %vm833, %v826, %v828
      %v835 = vsel %vm833, %v828, %v830
      %v836 = vsel %vm833, %v830, %v832
      %841 = vst [vmem:[#allocation2 + $0x2e0] sm:$0xff] %v834
      %842 = vst [vmem:[#allocation2 + $0x2e8] sm:$0xff] %v835
      %843 = vst [vmem:[#allocation2 + $0x2f0] sm:$0xff] %v836
      %844 = vst.msk [vmem:[#allocation2 + $0x2f8] sm:$0xff] %vm391, %v832
      %845 = vrot.lane.b32.xlu0 %v365, 86
      %v846 = vpop.permute.xlu0 %845
      %847 = vrot.lane.b32.xlu0 %v366, 86
      %v848 = vpop.permute.xlu0 %847
      %849 = vrot.lane.b32.xlu0 %v367, 86
      %v850 = vpop.permute.xlu0 %849
      %851 = vrot.lane.b32.xlu0 %v573, 86
      %v852 = vpop.permute.xlu0 %851
      %vm853 = vcmask 703488
      %v854 = vsel %vm853, %v846, %v848
      %v855 = vsel %vm853, %v848, %v850
      %v856 = vsel %vm853, %v850, %v852
      %861 = vst [vmem:[#allocation2 + $0x300] sm:$0xff] %v854
      %862 = vst [vmem:[#allocation2 + $0x308] sm:$0xff] %v855
      %863 = vst [vmem:[#allocation2 + $0x310] sm:$0xff] %v856
      %864 = vst.msk [vmem:[#allocation2 + $0x318] sm:$0xff] %vm391, %v852
      %v865 = vld [vmem:[%s335] sm:$0xff]
      %v866 = vld [vmem:[%s335 + $0x8] sm:$0xff]
      %v867 = vld [vmem:[#allocation2] sm:$0xff]
      %v868 = vld [vmem:[#allocation2 + $0x8] sm:$0xff]
      %v869 = vld [vmem:[#allocation2 + $0x10] sm:$0xff]
      %v870 = vld [vmem:[#allocation2 + $0x18] sm:$0xff]
      %v871 = vld [vmem:[#allocation2 + $0x20] sm:$0xff]
      %v872 = vld [vmem:[#allocation2 + $0x28] sm:$0xff]
      %v873 = vld [vmem:[#allocation2 + $0x30] sm:$0xff]
      %v874 = vld [vmem:[#allocation2 + $0x38] sm:$0xff]
      %v875 = vld [vmem:[#allocation2 + $0x40] sm:$0xff]
      %v876 = vld [vmem:[#allocation2 + $0x48] sm:$0xff]
      %v877 = vld [vmem:[#allocation2 + $0x50] sm:$0xff]
      %v878 = vld [vmem:[#allocation2 + $0x58] sm:$0xff]
      %v879 = vld [vmem:[#allocation2 + $0x60] sm:$0xff]
      %v880 = vld [vmem:[#allocation2 + $0x68] sm:$0xff]
      %v881 = vld [vmem:[#allocation2 + $0x70] sm:$0xff]
      %v882 = vld [vmem:[#allocation2 + $0x78] sm:$0xff]
      %v883 = vld [vmem:[#allocation2 + $0x80] sm:$0xff]
      %v884 = vld [vmem:[#allocation2 + $0x88] sm:$0xff]
      %v885 = vld [vmem:[#allocation2 + $0x90] sm:$0xff]
      %v886 = vld [vmem:[#allocation2 + $0x98] sm:$0xff]
      %v887 = vld [vmem:[#allocation2 + $0xa0] sm:$0xff]
      %v888 = vld [vmem:[#allocation2 + $0xa8] sm:$0xff]
      %v889 = vld [vmem:[#allocation2 + $0xb0] sm:$0xff]
      %v890 = vld [vmem:[#allocation2 + $0xb8] sm:$0xff]
      %v891 = vld [vmem:[#allocation2 + $0xc0] sm:$0xff]
      %v892 = vld [vmem:[#allocation2 + $0xc8] sm:$0xff]
      %v893 = vld [vmem:[#allocation2 + $0xd0] sm:$0xff]
      %v894 = vld [vmem:[#allocation2 + $0xd8] sm:$0xff]
      %v895 = vld [vmem:[#allocation2 + $0xe0] sm:$0xff]
      %v896 = vld [vmem:[#allocation2 + $0xe8] sm:$0xff]
      %v897 = vld [vmem:[#allocation2 + $0xf0] sm:$0xff]
      %v898 = vld [vmem:[#allocation2 + $0xf8] sm:$0xff]
      %v899 = vld [vmem:[#allocation2 + $0x100] sm:$0xff]
      %v900 = vld [vmem:[#allocation2 + $0x108] sm:$0xff]
      %v901 = vld [vmem:[#allocation2 + $0x110] sm:$0xff]
      %v902 = vld [vmem:[#allocation2 + $0x118] sm:$0xff]
      %v903 = vld [vmem:[#allocation2 + $0x120] sm:$0xff]
      %v904 = vld [vmem:[#allocation2 + $0x128] sm:$0xff]
      %v905 = vld [vmem:[#allocation2 + $0x130] sm:$0xff]
      %v906 = vld [vmem:[#allocation2 + $0x138] sm:$0xff]
      %v907 = vld [vmem:[#allocation2 + $0x140] sm:$0xff]
      %v908 = vld [vmem:[#allocation2 + $0x148] sm:$0xff]
      %v909 = vld [vmem:[#allocation2 + $0x150] sm:$0xff]
      %v910 = vld [vmem:[#allocation2 + $0x158] sm:$0xff]
      %v911 = vld [vmem:[#allocation2 + $0x160] sm:$0xff]
      %v912 = vld [vmem:[#allocation2 + $0x168] sm:$0xff]
      %v913 = vld [vmem:[#allocation2 + $0x170] sm:$0xff]
      %v914 = vld [vmem:[#allocation2 + $0x178] sm:$0xff]
      %v915 = vld [vmem:[#allocation2 + $0x180] sm:$0xff]
      %v916 = vld [vmem:[#allocation2 + $0x188] sm:$0xff]
      %v917 = vld [vmem:[#allocation2 + $0x190] sm:$0xff]
      %v918 = vld [vmem:[#allocation2 + $0x198] sm:$0xff]
      %v919 = vld [vmem:[#allocation2 + $0x1a0] sm:$0xff]
      %v920 = vld [vmem:[#allocation2 + $0x1a8] sm:$0xff]
      %v921 = vld [vmem:[#allocation2 + $0x1b0] sm:$0xff]
      %v922 = vld [vmem:[#allocation2 + $0x1b8] sm:$0xff]
      %v923 = vld [vmem:[#allocation2 + $0x1c0] sm:$0xff]
      %v924 = vld [vmem:[#allocation2 + $0x1c8] sm:$0xff]
      %v925 = vld [vmem:[#allocation2 + $0x1d0] sm:$0xff]
      %v926 = vld [vmem:[#allocation2 + $0x1d8] sm:$0xff]
      %v927 = vld [vmem:[#allocation2 + $0x1e0] sm:$0xff]
      %v928 = vld [vmem:[#allocation2 + $0x1e8] sm:$0xff]
      %v929 = vld [vmem:[#allocation2 + $0x1f0] sm:$0xff]
      %v930 = vld [vmem:[#allocation2 + $0x1f8] sm:$0xff]
      %v931 = vld [vmem:[#allocation2 + $0x200] sm:$0xff]
      %v932 = vld [vmem:[#allocation2 + $0x208] sm:$0xff]
      %v933 = vld [vmem:[#allocation2 + $0x210] sm:$0xff]
      %v934 = vld [vmem:[#allocation2 + $0x218] sm:$0xff]
      %v935 = vld [vmem:[#allocation2 + $0x220] sm:$0xff]
      %v936 = vld [vmem:[#allocation2 + $0x228] sm:$0xff]
      %v937 = vld [vmem:[#allocation2 + $0x230] sm:$0xff]
      %v938 = vld [vmem:[#allocation2 + $0x238] sm:$0xff]
      %v939 = vld [vmem:[#allocation2 + $0x240] sm:$0xff]
      %v940 = vld [vmem:[#allocation2 + $0x248] sm:$0xff]
      %v941 = vld [vmem:[#allocation2 + $0x250] sm:$0xff]
      %v942 = vld [vmem:[#allocation2 + $0x258] sm:$0xff]
      %v943 = vld [vmem:[#allocation2 + $0x260] sm:$0xff]
      %v944 = vld [vmem:[#allocation2 + $0x268] sm:$0xff]
      %v945 = vld [vmem:[#allocation2 + $0x270] sm:$0xff]
      %v946 = vld [vmem:[#allocation2 + $0x278] sm:$0xff]
      %v947 = vld [vmem:[#allocation2 + $0x280] sm:$0xff]
      %v948 = vld [vmem:[#allocation2 + $0x288] sm:$0xff]
      %v949 = vld [vmem:[#allocation2 + $0x290] sm:$0xff]
      %v950 = vld [vmem:[#allocation2 + $0x298] sm:$0xff]
      %v951 = vld [vmem:[#allocation2 + $0x2a0] sm:$0xff]
      %v952 = vld [vmem:[#allocation2 + $0x2a8] sm:$0xff]
      %v953 = vld [vmem:[#allocation2 + $0x2b0] sm:$0xff]
      %v954 = vld [vmem:[#allocation2 + $0x2b8] sm:$0xff]
      %v955 = vld [vmem:[#allocation2 + $0x2c0] sm:$0xff]
      %v956 = vld [vmem:[#allocation2 + $0x2c8] sm:$0xff]
      %v957 = vld [vmem:[#allocation2 + $0x2d0] sm:$0xff]
      %v958 = vld [vmem:[#allocation2 + $0x2d8] sm:$0xff]
      %v959 = vld [vmem:[#allocation2 + $0x2e0] sm:$0xff]
      %v960 = vld [vmem:[#allocation2 + $0x2e8] sm:$0xff]
      %v961 = vld [vmem:[#allocation2 + $0x2f0] sm:$0xff]
      %v962 = vld [vmem:[#allocation2 + $0x2f8] sm:$0xff]
      %v963 = vld [vmem:[#allocation2 + $0x300] sm:$0xff]
      %v964 = vld [vmem:[#allocation2 + $0x308] sm:$0xff]
      %v965 = vld [vmem:[#allocation2 + $0x310] sm:$0xff]
      %v966 = vld [vmem:[#allocation2 + $0x318] sm:$0xff]
      %v969 = vunpack.c.l.b16 %v865
      %v970 = vunpack.c.h.b16 %v865
      %v971 = vunpack.c.l.b16 %v866
      %v972 = vunpack.c.h.b16 %v866
      %v973 = vpack.c.b16 %v969, %v969
      %v974 = vpack.c.b16 %v970, %v970
      %v975 = vpack.c.b16 %v971, %v971
      %v976 = vpack.c.b16 %v972, %v972
      %v981 = vsel %vm391, %v976, 0
      %983 = vmatprep.subr.bf16.mxu0 %v868
      %984 = vmatpush1.bf16.msra.mxu0 %v867
      %985 = vmatprep.subr.bf16.mxu0 %v872
      %986 = vmatpush1.bf16.msra.mxu0 %v871
      %987 = vmatprep.subr.bf16.mxu0 %v876
      %988 = vmatpush1.bf16.msra.mxu0 %v875
      %989 = vmatprep.subr.bf16.mxu0 %v880
      %990 = vmatpush1.bf16.msra.mxu0 %v879
      %991 = vmatprep.subr.bf16.mxu0 %v884
      %992 = vmatpush1.bf16.msra.mxu0 %v883
      %993 = vmatprep.subr.bf16.mxu0 %v888
      %994 = vmatpush1.bf16.msra.mxu0 %v887
      %995 = vmatprep.subr.bf16.mxu0 %v892
      %996 = vmatpush1.bf16.msra.mxu0 %v891
      %997 = vmatprep.subr.bf16.mxu0 %v896
      %998 = vmatpush1.bf16.msra.mxu0 %v895
      %999 = vmatprep.subr.bf16.mxu0 %v900
      %1000 = vmatpush1.bf16.msra.mxu0 %v899
      %1001 = vmatprep.subr.bf16.mxu0 %v904
      %1002 = vmatpush1.bf16.msra.mxu0 %v903
      %1003 = vmatprep.subr.bf16.mxu0 %v908
      %1004 = vmatpush1.bf16.msra.mxu0 %v907
      %1005 = vmatprep.subr.bf16.mxu0 %v912
      %1006 = vmatpush1.bf16.msra.mxu0 %v911
      %1007 = vmatprep.subr.bf16.mxu0 %v916
      %1008 = vmatpush1.bf16.msra.mxu0 %v915
      %1009 = vmatprep.subr.bf16.mxu0 %v920
      %1010 = vmatpush1.bf16.msra.mxu0 %v919
      %1011 = vmatprep.subr.bf16.mxu0 %v924
      %1012 = vmatpush1.bf16.msra.mxu0 %v923
      %1013 = vmatprep.subr.bf16.mxu0 %v928
      %1014 = vmatpush1.bf16.msra.mxu0 %v927
      %1015 = vmatprep.mubr.bf16.mxu0 %v974
      %1016 = vmatmul.mubr.bf16.gmra.mrb[0].mxu0 %v973
      %v1017 = vpop.f32.mrb[0].mxu0
      %v1018 = vadd.f32 0.0, %v1017
      %v1019 = vpop.f32.mrb[0].mxu0
      %v1020 = vadd.f32 0.0, %v1019
      %v1021 = vpop.f32.mrb[0].mxu0
      %v1022 = vpop.f32.mrb[0].mxu0
      %1023 = vdwg.mxu0
      %1024 = vmatprep.subr.bf16.mxu0 %v932
      %1025 = vmatpush1.bf16.msra.mxu0 %v931
      %1026 = vmatprep.subr.bf16.mxu0 %v936
      %1027 = vmatpush1.bf16.msra.mxu0 %v935
      %1028 = vmatprep.subr.bf16.mxu0 %v940
      %1029 = vmatpush1.bf16.msra.mxu0 %v939
      %1030 = vmatprep.subr.bf16.mxu0 %v944
      %1031 = vmatpush1.bf16.msra.mxu0 %v943
      %1032 = vmatprep.subr.bf16.mxu0 %v948
      %1033 = vmatpush1.bf16.msra.mxu0 %v947
      %1034 = vmatprep.subr.bf16.mxu0 %v952
      %1035 = vmatpush1.bf16.msra.mxu0 %v951
      %1036 = vmatprep.subr.bf16.mxu0 %v956
      %1037 = vmatpush1.bf16.msra.mxu0 %v955
      %1038 = vmatprep.subr.bf16.mxu0 %v960
      %1039 = vmatpush1.bf16.msra.mxu0 %v959
      %1040 = vmatprep.subr.bf16.mxu0 %v964
      %1041 = vmatpush1.bf16.msra.mxu0 %v963
      %1042 = vmatprep.subr.bf16.mxu0 0
      %1043 = vmatpush1.bf16.msra.mxu0 0
      %1044 = vmatprep.subr.bf16.mxu0 0
      %1045 = vmatpush1.bf16.msra.mxu0 0
      %1046 = vmatprep.subr.bf16.mxu0 0
      %1047 = vmatpush1.bf16.msra.mxu0 0
      %1048 = vmatprep.subr.bf16.mxu0 0
      %1049 = vmatpush1.bf16.msra.mxu0 0
      %1050 = vmatprep.subr.bf16.mxu0 0
      %1051 = vmatpush1.bf16.msra.mxu0 0
      %1052 = vmatprep.subr.bf16.mxu0 0
      %1053 = vmatpush1.bf16.msra.mxu0 0
      %1054 = vmatprep.subr.bf16.mxu0 0
      %1055 = vmatpush1.bf16.msra.mxu0 0
      %1056 = vmatprep.mubr.bf16.mxu0 %v981
      %1057 = vmatmul.mubr.bf16.gmra.mrb[0].mxu0 %v975
      %v1058 = vpop.f32.mrb[0].mxu0
      %v1059 = vadd.f32 %v1018, %v1058
      %v1060 = vpop.f32.mrb[0].mxu0
      %v1061 = vadd.f32 %v1020, %v1060
      %v1062 = vpop.f32.mrb[0].mxu0
      %v1063 = vpop.f32.mrb[0].mxu0
      %1064 = vdwg.mxu0
      %1065 = vmatprep.subr.bf16.mxu0 %v870
      %1066 = vmatpush1.bf16.msra.mxu0 %v869
      %1067 = vmatprep.subr.bf16.mxu0 %v874
      %1068 = vmatpush1.bf16.msra.mxu0 %v873
      %1069 = vmatprep.subr.bf16.mxu0 %v878
      %1070 = vmatpush1.bf16.msra.mxu0 %v877
      %1071 = vmatprep.subr.bf16.mxu0 %v882
      %1072 = vmatpush1.bf16.msra.mxu0 %v881
      %1073 = vmatprep.subr.bf16.mxu0 %v886
      %1074 = vmatpush1.bf16.msra.mxu0 %v885
      %1075 = vmatprep.subr.bf16.mxu0 %v890
      %1076 = vmatpush1.bf16.msra.mxu0 %v889
      %1077 = vmatprep.subr.bf16.mxu0 %v894
      %1078 = vmatpush1.bf16.msra.mxu0 %v893
      %1079 = vmatprep.subr.bf16.mxu0 %v898
      %1080 = vmatpush1.bf16.msra.mxu0 %v897
      %1081 = vmatprep.subr.bf16.mxu0 %v902
      %1082 = vmatpush1.bf16.msra.mxu0 %v901
      %1083 = vmatprep.subr.bf16.mxu0 %v906
      %1084 = vmatpush1.bf16.msra.mxu0 %v905
      %1085 = vmatprep.subr.bf16.mxu0 %v910
      %1086 = vmatpush1.bf16.msra.mxu0 %v909
      %1087 = vmatprep.subr.bf16.mxu0 %v914
      %1088 = vmatpush1.bf16.msra.mxu0 %v913
      %1089 = vmatprep.subr.bf16.mxu0 %v918
      %1090 = vmatpush1.bf16.msra.mxu0 %v917
      %1091 = vmatprep.subr.bf16.mxu0 %v922
      %1092 = vmatpush1.bf16.msra.mxu0 %v921
      %1093 = vmatprep.subr.bf16.mxu0 %v926
      %1094 = vmatpush1.bf16.msra.mxu0 %v925
      %1095 = vmatprep.subr.bf16.mxu0 %v930
      %1096 = vmatpush1.bf16.msra.mxu0 %v929
      %1097 = vmatprep.mubr.bf16.mxu0 %v974
      %1098 = vmatmul.mubr.bf16.gmra.mrb[0].mxu0 %v973
      %v1099 = vpop.f32.mrb[0].mxu0
      %v1100 = vadd.f32 0.0, %v1099
      %v1101 = vpop.f32.mrb[0].mxu0
      %v1102 = vadd.f32 0.0, %v1101
      %v1103 = vpop.f32.mrb[0].mxu0
      %v1104 = vpop.f32.mrb[0].mxu0
      %1105 = vdwg.mxu0
      %1106 = vmatprep.subr.bf16.mxu0 %v934
      %1107 = vmatpush1.bf16.msra.mxu0 %v933
      %1108 = vmatprep.subr.bf16.mxu0 %v938
      %1109 = vmatpush1.bf16.msra.mxu0 %v937
      %1110 = vmatprep.subr.bf16.mxu0 %v942
      %1111 = vmatpush1.bf16.msra.mxu0 %v941
      %1112 = vmatprep.subr.bf16.mxu0 %v946
      %1113 = vmatpush1.bf16.msra.mxu0 %v945
      %1114 = vmatprep.subr.bf16.mxu0 %v950
      %1115 = vmatpush1.bf16.msra.mxu0 %v949
      %1116 = vmatprep.subr.bf16.mxu0 %v954
      %1117 = vmatpush1.bf16.msra.mxu0 %v953
      %1118 = vmatprep.subr.bf16.mxu0 %v958
      %1119 = vmatpush1.bf16.msra.mxu0 %v957
      %1120 = vmatprep.subr.bf16.mxu0 %v962
      %1121 = vmatpush1.bf16.msra.mxu0 %v961
      %1122 = vmatprep.subr.bf16.mxu0 %v966
      %1123 = vmatpush1.bf16.msra.mxu0 %v965
      %1124 = vmatprep.subr.bf16.mxu0 0
      %1125 = vmatpush1.bf16.msra.mxu0 0
      %1126 = vmatprep.subr.bf16.mxu0 0
      %1127 = vmatpush1.bf16.msra.mxu0 0
      %1128 = vmatprep.subr.bf16.mxu0 0
      %1129 = vmatpush1.bf16.msra.mxu0 0
      %1130 = vmatprep.subr.bf16.mxu0 0
      %1131 = vmatpush1.bf16.msra.mxu0 0
      %1132 = vmatprep.subr.bf16.mxu0 0
      %1133 = vmatpush1.bf16.msra.mxu0 0
      %1134 = vmatprep.subr.bf16.mxu0 0
      %1135 = vmatpush1.bf16.msra.mxu0 0
      %1136 = vmatprep.subr.bf16.mxu0 0
      %1137 = vmatpush1.bf16.msra.mxu0 0
      %1138 = vmatprep.mubr.bf16.mxu0 %v981
      %1139 = vmatmul.mubr.bf16.gmra.mrb[0].mxu0 %v975
      %v1140 = vpop.f32.mrb[0].mxu0
      %v1141 = vadd.f32 %v1100, %v1140
      %v1142 = vpop.f32.mrb[0].mxu0
      %v1143 = vadd.f32 %v1102, %v1142
      %v1144 = vpop.f32.mrb[0].mxu0
      %v1145 = vpop.f32.mrb[0].mxu0
      %1146 = vdwg.mxu0
      %v1147 = vld [vmem:[%s3] sm:$0xff]
      %v1148 = vld [vmem:[%s4] sm:$0xff]
      %v1150 = vlaneseq
      %v1151 = vshrl.u32 %v1150, 7
      %v1152 = vsub.s32 0, %v1151
      %v1153 = vrot.slane %v347, %v1152
      %v1154 = vlaneseq
      %v1155 = vshrl.u32 %v1154, 7
      %v1156 = vsub.s32 1, %v1155
      %v1157 = vrot.slane %v347, %v1156
      %v1158 = vlaneseq
      %v1159 = vshrl.u32 %v1158, 7
      %v1160 = vsub.s32 2, %v1159
      %v1161 = vrot.slane %v347, %v1160
      %v1162 = vlaneseq
      %v1163 = vshrl.u32 %v1162, 7
      %v1164 = vsub.s32 3, %v1163
      %v1165 = vrot.slane %v347, %v1164
      %v1170 = vmul.f32 %v1059, %v1153
      %v1171 = vmul.f32 %v1061, %v1157
      %v1172 = vmul.f32 %v1141, %v1161
      %v1173 = vmul.f32 %v1143, %v1165
      %v1174 = vadd.f32 %v1170, %v1171
      %v1175 = vadd.f32 %v1174, %v1172
      %v1176 = vsel %vm391, %v1173, 0.0
      %v1177 = vadd.f32 %v1175, %v1176
      %1178 = vadd.xlane.f32.xlu0 %v1177
      %v1179 = vpop.xlane.xlu0 %1178
      %v1180 = vmul.f32 %v1179, 0.00390625
      %v1181 = vsub.f32 %v1059, %v1180
      %v1182 = vsub.f32 %v1061, %v1180
      %v1183 = vsub.f32 %v1141, %v1180
      %v1184 = vsub.f32 %v1143, %v1180
      %v1185 = vmul.f32 %v1181, %v1153
      %v1186 = vmul.f32 %v1182, %v1157
      %v1187 = vmul.f32 %v1183, %v1161
      %v1188 = vmul.f32 %v1184, %v1165
      %v1189 = vmul.f32 %v1185, %v1185
      %v1190 = vmul.f32 %v1186, %v1186
      %v1191 = vmul.f32 %v1187, %v1187
      %v1192 = vmul.f32 %v1188, %v1188
      %v1193 = vadd.f32 %v1189, %v1190
      %v1194 = vadd.f32 %v1193, %v1191
      %v1195 = vsel %vm391, %v1192, 0.0
      %v1196 = vadd.f32 %v1194, %v1195
      %1197 = vadd.xlane.f32.xlu0 %v1196
      %v1198 = vpop.xlane.xlu0 %1197
      %v1199 = vmul.f32 %v1198, 0.00390625
      %v1200 = vadd.f32 %v1199, 1e-05
      %v1201 = vrsqrt.pop %v1200
      %v1202 = vmul.f32 %v1181, %v1201
      %v1203 = vmul.f32 %v1182, %v1201
      %v1204 = vmul.f32 %v1183, %v1201
      %v1205 = vmul.f32 %v1184, %v1201
      %1207 = vset.pattern.permute.xlu0 0
      %1208 = vperm.xlu0 %1207, %v1147
      %v1209 = vpop.permute.xlu0 %1208
      %v1211 = vmul.f32 %v1202, %v1209
      %v1212 = vmul.f32 %v1203, %v1209
      %v1213 = vmul.f32 %v1204, %v1209
      %v1214 = vmul.f32 %v1205, %v1209
      %1216 = vset.pattern.permute.xlu0 0
      %1217 = vperm.xlu0 %1216, %v1148
      %v1218 = vpop.permute.xlu0 %1217
      %v1220 = vadd.f32 %v1211, %v1218
      %v1221 = vadd.f32 %v1212, %v1218
      %v1222 = vadd.f32 %v1213, %v1218
      %v1223 = vadd.f32 %v1214, %v1218
      %vm1224 = vcmp.gt.f32.partialorder %v1220, 20.0
      %vm1225 = vcmp.gt.f32.partialorder %v1221, 20.0
      %vm1226 = vcmp.gt.f32.partialorder %v1222, 20.0
      %vm1227 = vcmp.gt.f32.partialorder %v1223, 20.0
      %v1228 = vmin.f32 %v1220, 20.0
      %v1229 = vmin.f32 %v1221, 20.0
      %v1230 = vmin.f32 %v1222, 20.0
      %v1231 = vmin.f32 %v1223, 20.0
      %v1232 = vmul.f32 %v1228, 1.442695
      %v1233 = vpow.pop %v1232
      %v1234 = vmul.f32 %v1229, 1.442695
      %v1235 = vpow.pop %v1234
      %v1236 = vmul.f32 %v1230, 1.442695
      %v1237 = vpow.pop %v1236
      %v1238 = vmul.f32 %v1231, 1.442695
      %v1239 = vpow.pop %v1238
      %v1240 = vadd.f32 %v1233, 1.0
      %v1241 = vlog2.pop %v1240
      %v1242 = vmul.f32 %v1241, 0.6931472
      %v1243 = vmul.f32 -0.5, %v1233
      %v1244 = vadd.f32 %v1243, 1.0
      %v1245 = vmul.f32 %v1244, %v1233
      %v1246 = vand.u32 2147483647, %v1233
      %vm1247 = vcmp.lt.f32.partialorder %v1246, 0.0004427343
      %v1248 = vsel %vm1247, %v1245, %v1242
      %v1249 = vadd.f32 %v1235, 1.0
      %v1250 = vlog2.pop %v1249
      %v1251 = vmul.f32 %v1250, 0.6931472
      %v1252 = vmul.f32 -0.5, %v1235
      %v1253 = vadd.f32 %v1252, 1.0
      %v1254 = vmul.f32 %v1253, %v1235
      %v1255 = vand.u32 2147483647, %v1235
      %vm1256 = vcmp.lt.f32.partialorder %v1255, 0.0004427343
      %v1257 = vsel %vm1256, %v1254, %v1251
      %v1258 = vadd.f32 %v1237, 1.0
      %v1259 = vlog2.pop %v1258
      %v1260 = vmul.f32 %v1259, 0.6931472
      %v1261 = vmul.f32 -0.5, %v1237
      %v1262 = vadd.f32 %v1261, 1.0
      %v1263 = vmul.f32 %v1262, %v1237
      %v1264 = vand.u32 2147483647, %v1237
      %vm1265 = vcmp.lt.f32.partialorder %v1264, 0.0004427343
      %v1266 = vsel %vm1265, %v1263, %v1260
      %v1267 = vadd.f32 %v1239, 1.0
      %v1268 = vlog2.pop %v1267
      %v1269 = vmul.f32 %v1268, 0.6931472
      %v1270 = vmul.f32 -0.5, %v1239
      %v1271 = vadd.f32 %v1270, 1.0
      %v1272 = vmul.f32 %v1271, %v1239
      %v1273 = vand.u32 2147483647, %v1239
      %vm1274 = vcmp.lt.f32.partialorder %v1273, 0.0004427343
      %v1275 = vsel %vm1274, %v1272, %v1269
      %v1276 = vsel %vm1224, %v1220, %v1248
      %v1277 = vsel %vm1225, %v1221, %v1257
      %v1278 = vsel %vm1226, %v1222, %v1266
      %v1279 = vsel %vm1227, %v1223, %v1275
      %v1280 = vtanh.pop %v1276
      %v1281 = vtanh.pop %v1277
      %v1282 = vtanh.pop %v1278
      %v1283 = vtanh.pop %v1279
      %v1284 = vmul.f32 %v1220, %v1280
      %v1285 = vmul.f32 %v1221, %v1281
      %v1286 = vmul.f32 %v1222, %v1282
      %v1287 = vmul.f32 %v1223, %v1283
      %v1288 = vmul.f32 %v1284, %v1153
      %v1289 = vmul.f32 %v1285, %v1157
      %v1290 = vmul.f32 %v1286, %v1161
      %v1291 = vmul.f32 %v1287, %v1165
      %1292 = vst [vmem:[#allocation4] sm:$0xff] 0.0
      %1293 = vst [vmem:[#allocation4 + $0x8] sm:$0xff] 0.0
      %1294 = vst [vmem:[#allocation4 + $0x10] sm:$0xff] 0.0
      %1295 = vst [vmem:[#allocation4 + $0x18] sm:$0xff] 0.0
      %1296 = vst [vmem:[#allocation4 + $0x20] sm:$0xff] 0.0
      %1297 = vst.msk [vmem:[#allocation4 + $0x28] sm:$0xff] %vm391, 0.0
      %1298 = vst [vmem:[#allocation4 + $0x8] sm:$0xff] %v1288
      %1299 = vst [vmem:[#allocation4 + $0x10] sm:$0xff] %v1289
      %1300 = vst [vmem:[#allocation4 + $0x18] sm:$0xff] %v1290
      %1301 = vst.msk [vmem:[#allocation4 + $0x20] sm:$0xff] %vm391, %v1291
      %v1302 = vld [vmem:[#allocation4] sm:$0xff]
      %v1303 = vld [vmem:[#allocation4 + $0x8] sm:$0xff]
      %v1304 = vld [vmem:[#allocation4 + $0x10] sm:$0xff]
      %v1305 = vld [vmem:[#allocation4 + $0x18] sm:$0xff]
      %v1306 = vld [vmem:[#allocation4 + $0x20] sm:$0xff]
      %1311 = vrot.lane.b32.xlu0 %v1302, 42
      %v1312 = vpop.permute.xlu0 %1311
      %1313 = vrot.lane.b32.xlu0 %v1303, 42
      %v1314 = vpop.permute.xlu0 %1313
      %1315 = vrot.lane.b32.xlu0 %v1304, 42
      %v1316 = vpop.permute.xlu0 %1315
      %1317 = vrot.lane.b32.xlu0 %v1305, 42
      %v1318 = vpop.permute.xlu0 %1317
      %vm1319 = vcmask 343040
      %v1320 = vsel %vm1319, %v1312, %v1314
      %v1321 = vsel %vm1319, %v1314, %v1316
      %v1322 = vsel %vm1319, %v1316, %v1318
      %1327 = vst [vmem:[#allocation3] sm:$0xff] %v1320
      %1328 = vst [vmem:[#allocation3 + $0x8] sm:$0xff] %v1321
      %1329 = vst [vmem:[#allocation3 + $0x10] sm:$0xff] %v1322
      %1330 = vst.msk [vmem:[#allocation3 + $0x18] sm:$0xff] %vm391, %v1318
      %1331 = vrot.lane.b32.xlu0 %v1302, 41
      %v1332 = vpop.permute.xlu0 %1331
      %1333 = vrot.lane.b32.xlu0 %v1303, 41
      %v1334 = vpop.permute.xlu0 %1333
      %1335 = vrot.lane.b32.xlu0 %v1304, 41
      %v1336 = vpop.permute.xlu0 %1335
      %1337 = vrot.lane.b32.xlu0 %v1305, 41
      %v1338 = vpop.permute.xlu0 %1337
      %vm1339 = vcmask 334848
      %v1340 = vsel %vm1339, %v1332, %v1334
      %v1341 = vsel %vm1339, %v1334, %v1336
      %v1342 = vsel %vm1339, %v1336, %v1338
      %1347 = vst [vmem:[#allocation3 + $0x20] sm:$0xff] %v1340
      %1348 = vst [vmem:[#allocation3 + $0x28] sm:$0xff] %v1341
      %1349 = vst [vmem:[#allocation3 + $0x30] sm:$0xff] %v1342
      %1350 = vst.msk [vmem:[#allocation3 + $0x38] sm:$0xff] %vm391, %v1338
      %1351 = vrot.lane.b32.xlu0 %v1302, 40
      %v1352 = vpop.permute.xlu0 %1351
      %1353 = vrot.lane.b32.xlu0 %v1303, 40
      %v1354 = vpop.permute.xlu0 %1353
      %1355 = vrot.lane.b32.xlu0 %v1304, 40
      %v1356 = vpop.permute.xlu0 %1355
      %1357 = vrot.lane.b32.xlu0 %v1305, 40
      %v1358 = vpop.permute.xlu0 %1357
      %vm1359 = vcmask 326656
      %v1360 = vsel %vm1359, %v1352, %v1354
      %v1361 = vsel %vm1359, %v1354, %v1356
      %v1362 = vsel %vm1359, %v1356, %v1358
      %1367 = vst [vmem:[#allocation3 + $0x40] sm:$0xff] %v1360
      %1368 = vst [vmem:[#allocation3 + $0x48] sm:$0xff] %v1361
      %1369 = vst [vmem:[#allocation3 + $0x50] sm:$0xff] %v1362
      %1370 = vst.msk [vmem:[#allocation3 + $0x58] sm:$0xff] %vm391, %v1358
      %1371 = vrot.lane.b32.xlu0 %v1302, 39
      %v1372 = vpop.permute.xlu0 %1371
      %1373 = vrot.lane.b32.xlu0 %v1303, 39
      %v1374 = vpop.permute.xlu0 %1373
      %1375 = vrot.lane.b32.xlu0 %v1304, 39
      %v1376 = vpop.permute.xlu0 %1375
      %1377 = vrot.lane.b32.xlu0 %v1305, 39
      %v1378 = vpop.permute.xlu0 %1377
      %vm1379 = vcmask 318464
      %v1380 = vsel %vm1379, %v1372, %v1374
      %v1381 = vsel %vm1379, %v1374, %v1376
      %v1382 = vsel %vm1379, %v1376, %v1378
      %1387 = vst [vmem:[#allocation3 + $0x60] sm:$0xff] %v1380
      %1388 = vst [vmem:[#allocation3 + $0x68] sm:$0xff] %v1381
      %1389 = vst [vmem:[#allocation3 + $0x70] sm:$0xff] %v1382
      %1390 = vst.msk [vmem:[#allocation3 + $0x78] sm:$0xff] %vm391, %v1378
      %1391 = vrot.lane.b32.xlu0 %v1302, 38
      %v1392 = vpop.permute.xlu0 %1391
      %1393 = vrot.lane.b32.xlu0 %v1303, 38
      %v1394 = vpop.permute.xlu0 %1393
      %1395 = vrot.lane.b32.xlu0 %v1304, 38
      %v1396 = vpop.permute.xlu0 %1395
      %1397 = vrot.lane.b32.xlu0 %v1305, 38
      %v1398 = vpop.permute.xlu0 %1397
      %vm1399 = vcmask 310272
      %v1400 = vsel %vm1399, %v1392, %v1394
      %v1401 = vsel %vm1399, %v1394, %v1396
      %v1402 = vsel %vm1399, %v1396, %v1398
      %1407 = vst [vmem:[#allocation3 + $0x80] sm:$0xff] %v1400
      %1408 = vst [vmem:[#allocation3 + $0x88] sm:$0xff] %v1401
      %1409 = vst [vmem:[#allocation3 + $0x90] sm:$0xff] %v1402
      %1410 = vst.msk [vmem:[#allocation3 + $0x98] sm:$0xff] %vm391, %v1398
      %1411 = vrot.lane.b32.xlu0 %v1302, 22
      %v1412 = vpop.permute.xlu0 %1411
      %1413 = vrot.lane.b32.xlu0 %v1303, 22
      %v1414 = vpop.permute.xlu0 %1413
      %1415 = vrot.lane.b32.xlu0 %v1304, 22
      %v1416 = vpop.permute.xlu0 %1415
      %1417 = vrot.lane.b32.xlu0 %v1305, 22
      %v1418 = vpop.permute.xlu0 %1417
      %vm1419 = vcmask 179200
      %v1420 = vsel %vm1419, %v1412, %v1414
      %v1421 = vsel %vm1419, %v1414, %v1416
      %v1422 = vsel %vm1419, %v1416, %v1418
      %1427 = vst [vmem:[#allocation3 + $0xa0] sm:$0xff] %v1420
      %1428 = vst [vmem:[#allocation3 + $0xa8] sm:$0xff] %v1421
      %1429 = vst [vmem:[#allocation3 + $0xb0] sm:$0xff] %v1422
      %1430 = vst.msk [vmem:[#allocation3 + $0xb8] sm:$0xff] %vm391, %v1418
      %1431 = vrot.lane.b32.xlu0 %v1302, 21
      %v1432 = vpop.permute.xlu0 %1431
      %1433 = vrot.lane.b32.xlu0 %v1303, 21
      %v1434 = vpop.permute.xlu0 %1433
      %1435 = vrot.lane.b32.xlu0 %v1304, 21
      %v1436 = vpop.permute.xlu0 %1435
      %1437 = vrot.lane.b32.xlu0 %v1305, 21
      %v1438 = vpop.permute.xlu0 %1437
      %vm1439 = vcmask 171008
      %v1440 = vsel %vm1439, %v1432, %v1434
      %v1441 = vsel %vm1439, %v1434, %v1436
      %v1442 = vsel %vm1439, %v1436, %v1438
      %1447 = vst [vmem:[#allocation3 + $0xc0] sm:$0xff] %v1440
      %1448 = vst [vmem:[#allocation3 + $0xc8] sm:$0xff] %v1441
      %1449 = vst [vmem:[#allocation3 + $0xd0] sm:$0xff] %v1442
      %1450 = vst.msk [vmem:[#allocation3 + $0xd8] sm:$0xff] %vm391, %v1438
      %1451 = vrot.lane.b32.xlu0 %v1302, 20
      %v1452 = vpop.permute.xlu0 %1451
      %1453 = vrot.lane.b32.xlu0 %v1303, 20
      %v1454 = vpop.permute.xlu0 %1453
      %1455 = vrot.lane.b32.xlu0 %v1304, 20
      %v1456 = vpop.permute.xlu0 %1455
      %1457 = vrot.lane.b32.xlu0 %v1305, 20
      %v1458 = vpop.permute.xlu0 %1457
      %vm1459 = vcmask 162816
      %v1460 = vsel %vm1459, %v1452, %v1454
      %v1461 = vsel %vm1459, %v1454, %v1456
      %v1462 = vsel %vm1459, %v1456, %v1458
      %1467 = vst [vmem:[#allocation3 + $0xe0] sm:$0xff] %v1460
      %1468 = vst [vmem:[#allocation3 + $0xe8] sm:$0xff] %v1461
      %1469 = vst [vmem:[#allocation3 + $0xf0] sm:$0xff] %v1462
      %1470 = vst.msk [vmem:[#allocation3 + $0xf8] sm:$0xff] %vm391, %v1458
      %1471 = vrot.lane.b32.xlu0 %v1302, 19
      %v1472 = vpop.permute.xlu0 %1471
      %1473 = vrot.lane.b32.xlu0 %v1303, 19
      %v1474 = vpop.permute.xlu0 %1473
      %1475 = vrot.lane.b32.xlu0 %v1304, 19
      %v1476 = vpop.permute.xlu0 %1475
      %1477 = vrot.lane.b32.xlu0 %v1305, 19
      %v1478 = vpop.permute.xlu0 %1477
      %vm1479 = vcmask 154624
      %v1480 = vsel %vm1479, %v1472, %v1474
      %v1481 = vsel %vm1479, %v1474, %v1476
      %v1482 = vsel %vm1479, %v1476, %v1478
      %1487 = vst [vmem:[#allocation3 + $0x100] sm:$0xff] %v1480
      %1488 = vst [vmem:[#allocation3 + $0x108] sm:$0xff] %v1481
      %1489 = vst [vmem:[#allocation3 + $0x110] sm:$0xff] %v1482
      %1490 = vst.msk [vmem:[#allocation3 + $0x118] sm:$0xff] %vm391, %v1478
      %1491 = vrot.lane.b32.xlu0 %v1302, 18
      %v1492 = vpop.permute.xlu0 %1491
      %1493 = vrot.lane.b32.xlu0 %v1303, 18
      %v1494 = vpop.permute.xlu0 %1493
      %1495 = vrot.lane.b32.xlu0 %v1304, 18
      %v1496 = vpop.permute.xlu0 %1495
      %1497 = vrot.lane.b32.xlu0 %v1305, 18
      %v1498 = vpop.permute.xlu0 %1497
      %vm1499 = vcmask 146432
      %v1500 = vsel %vm1499, %v1492, %v1494
      %v1501 = vsel %vm1499, %v1494, %v1496
      %v1502 = vsel %vm1499, %v1496, %v1498
      %1507 = vst [vmem:[#allocation3 + $0x120] sm:$0xff] %v1500
      %1508 = vst [vmem:[#allocation3 + $0x128] sm:$0xff] %v1501
      %1509 = vst [vmem:[#allocation3 + $0x130] sm:$0xff] %v1502
      %1510 = vst.msk [vmem:[#allocation3 + $0x138] sm:$0xff] %vm391, %v1498
      %1512 = vrot.lane.b32.xlu0 %v1302, 2
      %v1513 = vpop.permute.xlu0 %1512
      %1514 = vrot.lane.b32.xlu0 %v1303, 2
      %v1515 = vpop.permute.xlu0 %1514
      %1516 = vrot.lane.b32.xlu0 %v1304, 2
      %v1517 = vpop.permute.xlu0 %1516
      %1518 = vrot.lane.b32.xlu0 %v1305, 2
      %v1519 = vpop.permute.xlu0 %1518
      %1520 = vrot.lane.b32.xlu0 %v1306, 2
      %v1521 = vpop.permute.xlu0 %1520
      %vm1522 = vcmask 15360
      %v1523 = vsel %vm1522, %v1513, %v1515
      %v1524 = vsel %vm1522, %v1515, %v1517
      %v1525 = vsel %vm1522, %v1517, %v1519
      %v1526 = vsel %vm1522, %v1519, %v1521
      %1531 = vst [vmem:[#allocation3 + $0x140] sm:$0xff] %v1523
      %1532 = vst [vmem:[#allocation3 + $0x148] sm:$0xff] %v1524
      %1533 = vst [vmem:[#allocation3 + $0x150] sm:$0xff] %v1525
      %1534 = vst.msk [vmem:[#allocation3 + $0x158] sm:$0xff] %vm391, %v1526
      %1535 = vrot.lane.b32.xlu0 %v1302, 1
      %v1536 = vpop.permute.xlu0 %1535
      %1537 = vrot.lane.b32.xlu0 %v1303, 1
      %v1538 = vpop.permute.xlu0 %1537
      %1539 = vrot.lane.b32.xlu0 %v1304, 1
      %v1540 = vpop.permute.xlu0 %1539
      %1541 = vrot.lane.b32.xlu0 %v1305, 1
      %v1542 = vpop.permute.xlu0 %1541
      %1543 = vrot.lane.b32.xlu0 %v1306, 1
      %v1544 = vpop.permute.xlu0 %1543
      %vm1545 = vcmask 7168
      %v1546 = vsel %vm1545, %v1536, %v1538
      %v1547 = vsel %vm1545, %v1538, %v1540
      %v1548 = vsel %vm1545, %v1540, %v1542
      %v1549 = vsel %vm1545, %v1542, %v1544
      %1554 = vst [vmem:[#allocation3 + $0x160] sm:$0xff] %v1546
      %1555 = vst [vmem:[#allocation3 + $0x168] sm:$0xff] %v1547
      %1556 = vst [vmem:[#allocation3 + $0x170] sm:$0xff] %v1548
      %1557 = vst.msk [vmem:[#allocation3 + $0x178] sm:$0xff] %vm391, %v1549
      %1558 = vst [vmem:[#allocation3 + $0x180] sm:$0xff] %v1303
      %1559 = vst [vmem:[#allocation3 + $0x188] sm:$0xff] %v1304
      %1560 = vst [vmem:[#allocation3 + $0x190] sm:$0xff] %v1305
      %1561 = vst.msk [vmem:[#allocation3 + $0x198] sm:$0xff] %vm391, %v1306
      %1562 = vrot.lane.b32.xlu0 %v1303, 127
      %v1563 = vpop.permute.xlu0 %1562
      %1564 = vrot.lane.b32.xlu0 %v1304, 127
      %v1565 = vpop.permute.xlu0 %1564
      %1566 = vrot.lane.b32.xlu0 %v1305, 127
      %v1567 = vpop.permute.xlu0 %1566
      %1568 = vrot.lane.b32.xlu0 %v1306, 127
      %v1569 = vpop.permute.xlu0 %1568
      %vm1570 = vcmask 1039360
      %v1571 = vsel %vm1570, %v1563, %v1565
      %v1572 = vsel %vm1570, %v1565, %v1567
      %v1573 = vsel %vm1570, %v1567, %v1569
      %1578 = vst [vmem:[#allocation3 + $0x1a0] sm:$0xff] %v1571
      %1579 = vst [vmem:[#allocation3 + $0x1a8] sm:$0xff] %v1572
      %1580 = vst [vmem:[#allocation3 + $0x1b0] sm:$0xff] %v1573
      %1581 = vst.msk [vmem:[#allocation3 + $0x1b8] sm:$0xff] %vm391, %v1569
      %1582 = vrot.lane.b32.xlu0 %v1303, 126
      %v1583 = vpop.permute.xlu0 %1582
      %1584 = vrot.lane.b32.xlu0 %v1304, 126
      %v1585 = vpop.permute.xlu0 %1584
      %1586 = vrot.lane.b32.xlu0 %v1305, 126
      %v1587 = vpop.permute.xlu0 %1586
      %1588 = vrot.lane.b32.xlu0 %v1306, 126
      %v1589 = vpop.permute.xlu0 %1588
      %vm1590 = vcmask 1031168
      %v1591 = vsel %vm1590, %v1583, %v1585
      %v1592 = vsel %vm1590, %v1585, %v1587
      %v1593 = vsel %vm1590, %v1587, %v1589
      %1598 = vst [vmem:[#allocation3 + $0x1c0] sm:$0xff] %v1591
      %1599 = vst [vmem:[#allocation3 + $0x1c8] sm:$0xff] %v1592
      %1600 = vst [vmem:[#allocation3 + $0x1d0] sm:$0xff] %v1593
      %1601 = vst.msk [vmem:[#allocation3 + $0x1d8] sm:$0xff] %vm391, %v1589
      %1602 = vrot.lane.b32.xlu0 %v1303, 110
      %v1603 = vpop.permute.xlu0 %1602
      %1604 = vrot.lane.b32.xlu0 %v1304, 110
      %v1605 = vpop.permute.xlu0 %1604
      %1606 = vrot.lane.b32.xlu0 %v1305, 110
      %v1607 = vpop.permute.xlu0 %1606
      %1608 = vrot.lane.b32.xlu0 %v1306, 110
      %v1609 = vpop.permute.xlu0 %1608
      %vm1610 = vcmask 900096
      %v1611 = vsel %vm1610, %v1603, %v1605
      %v1612 = vsel %vm1610, %v1605, %v1607
      %v1613 = vsel %vm1610, %v1607, %v1609
      %1618 = vst [vmem:[#allocation3 + $0x1e0] sm:$0xff] %v1611
      %1619 = vst [vmem:[#allocation3 + $0x1e8] sm:$0xff] %v1612
      %1620 = vst [vmem:[#allocation3 + $0x1f0] sm:$0xff] %v1613
      %1621 = vst.msk [vmem:[#allocation3 + $0x1f8] sm:$0xff] %vm391, %v1609
      %1622 = vrot.lane.b32.xlu0 %v1303, 109
      %v1623 = vpop.permute.xlu0 %1622
      %1624 = vrot.lane.b32.xlu0 %v1304, 109
      %v1625 = vpop.permute.xlu0 %1624
      %1626 = vrot.lane.b32.xlu0 %v1305, 109
      %v1627 = vpop.permute.xlu0 %1626
      %1628 = vrot.lane.b32.xlu0 %v1306, 109
      %v1629 = vpop.permute.xlu0 %1628
      %vm1630 = vcmask 891904
      %v1631 = vsel %vm1630, %v1623, %v1625
      %v1632 = vsel %vm1630, %v1625, %v1627
      %v1633 = vsel %vm1630, %v1627, %v1629
      %1638 = vst [vmem:[#allocation3 + $0x200] sm:$0xff] %v1631
      %1639 = vst [vmem:[#allocation3 + $0x208] sm:$0xff] %v1632
      %1640 = vst [vmem:[#allocation3 + $0x210] sm:$0xff] %v1633
      %1641 = vst.msk [vmem:[#allocation3 + $0x218] sm:$0xff] %vm391, %v1629
      %1642 = vrot.lane.b32.xlu0 %v1303, 108
      %v1643 = vpop.permute.xlu0 %1642
      %1644 = vrot.lane.b32.xlu0 %v1304, 108
      %v1645 = vpop.permute.xlu0 %1644
      %1646 = vrot.lane.b32.xlu0 %v1305, 108
      %v1647 = vpop.permute.xlu0 %1646
      %1648 = vrot.lane.b32.xlu0 %v1306, 108
      %v1649 = vpop.permute.xlu0 %1648
      %vm1650 = vcmask 883712
      %v1651 = vsel %vm1650, %v1643, %v1645
      %v1652 = vsel %vm1650, %v1645, %v1647
      %v1653 = vsel %vm1650, %v1647, %v1649
      %1658 = vst [vmem:[#allocation3 + $0x220] sm:$0xff] %v1651
      %1659 = vst [vmem:[#allocation3 + $0x228] sm:$0xff] %v1652
      %1660 = vst [vmem:[#allocation3 + $0x230] sm:$0xff] %v1653
      %1661 = vst.msk [vmem:[#allocation3 + $0x238] sm:$0xff] %vm391, %v1649
      %1662 = vrot.lane.b32.xlu0 %v1303, 107
      %v1663 = vpop.permute.xlu0 %1662
      %1664 = vrot.lane.b32.xlu0 %v1304, 107
      %v1665 = vpop.permute.xlu0 %1664
      %1666 = vrot.lane.b32.xlu0 %v1305, 107
      %v1667 = vpop.permute.xlu0 %1666
      %1668 = vrot.lane.b32.xlu0 %v1306, 107
      %v1669 = vpop.permute.xlu0 %1668
      %vm1670 = vcmask 875520
      %v1671 = vsel %vm1670, %v1663, %v1665
      %v1672 = vsel %vm1670, %v1665, %v1667
      %v1673 = vsel %vm1670, %v1667, %v1669
      %1678 = vst [vmem:[#allocation3 + $0x240] sm:$0xff] %v1671
      %1679 = vst [vmem:[#allocation3 + $0x248] sm:$0xff] %v1672
      %1680 = vst [vmem:[#allocation3 + $0x250] sm:$0xff] %v1673
      %1681 = vst.msk [vmem:[#allocation3 + $0x258] sm:$0xff] %vm391, %v1669
      %1682 = vrot.lane.b32.xlu0 %v1303, 106
      %v1683 = vpop.permute.xlu0 %1682
      %1684 = vrot.lane.b32.xlu0 %v1304, 106
      %v1685 = vpop.permute.xlu0 %1684
      %1686 = vrot.lane.b32.xlu0 %v1305, 106
      %v1687 = vpop.permute.xlu0 %1686
      %1688 = vrot.lane.b32.xlu0 %v1306, 106
      %v1689 = vpop.permute.xlu0 %1688
      %vm1690 = vcmask 867328
      %v1691 = vsel %vm1690, %v1683, %v1685
      %v1692 = vsel %vm1690, %v1685, %v1687
      %v1693 = vsel %vm1690, %v1687, %v1689
      %1698 = vst [vmem:[#allocation3 + $0x260] sm:$0xff] %v1691
      %1699 = vst [vmem:[#allocation3 + $0x268] sm:$0xff] %v1692
      %1700 = vst [vmem:[#allocation3 + $0x270] sm:$0xff] %v1693
      %1701 = vst.msk [vmem:[#allocation3 + $0x278] sm:$0xff] %vm391, %v1689
      %1702 = vrot.lane.b32.xlu0 %v1303, 90
      %v1703 = vpop.permute.xlu0 %1702
      %1704 = vrot.lane.b32.xlu0 %v1304, 90
      %v1705 = vpop.permute.xlu0 %1704
      %1706 = vrot.lane.b32.xlu0 %v1305, 90
      %v1707 = vpop.permute.xlu0 %1706
      %1708 = vrot.lane.b32.xlu0 %v1306, 90
      %v1709 = vpop.permute.xlu0 %1708
      %vm1710 = vcmask 736256
      %v1711 = vsel %vm1710, %v1703, %v1705
      %v1712 = vsel %vm1710, %v1705, %v1707
      %v1713 = vsel %vm1710, %v1707, %v1709
      %1718 = vst [vmem:[#allocation3 + $0x280] sm:$0xff] %v1711
      %1719 = vst [vmem:[#allocation3 + $0x288] sm:$0xff] %v1712
      %1720 = vst [vmem:[#allocation3 + $0x290] sm:$0xff] %v1713
      %1721 = vst.msk [vmem:[#allocation3 + $0x298] sm:$0xff] %vm391, %v1709
      %1722 = vrot.lane.b32.xlu0 %v1303, 89
      %v1723 = vpop.permute.xlu0 %1722
      %1724 = vrot.lane.b32.xlu0 %v1304, 89
      %v1725 = vpop.permute.xlu0 %1724
      %1726 = vrot.lane.b32.xlu0 %v1305, 89
      %v1727 = vpop.permute.xlu0 %1726
      %1728 = vrot.lane.b32.xlu0 %v1306, 89
      %v1729 = vpop.permute.xlu0 %1728
      %vm1730 = vcmask 728064
      %v1731 = vsel %vm1730, %v1723, %v1725
      %v1732 = vsel %vm1730, %v1725, %v1727
      %v1733 = vsel %vm1730, %v1727, %v1729
      %1738 = vst [vmem:[#allocation3 + $0x2a0] sm:$0xff] %v1731
      %1739 = vst [vmem:[#allocation3 + $0x2a8] sm:$0xff] %v1732
      %1740 = vst [vmem:[#allocation3 + $0x2b0] sm:$0xff] %v1733
      %1741 = vst.msk [vmem:[#allocation3 + $0x2b8] sm:$0xff] %vm391, %v1729
      %1742 = vrot.lane.b32.xlu0 %v1303, 88
      %v1743 = vpop.permute.xlu0 %1742
      %1744 = vrot.lane.b32.xlu0 %v1304, 88
      %v1745 = vpop.permute.xlu0 %1744
      %1746 = vrot.lane.b32.xlu0 %v1305, 88
      %v1747 = vpop.permute.xlu0 %1746
      %1748 = vrot.lane.b32.xlu0 %v1306, 88
      %v1749 = vpop.permute.xlu0 %1748
      %vm1750 = vcmask 719872
      %v1751 = vsel %vm1750, %v1743, %v1745
      %v1752 = vsel %vm1750, %v1745, %v1747
      %v1753 = vsel %vm1750, %v1747, %v1749
      %1758 = vst [vmem:[#allocation3 + $0x2c0] sm:$0xff] %v1751
      %1759 = vst [vmem:[#allocation3 + $0x2c8] sm:$0xff] %v1752
      %1760 = vst [vmem:[#allocation3 + $0x2d0] sm:$0xff] %v1753
      %1761 = vst.msk [vmem:[#allocation3 + $0x2d8] sm:$0xff] %vm391, %v1749
      %1762 = vrot.lane.b32.xlu0 %v1303, 87
      %v1763 = vpop.permute.xlu0 %1762
      %1764 = vrot.lane.b32.xlu0 %v1304, 87
      %v1765 = vpop.permute.xlu0 %1764
      %1766 = vrot.lane.b32.xlu0 %v1305, 87
      %v1767 = vpop.permute.xlu0 %1766
      %1768 = vrot.lane.b32.xlu0 %v1306, 87
      %v1769 = vpop.permute.xlu0 %1768
      %vm1770 = vcmask 711680
      %v1771 = vsel %vm1770, %v1763, %v1765
      %v1772 = vsel %vm1770, %v1765, %v1767
      %v1773 = vsel %vm1770, %v1767, %v1769
      %1778 = vst [vmem:[#allocation3 + $0x2e0] sm:$0xff] %v1771
      %1779 = vst [vmem:[#allocation3 + $0x2e8] sm:$0xff] %v1772
      %1780 = vst [vmem:[#allocation3 + $0x2f0] sm:$0xff] %v1773
      %1781 = vst.msk [vmem:[#allocation3 + $0x2f8] sm:$0xff] %vm391, %v1769
      %1782 = vrot.lane.b32.xlu0 %v1303, 86
      %v1783 = vpop.permute.xlu0 %1782
      %1784 = vrot.lane.b32.xlu0 %v1304, 86
      %v1785 = vpop.permute.xlu0 %1784
      %1786 = vrot.lane.b32.xlu0 %v1305, 86
      %v1787 = vpop.permute.xlu0 %1786
      %1788 = vrot.lane.b32.xlu0 %v1306, 86
      %v1789 = vpop.permute.xlu0 %1788
      %vm1790 = vcmask 703488
      %v1791 = vsel %vm1790, %v1783, %v1785
      %v1792 = vsel %vm1790, %v1785, %v1787
      %v1793 = vsel %vm1790, %v1787, %v1789
      %1798 = vst [vmem:[#allocation3 + $0x300] sm:$0xff] %v1791
      %1799 = vst [vmem:[#allocation3 + $0x308] sm:$0xff] %v1792
      %1800 = vst [vmem:[#allocation3 + $0x310] sm:$0xff] %v1793
      %1801 = vst.msk [vmem:[#allocation3 + $0x318] sm:$0xff] %vm391, %v1789
      %v1802 = vld [vmem:[%s340] sm:$0xff]
      %v1803 = vld [vmem:[%s340 + $0x8] sm:$0xff]
      %v1804 = vld [vmem:[#allocation3] sm:$0xff]
      %v1805 = vld [vmem:[#allocation3 + $0x8] sm:$0xff]
      %v1806 = vld [vmem:[#allocation3 + $0x10] sm:$0xff]
      %v1807 = vld [vmem:[#allocation3 + $0x18] sm:$0xff]
      %v1808 = vld [vmem:[#allocation3 + $0x20] sm:$0xff]
      %v1809 = vld [vmem:[#allocation3 + $0x28] sm:$0xff]
      %v1810 = vld [vmem:[#allocation3 + $0x30] sm:$0xff]
      %v1811 = vld [vmem:[#allocation3 + $0x38] sm:$0xff]
      %v1812 = vld [vmem:[#allocation3 + $0x40] sm:$0xff]
      %v1813 = vld [vmem:[#allocation3 + $0x48] sm:$0xff]
      %v1814 = vld [vmem:[#allocation3 + $0x50] sm:$0xff]
      %v1815 = vld [vmem:[#allocation3 + $0x58] sm:$0xff]
      %v1816 = vld [vmem:[#allocation3 + $0x60] sm:$0xff]
      %v1817 = vld [vmem:[#allocation3 + $0x68] sm:$0xff]
      %v1818 = vld [vmem:[#allocation3 + $0x70] sm:$0xff]
      %v1819 = vld [vmem:[#allocation3 + $0x78] sm:$0xff]
      %v1820 = vld [vmem:[#allocation3 + $0x80] sm:$0xff]
      %v1821 = vld [vmem:[#allocation3 + $0x88] sm:$0xff]
      %v1822 = vld [vmem:[#allocation3 + $0x90] sm:$0xff]
      %v1823 = vld [vmem:[#allocation3 + $0x98] sm:$0xff]
      %v1824 = vld [vmem:[#allocation3 + $0xa0] sm:$0xff]
      %v1825 = vld [vmem:[#allocation3 + $0xa8] sm:$0xff]
      %v1826 = vld [vmem:[#allocation3 + $0xb0] sm:$0xff]
      %v1827 = vld [vmem:[#allocation3 + $0xb8] sm:$0xff]
      %v1828 = vld [vmem:[#allocation3 + $0xc0] sm:$0xff]
      %v1829 = vld [vmem:[#allocation3 + $0xc8] sm:$0xff]
      %v1830 = vld [vmem:[#allocation3 + $0xd0] sm:$0xff]
      %v1831 = vld [vmem:[#allocation3 + $0xd8] sm:$0xff]
      %v1832 = vld [vmem:[#allocation3 + $0xe0] sm:$0xff]
      %v1833 = vld [vmem:[#allocation3 + $0xe8] sm:$0xff]
      %v1834 = vld [vmem:[#allocation3 + $0xf0] sm:$0xff]
      %v1835 = vld [vmem:[#allocation3 + $0xf8] sm:$0xff]
      %v1836 = vld [vmem:[#allocation3 + $0x100] sm:$0xff]
      %v1837 = vld [vmem:[#allocation3 + $0x108] sm:$0xff]
      %v1838 = vld [vmem:[#allocation3 + $0x110] sm:$0xff]
      %v1839 = vld [vmem:[#allocation3 + $0x118] sm:$0xff]
      %v1840 = vld [vmem:[#allocation3 + $0x120] sm:$0xff]
      %v1841 = vld [vmem:[#allocation3 + $0x128] sm:$0xff]
      %v1842 = vld [vmem:[#allocation3 + $0x130] sm:$0xff]
      %v1843 = vld [vmem:[#allocation3 + $0x138] sm:$0xff]
      %v1844 = vld [vmem:[#allocation3 + $0x140] sm:$0xff]
      %v1845 = vld [vmem:[#allocation3 + $0x148] sm:$0xff]
      %v1846 = vld [vmem:[#allocation3 + $0x150] sm:$0xff]
      %v1847 = vld [vmem:[#allocation3 + $0x158] sm:$0xff]
      %v1848 = vld [vmem:[#allocation3 + $0x160] sm:$0xff]
      %v1849 = vld [vmem:[#allocation3 + $0x168] sm:$0xff]
      %v1850 = vld [vmem:[#allocation3 + $0x170] sm:$0xff]
      %v1851 = vld [vmem:[#allocation3 + $0x178] sm:$0xff]
      %v1852 = vld [vmem:[#allocation3 + $0x180] sm:$0xff]
      %v1853 = vld [vmem:[#allocation3 + $0x188] sm:$0xff]
      %v1854 = vld [vmem:[#allocation3 + $0x190] sm:$0xff]
      %v1855 = vld [vmem:[#allocation3 + $0x198] sm:$0xff]
      %v1856 = vld [vmem:[#allocation3 + $0x1a0] sm:$0xff]
      %v1857 = vld [vmem:[#allocation3 + $0x1a8] sm:$0xff]
      %v1858 = vld [vmem:[#allocation3 + $0x1b0] sm:$0xff]
      %v1859 = vld [vmem:[#allocation3 + $0x1b8] sm:$0xff]
      %v1860 = vld [vmem:[#allocation3 + $0x1c0] sm:$0xff]
      %v1861 = vld [vmem:[#allocation3 + $0x1c8] sm:$0xff]
      %v1862 = vld [vmem:[#allocation3 + $0x1d0] sm:$0xff]
      %v1863 = vld [vmem:[#allocation3 + $0x1d8] sm:$0xff]
      %v1864 = vld [vmem:[#allocation3 + $0x1e0] sm:$0xff]
      %v1865 = vld [vmem:[#allocation3 + $0x1e8] sm:$0xff]
      %v1866 = vld [vmem:[#allocation3 + $0x1f0] sm:$0xff]
      %v1867 = vld [vmem:[#allocation3 + $0x1f8] sm:$0xff]
      %v1868 = vld [vmem:[#allocation3 + $0x200] sm:$0xff]
      %v1869 = vld [vmem:[#allocation3 + $0x208] sm:$0xff]
      %v1870 = vld [vmem:[#allocation3 + $0x210] sm:$0xff]
      %v1871 = vld [vmem:[#allocation3 + $0x218] sm:$0xff]
      %v1872 = vld [vmem:[#allocation3 + $0x220] sm:$0xff]
      %v1873 = vld [vmem:[#allocation3 + $0x228] sm:$0xff]
      %v1874 = vld [vmem:[#allocation3 + $0x230] sm:$0xff]
      %v1875 = vld [vmem:[#allocation3 + $0x238] sm:$0xff]
      %v1876 = vld [vmem:[#allocation3 + $0x240] sm:$0xff]
      %v1877 = vld [vmem:[#allocation3 + $0x248] sm:$0xff]
      %v1878 = vld [vmem:[#allocation3 + $0x250] sm:$0xff]
      %v1879 = vld [vmem:[#allocation3 + $0x258] sm:$0xff]
      %v1880 = vld [vmem:[#allocation3 + $0x260] sm:$0xff]
      %v1881 = vld [vmem:[#allocation3 + $0x268] sm:$0xff]
      %v1882 = vld [vmem:[#allocation3 + $0x270] sm:$0xff]
      %v1883 = vld [vmem:[#allocation3 + $0x278] sm:$0xff]
      %v1884 = vld [vmem:[#allocation3 + $0x280] sm:$0xff]
      %v1885 = vld [vmem:[#allocation3 + $0x288] sm:$0xff]
      %v1886 = vld [vmem:[#allocation3 + $0x290] sm:$0xff]
      %v1887 = vld [vmem:[#allocation3 + $0x298] sm:$0xff]
      %v1888 = vld [vmem:[#allocation3 + $0x2a0] sm:$0xff]
      %v1889 = vld [vmem:[#allocation3 + $0x2a8] sm:$0xff]
      %v1890 = vld [vmem:[#allocation3 + $0x2b0] sm:$0xff]
      %v1891 = vld [vmem:[#allocation3 + $0x2b8] sm:$0xff]
      %v1892 = vld [vmem:[#allocation3 + $0x2c0] sm:$0xff]
      %v1893 = vld [vmem:[#allocation3 + $0x2c8] sm:$0xff]
      %v1894 = vld [vmem:[#allocation3 + $0x2d0] sm:$0xff]
      %v1895 = vld [vmem:[#allocation3 + $0x2d8] sm:$0xff]
      %v1896 = vld [vmem:[#allocation3 + $0x2e0] sm:$0xff]
      %v1897 = vld [vmem:[#allocation3 + $0x2e8] sm:$0xff]
      %v1898 = vld [vmem:[#allocation3 + $0x2f0] sm:$0xff]
      %v1899 = vld [vmem:[#allocation3 + $0x2f8] sm:$0xff]
      %v1900 = vld [vmem:[#allocation3 + $0x300] sm:$0xff]
      %v1901 = vld [vmem:[#allocation3 + $0x308] sm:$0xff]
      %v1902 = vld [vmem:[#allocation3 + $0x310] sm:$0xff]
      %v1903 = vld [vmem:[#allocation3 + $0x318] sm:$0xff]
      %vm1904 = vcmask 588800
      %v1906 = vsel %vm1904, %v1803, 0
      %1908 = vmatprep.subr.mxu0 %v1805
      %1909 = vmatpush1.msra.mxu0 %v1804
      %1910 = vmatprep.subr.mxu0 %v1809
      %1911 = vmatpush1.msra.mxu0 %v1808
      %1912 = vmatprep.subr.mxu0 %v1813
      %1913 = vmatpush1.msra.mxu0 %v1812
      %1914 = vmatprep.subr.mxu0 %v1817
      %1915 = vmatpush1.msra.mxu0 %v1816
      %1916 = vmatprep.subr.mxu0 %v1821
      %1917 = vmatpush1.msra.mxu0 %v1820
      %1918 = vmatprep.subr.mxu0 %v1825
      %1919 = vmatpush1.msra.mxu0 %v1824
      %1920 = vmatprep.subr.mxu0 %v1829
      %1921 = vmatpush1.msra.mxu0 %v1828
      %1922 = vmatprep.subr.mxu0 %v1833
      %1923 = vmatpush1.msra.mxu0 %v1832
      %1924 = vmatprep.subr.mxu0 %v1837
      %1925 = vmatpush1.msra.mxu0 %v1836
      %1926 = vmatprep.subr.mxu0 %v1841
      %1927 = vmatpush1.msra.mxu0 %v1840
      %1928 = vmatprep.subr.mxu0 %v1845
      %1929 = vmatpush1.msra.mxu0 %v1844
      %1930 = vmatprep.subr.mxu0 %v1849
      %1931 = vmatpush1.msra.mxu0 %v1848
      %1932 = vmatprep.subr.mxu0 %v1853
      %1933 = vmatpush1.msra.mxu0 %v1852
      %1934 = vmatprep.subr.mxu0 %v1857
      %1935 = vmatpush1.msra.mxu0 %v1856
      %1936 = vmatprep.subr.mxu0 %v1861
      %1937 = vmatpush1.msra.mxu0 %v1860
      %1938 = vmatprep.subr.mxu0 %v1865
      %1939 = vmatpush1.msra.mxu0 %v1864
      %1940 = vmatprep.subr.mxu0 %v1869
      %1941 = vmatpush1.msra.mxu0 %v1868
      %1942 = vmatprep.subr.mxu0 %v1873
      %1943 = vmatpush1.msra.mxu0 %v1872
      %1944 = vmatprep.subr.mxu0 %v1877
      %1945 = vmatpush1.msra.mxu0 %v1876
      %1946 = vmatprep.subr.mxu0 %v1881
      %1947 = vmatpush1.msra.mxu0 %v1880
      %1948 = vmatprep.subr.mxu0 %v1885
      %1949 = vmatpush1.msra.mxu0 %v1884
      %1950 = vmatprep.subr.mxu0 %v1889
      %1951 = vmatpush1.msra.mxu0 %v1888
      %1952 = vmatprep.subr.mxu0 %v1893
      %1953 = vmatpush1.msra.mxu0 %v1892
      %1954 = vmatprep.subr.mxu0 %v1897
      %1955 = vmatpush1.msra.mxu0 %v1896
      %1956 = vmatprep.subr.mxu0 %v1901
      %1957 = vmatpush1.msra.mxu0 %v1900
      %1958 = vmatprep.subr.mxu0 0.0
      %1959 = vmatpush1.msra.mxu0 0.0
      %1960 = vmatprep.subr.mxu0 0.0
      %1961 = vmatpush1.msra.mxu0 0.0
      %1962 = vmatprep.subr.mxu0 0.0
      %1963 = vmatpush1.msra.mxu0 0.0
      %1964 = vmatprep.subr.mxu0 0.0
      %1965 = vmatpush1.msra.mxu0 0.0
      %1966 = vmatprep.subr.mxu0 0.0
      %1967 = vmatpush1.msra.mxu0 0.0
      %1968 = vmatprep.subr.mxu0 0.0
      %1969 = vmatpush1.msra.mxu0 0.0
      %1970 = vmatprep.subr.mxu0 0.0
      %1971 = vmatpush1.msra.mxu0 0.0
      %1972 = vmatprep.mubr.f32.mxu0 %v1906
      %1973 = vmatmul.mubr.f32.gmra.mrb[0].mxu0 %v1802
      %v1974 = vpop.f32.mrb[0].mxu0
      %v1975 = vadd.f32 0.0, %v1974
      %v1976 = vpop.f32.mrb[0].mxu0
      %v1977 = vadd.f32 0.0, %v1976
      %1978 = vdwg.mxu0
      %1979 = vmatprep.subr.mxu0 %v1807
      %1980 = vmatpush1.msra.mxu0 %v1806
      %1981 = vmatprep.subr.mxu0 %v1811
      %1982 = vmatpush1.msra.mxu0 %v1810
      %1983 = vmatprep.subr.mxu0 %v1815
      %1984 = vmatpush1.msra.mxu0 %v1814
      %1985 = vmatprep.subr.mxu0 %v1819
      %1986 = vmatpush1.msra.mxu0 %v1818
      %1987 = vmatprep.subr.mxu0 %v1823
      %1988 = vmatpush1.msra.mxu0 %v1822
      %1989 = vmatprep.subr.mxu0 %v1827
      %1990 = vmatpush1.msra.mxu0 %v1826
      %1991 = vmatprep.subr.mxu0 %v1831
      %1992 = vmatpush1.msra.mxu0 %v1830
      %1993 = vmatprep.subr.mxu0 %v1835
      %1994 = vmatpush1.msra.mxu0 %v1834
      %1995 = vmatprep.subr.mxu0 %v1839
      %1996 = vmatpush1.msra.mxu0 %v1838
      %1997 = vmatprep.subr.mxu0 %v1843
      %1998 = vmatpush1.msra.mxu0 %v1842
      %1999 = vmatprep.subr.mxu0 %v1847
      %2000 = vmatpush1.msra.mxu0 %v1846
      %2001 = vmatprep.subr.mxu0 %v1851
      %2002 = vmatpush1.msra.mxu0 %v1850
      %2003 = vmatprep.subr.mxu0 %v1855
      %2004 = vmatpush1.msra.mxu0 %v1854
      %2005 = vmatprep.subr.mxu0 %v1859
      %2006 = vmatpush1.msra.mxu0 %v1858
      %2007 = vmatprep.subr.mxu0 %v1863
      %2008 = vmatpush1.msra.mxu0 %v1862
      %2009 = vmatprep.subr.mxu0 %v1867
      %2010 = vmatpush1.msra.mxu0 %v1866
      %2011 = vmatprep.subr.mxu0 %v1871
      %2012 = vmatpush1.msra.mxu0 %v1870
      %2013 = vmatprep.subr.mxu0 %v1875
      %2014 = vmatpush1.msra.mxu0 %v1874
      %2015 = vmatprep.subr.mxu0 %v1879
      %2016 = vmatpush1.msra.mxu0 %v1878
      %2017 = vmatprep.subr.mxu0 %v1883
      %2018 = vmatpush1.msra.mxu0 %v1882
      %2019 = vmatprep.subr.mxu0 %v1887
      %2020 = vmatpush1.msra.mxu0 %v1886
      %2021 = vmatprep.subr.mxu0 %v1891
      %2022 = vmatpush1.msra.mxu0 %v1890
      %2023 = vmatprep.subr.mxu0 %v1895
      %2024 = vmatpush1.msra.mxu0 %v1894
      %2025 = vmatprep.subr.mxu0 %v1899
      %2026 = vmatpush1.msra.mxu0 %v1898
      %2027 = vmatprep.subr.mxu0 %v1903
      %2028 = vmatpush1.msra.mxu0 %v1902
      %2029 = vmatprep.subr.mxu0 0.0
      %2030 = vmatpush1.msra.mxu0 0.0
      %2031 = vmatprep.subr.mxu0 0.0
      %2032 = vmatpush1.msra.mxu0 0.0
      %2033 = vmatprep.subr.mxu0 0.0
      %2034 = vmatpush1.msra.mxu0 0.0
      %2035 = vmatprep.subr.mxu0 0.0
      %2036 = vmatpush1.msra.mxu0 0.0
      %2037 = vmatprep.subr.mxu0 0.0
      %2038 = vmatpush1.msra.mxu0 0.0
      %2039 = vmatprep.subr.mxu0 0.0
      %2040 = vmatpush1.msra.mxu0 0.0
      %2041 = vmatprep.subr.mxu0 0.0
      %2042 = vmatpush1.msra.mxu0 0.0
      %2043 = vmatprep.mubr.f32.mxu0 %v1906
      %2044 = vmatmul.mubr.f32.gmra.mrb[0].mxu0 %v1802
      %v2045 = vpop.f32.mrb[0].mxu0
      %v2046 = vadd.f32 0.0, %v2045
      %v2047 = vpop.f32.mrb[0].mxu0
      %v2048 = vadd.f32 0.0, %v2047
      %2049 = vdwg.mxu0
      %v2050 = vld [vmem:[%s5] sm:$0xff]
      %v2051 = vld [vmem:[%s6] sm:$0xff]
      %v2052 = vmul.f32 %v1975, %v1153
      %v2053 = vmul.f32 %v1977, %v1157
      %v2054 = vmul.f32 %v2046, %v1161
      %v2055 = vmul.f32 %v2048, %v1165
      %v2056 = vadd.f32 %v2052, %v2053
      %v2057 = vadd.f32 %v2056, %v2054
      %v2058 = vsel %vm391, %v2055, 0.0
      %v2059 = vadd.f32 %v2057, %v2058
      %2060 = vadd.xlane.f32.xlu0 %v2059
      %v2061 = vpop.xlane.xlu0 %2060
      %v2062 = vmul.f32 %v2061, 0.00390625
      %v2063 = vsub.f32 %v1975, %v2062
      %v2064 = vsub.f32 %v1977, %v2062
      %v2065 = vsub.f32 %v2046, %v2062
      %v2066 = vsub.f32 %v2048, %v2062
      %v2067 = vmul.f32 %v2063, %v1153
      %v2068 = vmul.f32 %v2064, %v1157
      %v2069 = vmul.f32 %v2065, %v1161
      %v2070 = vmul.f32 %v2066, %v1165
      %v2071 = vmul.f32 %v2067, %v2067
      %v2072 = vmul.f32 %v2068, %v2068
      %v2073 = vmul.f32 %v2069, %v2069
      %v2074 = vmul.f32 %v2070, %v2070
      %v2075 = vadd.f32 %v2071, %v2072
      %v2076 = vadd.f32 %v2075, %v2073
      %v2077 = vsel %vm391, %v2074, 0.0
      %v2078 = vadd.f32 %v2076, %v2077
      %2079 = vadd.xlane.f32.xlu0 %v2078
      %v2080 = vpop.xlane.xlu0 %2079
      %v2081 = vmul.f32 %v2080, 0.00390625
      %v2082 = vadd.f32 %v2081, 1e-05
      %v2083 = vrsqrt.pop %v2082
      %v2084 = vmul.f32 %v2063, %v2083
      %v2085 = vmul.f32 %v2064, %v2083
      %v2086 = vmul.f32 %v2065, %v2083
      %v2087 = vmul.f32 %v2066, %v2083
      %2089 = vset.pattern.permute.xlu0 0
      %2090 = vperm.xlu0 %2089, %v2050
      %v2091 = vpop.permute.xlu0 %2090
      %v2093 = vmul.f32 %v2084, %v2091
      %v2094 = vmul.f32 %v2085, %v2091
      %v2095 = vmul.f32 %v2086, %v2091
      %v2096 = vmul.f32 %v2087, %v2091
      %2098 = vset.pattern.permute.xlu0 0
      %2099 = vperm.xlu0 %2098, %v2051
      %v2100 = vpop.permute.xlu0 %2099
      %v2102 = vadd.f32 %v2093, %v2100
      %v2103 = vadd.f32 %v2094, %v2100
      %v2104 = vadd.f32 %v2095, %v2100
      %v2105 = vadd.f32 %v2096, %v2100
      %vm2106 = vcmp.gt.f32.partialorder %v2102, 20.0
      %vm2107 = vcmp.gt.f32.partialorder %v2103, 20.0
      %vm2108 = vcmp.gt.f32.partialorder %v2104, 20.0
      %vm2109 = vcmp.gt.f32.partialorder %v2105, 20.0
      %v2110 = vmin.f32 %v2102, 20.0
      %v2111 = vmin.f32 %v2103, 20.0
      %v2112 = vmin.f32 %v2104, 20.0
      %v2113 = vmin.f32 %v2105, 20.0
      %v2114 = vmul.f32 %v2110, 1.442695
      %v2115 = vpow.pop %v2114
      %v2116 = vmul.f32 %v2111, 1.442695
      %v2117 = vpow.pop %v2116
      %v2118 = vmul.f32 %v2112, 1.442695
      %v2119 = vpow.pop %v2118
      %v2120 = vmul.f32 %v2113, 1.442695
      %v2121 = vpow.pop %v2120
      %v2122 = vadd.f32 %v2115, 1.0
      %v2123 = vlog2.pop %v2122
      %v2124 = vmul.f32 %v2123, 0.6931472
      %v2125 = vmul.f32 -0.5, %v2115
      %v2126 = vadd.f32 %v2125, 1.0
      %v2127 = vmul.f32 %v2126, %v2115
      %v2128 = vand.u32 2147483647, %v2115
      %vm2129 = vcmp.lt.f32.partialorder %v2128, 0.0004427343
      %v2130 = vsel %vm2129, %v2127, %v2124
      %v2131 = vadd.f32 %v2117, 1.0
      %v2132 = vlog2.pop %v2131
      %v2133 = vmul.f32 %v2132, 0.6931472
      %v2134 = vmul.f32 -0.5, %v2117
      %v2135 = vadd.f32 %v2134, 1.0
      %v2136 = vmul.f32 %v2135, %v2117
      %v2137 = vand.u32 2147483647, %v2117
      %vm2138 = vcmp.lt.f32.partialorder %v2137, 0.0004427343
      %v2139 = vsel %vm2138, %v2136, %v2133
      %v2140 = vadd.f32 %v2119, 1.0
      %v2141 = vlog2.pop %v2140
      %v2142 = vmul.f32 %v2141, 0.6931472
      %v2143 = vmul.f32 -0.5, %v2119
      %v2144 = vadd.f32 %v2143, 1.0
      %v2145 = vmul.f32 %v2144, %v2119
      %v2146 = vand.u32 2147483647, %v2119
      %vm2147 = vcmp.lt.f32.partialorder %v2146, 0.0004427343
      %v2148 = vsel %vm2147, %v2145, %v2142
      %v2149 = vadd.f32 %v2121, 1.0
      %v2150 = vlog2.pop %v2149
      %v2151 = vmul.f32 %v2150, 0.6931472
      %v2152 = vmul.f32 -0.5, %v2121
      %v2153 = vadd.f32 %v2152, 1.0
      %v2154 = vmul.f32 %v2153, %v2121
      %v2155 = vand.u32 2147483647, %v2121
      %vm2156 = vcmp.lt.f32.partialorder %v2155, 0.0004427343
      %v2157 = vsel %vm2156, %v2154, %v2151
      %v2158 = vsel %vm2106, %v2102, %v2130
      %v2159 = vsel %vm2107, %v2103, %v2139
      %v2160 = vsel %vm2108, %v2104, %v2148
      %v2161 = vsel %vm2109, %v2105, %v2157
      %v2162 = vtanh.pop %v2158
      %v2163 = vtanh.pop %v2159
      %v2164 = vtanh.pop %v2160
      %v2165 = vtanh.pop %v2161
      %v2166 = vmul.f32 %v2102, %v2162
      %v2167 = vmul.f32 %v2103, %v2163
      %v2168 = vmul.f32 %v2104, %v2164
      %v2169 = vmul.f32 %v2105, %v2165
      %v2170 = vmul.f32 %v2166, %v1153
      %v2171 = vmul.f32 %v2167, %v1157
      %v2172 = vmul.f32 %v2168, %v1161
      %v2173 = vmul.f32 %v2169, %v1165
      %2174 = vst [vmem:[%s345] sm:$0xff] %v2170
      %2175 = vst [vmem:[%s345 + $0x8] sm:$0xff] %v2171
      %2176 = vst [vmem:[%s345 + $0x10] sm:$0xff] %v2172
      %2177 = vst.msk [vmem:[%s345 + $0x18] sm:$0xff] %vm391, %v2173
      %p2178 = scmp.lt.s32.totalorder %s19, 1
      %s2179 = scalar_select %p2178, %s19, 1
      %s2180 = smul.addr %s2179, 4
      %s2181 = smul.addr %s2180, 8
      %s2182 = scalar_lea.vmem %s8, %s2181
      // Predicated region
      $region53: #{mode_decoder_block_forward.3} parent=51 // pred_check
        %p2183 = pneg %p220
      $region54: #{mode_decoder_block_forward.3} parent=51 // pred_check_branch
        %2185 = sbr.rel (%p2183) target = $region56
      $region55: #{mode_decoder_block_forward.3} parent=51 // pred_region
        _
      $region56: #{mode_decoder_block_forward.3} parent=51 // pred_fallthru
        _
    $region52: #{mode_decoder_block_forward.3} parent=5 // pred_fallthru
      _
    %p2186 = scmp.le.s32.totalorder 2, %s14
    // Predicated region
    $region57: #{mode_decoder_block_forward.3} parent=5 // pred_check
      %p2187 = pneg %p2186
    $region58: #{mode_decoder_block_forward.3} parent=5 // pred_check_branch
      %2189 = sbr.rel (%p2187) target = $region60
    $region59: #{mode_decoder_block_forward.3} parent=5 // pred_region
      %s2190 = ssub.s32 %s14, 2
      // Predicated region
      $region61: #{mode_decoder_block_forward.3} parent=59 // pred_check
        %p2191 = pneg %p226
      $region62: #{mode_decoder_block_forward.3} parent=59 // pred_check_branch
        %2193 = sbr.rel (%p2191) target = $region64
      $region63: #{mode_decoder_block_forward.3} parent=59 // pred_region
        %p2194 = scmp.lt.s32.totalorder %s20, 1
        %s2195 = scalar_select %p2194, %s20, 1
        %s2196 = smul.addr %s2195, 4
        %s2197 = smul.addr %s2196, 8
        %s2198 = scalar_lea.vmem %s8, %s2197
      $region64: #{mode_decoder_block_forward.3} parent=59 // pred_fallthru
        _
    $region60: #{mode_decoder_block_forward.3} parent=5 // pred_fallthru
      _
  $region6: #{mode_decoder_block_forward.3} parent=0 // loop_footer
    %s18 = sadd.s32 1, %s14
  $region7: #{mode_decoder_block_forward.3} parent=0 // loop_footer_branch
    %13 = sbr.rel target = $region3
  $region8: #{mode_decoder_block_forward.3} parent=0 // loop_exit
    _

</llo_original>
